<compile_context>
chip_gen: v7x
topology: tpu7x:2x2x1
jax: 0.10.0
libtpu: 0.0.40
codegen_flags: <defaults>
</compile_context>

<pallas_src>
import jax
import jax.numpy as jnp
from jax.experimental import pallas as pl
from jax.experimental.pallas import tpu as pltpu

EMBEDDING_SIZE = 32
NUM_LAYERS = 2
NEG_INF = float("-inf")


def _mish(x):
    # mish(x) = x * tanh(softplus(x)).  Single-transcendental form:
    #   t = exp(x); tanh(log(1+t)) = ((1+t)^2 - 1) / ((1+t)^2 + 1)
    # Clamped exponent avoids inf intermediates (for x >= 20, ratio == 1 in f32).
    t = jnp.exp(jnp.minimum(x, 20.0))
    s2 = (1.0 + t) * (1.0 + t)
    return x * (s2 - 1.0) * pl.reciprocal(s2 + 1.0, approx=True)


def _make_fused_kernel(relation_meta, emb, num_layers):
    """Fused RGNN forward.

    relation_meta: tuple of (arity, padded_num_atoms, row_base) per relation.
    Ref order:
      node, gmat, seg,
      per relation: [w1 row-block]*arity, b1, w2, b2,
      update: uw1_a, uw1_b, ub1, uw2, ub2,
      readout: rw1, rb1, rw2, rb2,
      out_ref,
      scratch: msg_scr (T, E) f32.
    """
    e = emb

    def kernel(*refs):
        it = iter(refs)
        node_ref = next(it)                      # (N, E) f32
        gmat_ref = next(it)                      # (T, N) f32 one-hot gather/scatter
        seg_ref = next(it)                       # (S, N) f32 per-state sum matrix

        rels = []
        for (arity, apad, base) in relation_meta:
            w1_blocks = [next(it) for _ in range(arity)]   # (E, arity*E) bf16 each
            b1_ref = next(it)                              # (1, arity*E) f32
            w2_ref = next(it)                              # (arity*E, arity*E) bf16
            b2_ref = next(it)                              # (1, arity*E) f32
            rels.append((arity, apad, base, w1_blocks, b1_ref, w2_ref, b2_ref))

        uw1a_ref = next(it); uw1b_ref = next(it); ub1_ref = next(it)
        uw2_ref = next(it); ub2_ref = next(it)
        rw1_ref = next(it); rb1_ref = next(it); rw2_ref = next(it); rb2_ref = next(it)
        out_ref = next(it)
        msg_scr = next(it)                       # (T, E) f32

        gmat = gmat_ref[...]
        # Additive scatter mask, hoisted out of the layer loop (indices are
        # layer-invariant): 0 where atom-row t targets node n, -inf otherwise.
        addmask = jnp.where(gmat > 0.5, jnp.float32(0.0), jnp.float32(NEG_INF))  # (T, N)

        node = node_ref[...]                     # carried as a value across layers

        for _layer in range(num_layers):
            # ---- vectorized gather: one-hot matmul (exact in f32) ------------
            gathered = jnp.dot(gmat, node, preferred_element_type=jnp.float32)   # (T, E)

            for (arity, apad, base, w1_blocks, b1_ref, w2_ref, b2_ref) in rels:
                pieces = [gathered[base + p * apad: base + (p + 1) * apad, :]
                          for p in range(arity)]                                 # (A, E)
                # stage 1: lane-concat realized as sum of row-block products
                h = b1_ref[...]                                                  # (1, a*E)
                for p in range(arity):
                    h = h + jnp.dot(pieces[p].astype(jnp.bfloat16), w1_blocks[p][...],
                                    preferred_element_type=jnp.float32)
                g = _mish(h).astype(jnp.bfloat16)                                # (A, a*E)
                # stage 2: one wide matmul, lane-slice per position for residual
                m = (jnp.dot(g, w2_ref[...], preferred_element_type=jnp.float32)
                     + b2_ref[...])                                              # (A, a*E)
                for p in range(arity):
                    msg_scr[base + p * apad: base + (p + 1) * apad, :] = (
                        pieces[p] + m[:, p * e:(p + 1) * e])

            # ---- vectorized scatter-max (handles duplicate destinations) -----
            msg = msg_scr[...]                                                   # (T, E)
            masked = msg[:, None, :] + addmask[:, :, None]                       # (T, N, E)
            maxm = jnp.max(masked, axis=0)                                       # (N, E)
            # Nodes with no incoming message stay -inf in torch; clamp to 0.
            maxm = jnp.where(maxm == NEG_INF, jnp.float32(0.0), maxm)

            # ---- update MLP on concat(max_msg, node) (pre-split row blocks) --
            h2 = (ub1_ref[...]
                  + jnp.dot(maxm.astype(jnp.bfloat16), uw1a_ref[...],
                            preferred_element_type=jnp.float32)
                  + jnp.dot(node.astype(jnp.bfloat16), uw1b_ref[...],
                            preferred_element_type=jnp.float32))                 # (N, 2E)
            upd = (jnp.dot(_mish(h2).astype(jnp.bfloat16), uw2_ref[...],
                           preferred_element_type=jnp.float32)
                   + ub2_ref[...])                                               # (N, E)
            # residual from RelationalMessagePassingModule: node + layer(node)
            node = node + upd

        # ---- fused value/deadend sum-readout (f32 end to end) ----------------
        agg = jnp.dot(seg_ref[...], node, preferred_element_type=jnp.float32)    # (S, E)
        hr = _mish(jnp.dot(agg, rw1_ref[...], preferred_element_type=jnp.float32)
                   + rb1_ref[...])                                               # (S, 2E)
        out_ref[...] = (jnp.dot(hr, rw2_ref[...], preferred_element_type=jnp.float32)
                        + rb2_ref[...])                                          # (S, 2)

    return kernel


def rgnn_forward(node_emb, atoms, token_sizes, params):
    n, e = node_emb.shape
    s = len(token_sizes)

    # Segment (per-state sum) matrix built on device, no per-call NumPy.
    state_of_node = jnp.repeat(jnp.arange(s, dtype=jnp.int32),
                               jnp.asarray(token_sizes, dtype=jnp.int32),
                               total_repeat_length=n)
    seg = (state_of_node[None, :] == jnp.arange(s, dtype=jnp.int32)[:, None]
           ).astype(jnp.float32)                                                 # (S, N)

    vmem = pl.BlockSpec(memory_space=pltpu.MemorySpace.VMEM)

    relation_meta = []
    row_blocks, col_blocks = [], []
    rel_weight_inputs = []
    base = 0
    for name in sorted(params["relations"].keys()):     # ModuleDict order (sorted)
        if name not in atoms:
            continue
        rp = params["relations"][name]
        arity = rp["arity"]
        flat = jnp.asarray(atoms[name], dtype=jnp.int32)         # (num_atoms*arity,)
        if flat.size == 0:
            continue
        num_atoms = int(flat.shape[0]) // arity
        apad = ((num_atoms + 7) // 8) * 8                        # sublane-aligned
        idx2 = flat.reshape(num_atoms, arity)
        for p in range(arity):
            row_blocks.append(base + p * apad + jnp.arange(num_atoms, dtype=jnp.int32))
            col_blocks.append(idx2[:, p])
        relation_meta.append((arity, apad, base))
        base += arity * apad
        # Pre-split stage-1 weights into per-position row blocks (host-side).
        for p in range(arity):
            rel_weight_inputs.append(rp["w1"][p * e:(p + 1) * e, :].astype(jnp.bfloat16))
        rel_weight_inputs.append(rp["b1"].astype(jnp.float32))
        rel_weight_inputs.append(rp["w2"].astype(jnp.bfloat16))
        rel_weight_inputs.append(rp["b2"].astype(jnp.float32))
    total_rows = base                                            # T (multiple of 8)

    rows = jnp.concatenate(row_blocks)
    cols = jnp.concatenate(col_blocks)
    # (T, N) 0/1 matrix: drives both the gather matmul and the scatter mask.
    gmat = jnp.zeros((total_rows, n), jnp.float32).at[rows, cols].set(1.0)

    inputs = [node_emb.astype(jnp.float32), gmat, seg] + rel_weight_inputs

    # Update MLP: first-stage weights pre-split into the two (E, 2E) row blocks.
    up = params["update"]
    inputs.extend([up["w1"][0:e, :].astype(jnp.bfloat16),
                   up["w1"][e:2 * e, :].astype(jnp.bfloat16),
                   up["b1"].astype(jnp.float32),
                   up["w2"].astype(jnp.bfloat16),
                   up["b2"].astype(jnp.float32)])

    # Fuse value + deadend readout MLPs: stage-1 columns concatenated, stage-2
    # as a block-diagonal (2E, 2) matrix (exact, zero-padded), all f32.
    vw1, vb1, vw2, vb2 = params["value"]
    dw1, db1, dw2, db2 = params["deadend"]
    rw1 = jnp.concatenate([vw1, dw1], axis=1).astype(jnp.float32)    # (E, 2E)
    rb1 = jnp.concatenate([vb1, db1], axis=1).astype(jnp.float32)    # (1, 2E)
    rw2 = jnp.zeros((2 * e, 2), jnp.float32)
    rw2 = rw2.at[0:e, 0].set(vw2[:, 0]).at[e:2 * e, 1].set(dw2[:, 0])
    rb2 = jnp.concatenate([vb2, db2], axis=1).astype(jnp.float32)    # (1, 2)
    inputs.extend([rw1, rb1, rw2, rb2])

    in_specs = [vmem] * len(inputs)

    # Advisory cost estimate so XLA schedules surrounding ops sensibly.
    flops = 0
    trans = 0
    for (arity, apad, _b) in relation_meta:
        io = arity * e
        flops += NUM_LAYERS * (arity * 2 * apad * e * io + 2 * apad * io * io)
        trans += NUM_LAYERS * apad * io
    flops += NUM_LAYERS * 2 * total_rows * n * e                      # gather matmul
    flops += NUM_LAYERS * (2 * (2 * n * e * 2 * e) + 2 * n * 2 * e * e)  # update MLP
    trans += NUM_LAYERS * n * 2 * e
    flops += 2 * s * n * e + 2 * s * e * 2 * e + 2 * s * 2 * e * 2    # readout
    trans += s * 2 * e
    bytes_accessed = sum(int(a.size) * a.dtype.itemsize for a in inputs) + s * 2 * 4

    kernel = _make_fused_kernel(tuple(relation_meta), e, NUM_LAYERS)
    out = pl.pallas_call(
        kernel,
        out_shape=jax.ShapeDtypeStruct((s, 2), jnp.float32),
        in_specs=in_specs,
        out_specs=pl.BlockSpec(memory_space=pltpu.MemorySpace.VMEM),
        scratch_shapes=[pltpu.VMEM((total_rows, e), jnp.float32)],    # message buffer
        compiler_params=pltpu.CompilerParams(
            # Explicit budget valid on all generations (v7x physical VMEM is
            # 64 MiB); everything here is tiny so 32 MiB leaves ample headroom.
            vmem_limit_bytes=32 * 1024 * 1024,
        ),
        cost_estimate=pl.CostEstimate(flops=flops, transcendentals=trans,
                                      bytes_accessed=bytes_accessed),
    )(*inputs)
    return out[:, 0], out[:, 1]


def init_params(key, predicate_signatures, emb):
    state = {"key": key}

    def dense(shape, scale=0.1):
        state["key"], sub = jax.random.split(state["key"])
        return scale * jax.random.normal(sub, shape, dtype=jnp.float32)

    relations = {}
    for name, arity in sorted(predicate_signatures):
        io = arity * emb
        if io <= 0:
            continue
        relations[name] = {
            "arity": arity,
            "w1": dense((io, io)), "b1": dense((1, io)),
            "w2": dense((io, io)), "b2": dense((1, io)),
        }

    update = {"w1": dense((2 * emb, 2 * emb)), "b1": dense((1, 2 * emb)),
              "w2": dense((2 * emb, emb)), "b2": dense((1, emb))}

    def readout_params():
        return (dense((emb, emb)), dense((1, emb)), dense((emb, 1)), dense((1, 1)))

    return {"relations": relations, "update": update,
            "value": readout_params(), "deadend": readout_params()}


if __name__ == "__main__":
    key = jax.random.PRNGKey(0)
    emb = EMBEDDING_SIZE
    predicate_signatures = [("clear", 1), ("on", 2), ("on_goal", 2)]
    params = init_params(key, predicate_signatures, emb)

    # Synthesized StateEncoder outputs: 2 states x 8 objects = 16 nodes,
    # zero-initialized node embeddings, flat atom index tensors.
    token_sizes = [8, 8]
    num_nodes = sum(token_sizes)
    node_embeddings = jnp.zeros((num_nodes, emb), dtype=jnp.float32)
    atoms = {
        "clear": jnp.array([0, 1, 2, 3, 8, 9, 10, 11], dtype=jnp.int32),
        "on": jnp.array([4, 5, 5, 6, 6, 7, 12, 13, 13, 14, 14, 15], dtype=jnp.int32),
        "on_goal": jnp.array([0, 7, 2, 4, 8, 15, 10, 12], dtype=jnp.int32),
    }

    values, deadends = rgnn_forward(node_embeddings, atoms, token_sizes, params)
    jax.block_until_ready((values, deadends))

    assert values.shape == (2,) and deadends.shape == (2,)
    assert bool(jnp.all(jnp.isfinite(values))) and bool(jnp.all(jnp.isfinite(deadends)))
    print("KERNEL_OK")
</pallas_src>

<mosaic_0001>
module attributes {stable_mosaic.version = 11 : i64} {
  func.func @kernel(%arg0: memref<16x32xf32, #tpu.memory_space<vmem>>, %arg1: memref<40x16xf32, #tpu.memory_space<vmem>>, %arg2: memref<2x16xf32, #tpu.memory_space<vmem>>, %arg3: memref<32x32xbf16, #tpu.memory_space<vmem>>, %arg4: memref<1x32xf32, #tpu.memory_space<vmem>>, %arg5: memref<32x32xbf16, #tpu.memory_space<vmem>>, %arg6: memref<1x32xf32, #tpu.memory_space<vmem>>, %arg7: memref<32x64xbf16, #tpu.memory_space<vmem>>, %arg8: memref<32x64xbf16, #tpu.memory_space<vmem>>, %arg9: memref<1x64xf32, #tpu.memory_space<vmem>>, %arg10: memref<64x64xbf16, #tpu.memory_space<vmem>>, %arg11: memref<1x64xf32, #tpu.memory_space<vmem>>, %arg12: memref<32x64xbf16, #tpu.memory_space<vmem>>, %arg13: memref<32x64xbf16, #tpu.memory_space<vmem>>, %arg14: memref<1x64xf32, #tpu.memory_space<vmem>>, %arg15: memref<64x64xbf16, #tpu.memory_space<vmem>>, %arg16: memref<1x64xf32, #tpu.memory_space<vmem>>, %arg17: memref<32x64xbf16, #tpu.memory_space<vmem>>, %arg18: memref<32x64xbf16, #tpu.memory_space<vmem>>, %arg19: memref<1x64xf32, #tpu.memory_space<vmem>>, %arg20: memref<64x32xbf16, #tpu.memory_space<vmem>>, %arg21: memref<1x32xf32, #tpu.memory_space<vmem>>, %arg22: memref<32x64xf32, #tpu.memory_space<vmem>>, %arg23: memref<1x64xf32, #tpu.memory_space<vmem>>, %arg24: memref<64x2xf32, #tpu.memory_space<vmem>>, %arg25: memref<1x2xf32, #tpu.memory_space<vmem>>, %arg26: memref<2x2xf32, #tpu.memory_space<vmem>>, %arg27: memref<40x32xf32, #tpu.memory_space<vmem>>) attributes {dimension_semantics = [], scalar_prefetch = 0 : i64, scratch_operands = 1 : i64, tpu.core_type = #tpu.core_type<tc>} {
    %c0 = arith.constant 0 : index
    %c0_0 = arith.constant 0 : index
    %0 = vector.load %arg1[%c0, %c0_0] : memref<40x16xf32, #tpu.memory_space<vmem>>, vector<40x16xf32>
    %cst = arith.constant 5.000000e-01 : f32
    %1 = vector.broadcast %cst : f32 to vector<40x16xf32>
    %2 = arith.cmpf ogt, %0, %1 : vector<40x16xf32>
    %cst_1 = arith.constant 0.000000e+00 : f32
    %cst_2 = arith.constant 0xFF800000 : f32
    %3 = vector.broadcast %cst_1 : f32 to vector<40x16xf32>
    %4 = vector.broadcast %cst_2 : f32 to vector<40x16xf32>
    %5 = arith.select %2, %3, %4 : vector<40x16xi1>, vector<40x16xf32>
    %c0_3 = arith.constant 0 : index
    %c0_4 = arith.constant 0 : index
    %6 = vector.load %arg0[%c0_3, %c0_4] : memref<16x32xf32, #tpu.memory_space<vmem>>, vector<16x32xf32>
    %cst_5 = arith.constant dense<0.000000e+00> : vector<40x32xf32>
    %7 = tpu.matmul %0, %6, %cst_5 {dimension_numbers = #tpu.dot_dimension_numbers<[1], [0], [0], [1], [0, 0, 1, 1], [], []>} : vector<40x16xf32>, vector<16x32xf32>, vector<40x32xf32> -> vector<40x32xf32>
    %8 = vector.extract_strided_slice %7 {offsets = [0, 0], sizes = [8, 32], strides = [1, 1]} : vector<40x32xf32> to vector<8x32xf32>
    %c0_6 = arith.constant 0 : index
    %c0_7 = arith.constant 0 : index
    %9 = vector.load %arg4[%c0_6, %c0_7] : memref<1x32xf32, #tpu.memory_space<vmem>>, vector<1x32xf32>
    %10 = arith.truncf %8 : vector<8x32xf32> to vector<8x32xbf16>
    %c0_8 = arith.constant 0 : index
    %c0_9 = arith.constant 0 : index
    %11 = vector.load %arg3[%c0_8, %c0_9] : memref<32x32xbf16, #tpu.memory_space<vmem>>, vector<32x32xbf16>
    %cst_10 = arith.constant dense<0.000000e+00> : vector<8x32xf32>
    %12 = tpu.matmul %10, %11, %cst_10 {dimension_numbers = #tpu.dot_dimension_numbers<[1], [0], [0], [1], [0, 0, 1, 1], [], []>} : vector<8x32xbf16>, vector<32x32xbf16>, vector<8x32xf32> -> vector<8x32xf32>
    %13 = vector.broadcast %9 : vector<1x32xf32> to vector<8x32xf32>
    %14 = arith.addf %13, %12 : vector<8x32xf32>
    %cst_11 = arith.constant 2.000000e+01 : f32
    %15 = vector.broadcast %cst_11 : f32 to vector<8x32xf32>
    %16 = arith.minimumf %14, %15 : vector<8x32xf32>
    %17 = math.exp %16 : vector<8x32xf32>
    %cst_12 = arith.constant 1.000000e+00 : f32
    %18 = vector.broadcast %cst_12 : f32 to vector<8x32xf32>
    %19 = arith.addf %18, %17 : vector<8x32xf32>
    %cst_13 = arith.constant 1.000000e+00 : f32
    %20 = vector.broadcast %cst_13 : f32 to vector<8x32xf32>
    %21 = arith.addf %20, %17 : vector<8x32xf32>
    %22 = arith.mulf %19, %21 : vector<8x32xf32>
    %cst_14 = arith.constant 1.000000e+00 : f32
    %23 = vector.broadcast %cst_14 : f32 to vector<8x32xf32>
    %24 = arith.subf %22, %23 : vector<8x32xf32>
    %25 = arith.mulf %14, %24 : vector<8x32xf32>
    %cst_15 = arith.constant 1.000000e+00 : f32
    %26 = vector.broadcast %cst_15 : f32 to vector<8x32xf32>
    %27 = arith.addf %22, %26 : vector<8x32xf32>
    %28 = tpu.reciprocal %27 {approx = true} : vector<8x32xf32> -> vector<8x32xf32>
    %29 = arith.mulf %25, %28 : vector<8x32xf32>
    %30 = arith.truncf %29 : vector<8x32xf32> to vector<8x32xbf16>
    %c0_16 = arith.constant 0 : index
    %c0_17 = arith.constant 0 : index
    %31 = vector.load %arg5[%c0_16, %c0_17] : memref<32x32xbf16, #tpu.memory_space<vmem>>, vector<32x32xbf16>
    %cst_18 = arith.constant dense<0.000000e+00> : vector<8x32xf32>
    %32 = tpu.matmul %30, %31, %cst_18 {dimension_numbers = #tpu.dot_dimension_numbers<[1], [0], [0], [1], [0, 0, 1, 1], [], []>} : vector<8x32xbf16>, vector<32x32xbf16>, vector<8x32xf32> -> vector<8x32xf32>
    %c0_19 = arith.constant 0 : index
    %c0_20 = arith.constant 0 : index
    %33 = vector.load %arg6[%c0_19, %c0_20] : memref<1x32xf32, #tpu.memory_space<vmem>>, vector<1x32xf32>
    %34 = vector.broadcast %33 : vector<1x32xf32> to vector<8x32xf32>
    %35 = arith.addf %32, %34 : vector<8x32xf32>
    %36 = arith.addf %8, %35 : vector<8x32xf32>
    %c0_21 = arith.constant 0 : index
    %c0_22 = arith.constant 0 : index
    %37 = vector.load %arg27[%c0_21, %c0_22] : memref<40x32xf32, #tpu.memory_space<vmem>>, vector<8x32xf32>
    tpu.vector_store %arg27[%c0_21, %c0_22], %36 {strides = array<i32>} : memref<40x32xf32, #tpu.memory_space<vmem>>, vector<8x32xf32>,
    %38 = vector.extract_strided_slice %7 {offsets = [8, 0], sizes = [8, 32], strides = [1, 1]} : vector<40x32xf32> to vector<8x32xf32>
    %39 = vector.extract_strided_slice %7 {offsets = [16, 0], sizes = [8, 32], strides = [1, 1]} : vector<40x32xf32> to vector<8x32xf32>
    %c0_23 = arith.constant 0 : index
    %c0_24 = arith.constant 0 : index
    %40 = vector.load %arg9[%c0_23, %c0_24] : memref<1x64xf32, #tpu.memory_space<vmem>>, vector<1x64xf32>
    %41 = arith.truncf %38 : vector<8x32xf32> to vector<8x32xbf16>
    %c0_25 = arith.constant 0 : index
    %c0_26 = arith.constant 0 : index
    %42 = vector.load %arg7[%c0_25, %c0_26] : memref<32x64xbf16, #tpu.memory_space<vmem>>, vector<32x64xbf16>
    %cst_27 = arith.constant dense<0.000000e+00> : vector<8x64xf32>
    %43 = tpu.matmul %41, %42, %cst_27 {dimension_numbers = #tpu.dot_dimension_numbers<[1], [0], [0], [1], [0, 0, 1, 1], [], []>} : vector<8x32xbf16>, vector<32x64xbf16>, vector<8x64xf32> -> vector<8x64xf32>
    %44 = vector.broadcast %40 : vector<1x64xf32> to vector<8x64xf32>
    %45 = arith.addf %44, %43 : vector<8x64xf32>
    %46 = arith.truncf %39 : vector<8x32xf32> to vector<8x32xbf16>
    %c0_28 = arith.constant 0 : index
    %c0_29 = arith.constant 0 : index
    %47 = vector.load %arg8[%c0_28, %c0_29] : memref<32x64xbf16, #tpu.memory_space<vmem>>, vector<32x64xbf16>
    %cst_30 = arith.constant dense<0.000000e+00> : vector<8x64xf32>
    %48 = tpu.matmul %46, %47, %cst_30 {dimension_numbers = #tpu.dot_dimension_numbers<[1], [0], [0], [1], [0, 0, 1, 1], [], []>} : vector<8x32xbf16>, vector<32x64xbf16>, vector<8x64xf32> -> vector<8x64xf32>
    %49 = arith.addf %45, %48 : vector<8x64xf32>
    %cst_31 = arith.constant 2.000000e+01 : f32
    %50 = vector.broadcast %cst_31 : f32 to vector<8x64xf32>
    %51 = arith.minimumf %49, %50 : vector<8x64xf32>
    %52 = math.exp %51 : vector<8x64xf32>
    %cst_32 = arith.constant 1.000000e+00 : f32
    %53 = vector.broadcast %cst_32 : f32 to vector<8x64xf32>
    %54 = arith.addf %53, %52 : vector<8x64xf32>
    %cst_33 = arith.constant 1.000000e+00 : f32
    %55 = vector.broadcast %cst_33 : f32 to vector<8x64xf32>
    %56 = arith.addf %55, %52 : vector<8x64xf32>
    %57 = arith.mulf %54, %56 : vector<8x64xf32>
    %cst_34 = arith.constant 1.000000e+00 : f32
    %58 = vector.broadcast %cst_34 : f32 to vector<8x64xf32>
    %59 = arith.subf %57, %58 : vector<8x64xf32>
    %60 = arith.mulf %49, %59 : vector<8x64xf32>
    %cst_35 = arith.constant 1.000000e+00 : f32
    %61 = vector.broadcast %cst_35 : f32 to vector<8x64xf32>
    %62 = arith.addf %57, %61 : vector<8x64xf32>
    %63 = tpu.reciprocal %62 {approx = true} : vector<8x64xf32> -> vector<8x64xf32>
    %64 = arith.mulf %60, %63 : vector<8x64xf32>
    %65 = arith.truncf %64 : vector<8x64xf32> to vector<8x64xbf16>
    %c0_36 = arith.constant 0 : index
    %c0_37 = arith.constant 0 : index
    %66 = vector.load %arg10[%c0_36, %c0_37] : memref<64x64xbf16, #tpu.memory_space<vmem>>, vector<64x64xbf16>
    %cst_38 = arith.constant dense<0.000000e+00> : vector<8x64xf32>
    %67 = tpu.matmul %65, %66, %cst_38 {dimension_numbers = #tpu.dot_dimension_numbers<[1], [0], [0], [1], [0, 0, 1, 1], [], []>} : vector<8x64xbf16>, vector<64x64xbf16>, vector<8x64xf32> -> vector<8x64xf32>
    %c0_39 = arith.constant 0 : index
    %c0_40 = arith.constant 0 : index
    %68 = vector.load %arg11[%c0_39, %c0_40] : memref<1x64xf32, #tpu.memory_space<vmem>>, vector<1x64xf32>
    %69 = vector.broadcast %68 : vector<1x64xf32> to vector<8x64xf32>
    %70 = arith.addf %67, %69 : vector<8x64xf32>
    %71 = vector.extract_strided_slice %70 {offsets = [0, 0], sizes = [8, 32], strides = [1, 1]} : vector<8x64xf32> to vector<8x32xf32>
    %72 = arith.addf %38, %71 : vector<8x32xf32>
    %c8 = arith.constant 8 : index
    %c0_41 = arith.constant 0 : index
    %73 = vector.load %arg27[%c8, %c0_41] : memref<40x32xf32, #tpu.memory_space<vmem>>, vector<8x32xf32>
    tpu.vector_store %arg27[%c8, %c0_41], %72 {strides = array<i32>} : memref<40x32xf32, #tpu.memory_space<vmem>>, vector<8x32xf32>,
    %74 = vector.extract_strided_slice %70 {offsets = [0, 32], sizes = [8, 32], strides = [1, 1]} : vector<8x64xf32> to vector<8x32xf32>
    %75 = arith.addf %39, %74 : vector<8x32xf32>
    %c16 = arith.constant 16 : index
    %c0_42 = arith.constant 0 : index
    %76 = vector.load %arg27[%c16, %c0_42] : memref<40x32xf32, #tpu.memory_space<vmem>>, vector<8x32xf32>
    tpu.vector_store %arg27[%c16, %c0_42], %75 {strides = array<i32>} : memref<40x32xf32, #tpu.memory_space<vmem>>, vector<8x32xf32>,
    %77 = vector.extract_strided_slice %7 {offsets = [24, 0], sizes = [8, 32], strides = [1, 1]} : vector<40x32xf32> to vector<8x32xf32>
    %78 = vector.extract_strided_slice %7 {offsets = [32, 0], sizes = [8, 32], strides = [1, 1]} : vector<40x32xf32> to vector<8x32xf32>
    %c0_43 = arith.constant 0 : index
    %c0_44 = arith.constant 0 : index
    %79 = vector.load %arg14[%c0_43, %c0_44] : memref<1x64xf32, #tpu.memory_space<vmem>>, vector<1x64xf32>
    %80 = arith.truncf %77 : vector<8x32xf32> to vector<8x32xbf16>
    %c0_45 = arith.constant 0 : index
    %c0_46 = arith.constant 0 : index
    %81 = vector.load %arg12[%c0_45, %c0_46] : memref<32x64xbf16, #tpu.memory_space<vmem>>, vector<32x64xbf16>
    %cst_47 = arith.constant dense<0.000000e+00> : vector<8x64xf32>
    %82 = tpu.matmul %80, %81, %cst_47 {dimension_numbers = #tpu.dot_dimension_numbers<[1], [0], [0], [1], [0, 0, 1, 1], [], []>} : vector<8x32xbf16>, vector<32x64xbf16>, vector<8x64xf32> -> vector<8x64xf32>
    %83 = vector.broadcast %79 : vector<1x64xf32> to vector<8x64xf32>
    %84 = arith.addf %83, %82 : vector<8x64xf32>
    %85 = arith.truncf %78 : vector<8x32xf32> to vector<8x32xbf16>
    %c0_48 = arith.constant 0 : index
    %c0_49 = arith.constant 0 : index
    %86 = vector.load %arg13[%c0_48, %c0_49] : memref<32x64xbf16, #tpu.memory_space<vmem>>, vector<32x64xbf16>
    %cst_50 = arith.constant dense<0.000000e+00> : vector<8x64xf32>
    %87 = tpu.matmul %85, %86, %cst_50 {dimension_numbers = #tpu.dot_dimension_numbers<[1], [0], [0], [1], [0, 0, 1, 1], [], []>} : vector<8x32xbf16>, vector<32x64xbf16>, vector<8x64xf32> -> vector<8x64xf32>
    %88 = arith.addf %84, %87 : vector<8x64xf32>
    %cst_51 = arith.constant 2.000000e+01 : f32
    %89 = vector.broadcast %cst_51 : f32 to vector<8x64xf32>
    %90 = arith.minimumf %88, %89 : vector<8x64xf32>
    %91 = math.exp %90 : vector<8x64xf32>
    %cst_52 = arith.constant 1.000000e+00 : f32
    %92 = vector.broadcast %cst_52 : f32 to vector<8x64xf32>
    %93 = arith.addf %92, %91 : vector<8x64xf32>
    %cst_53 = arith.constant 1.000000e+00 : f32
    %94 = vector.broadcast %cst_53 : f32 to vector<8x64xf32>
    %95 = arith.addf %94, %91 : vector<8x64xf32>
    %96 = arith.mulf %93, %95 : vector<8x64xf32>
    %cst_54 = arith.constant 1.000000e+00 : f32
    %97 = vector.broadcast %cst_54 : f32 to vector<8x64xf32>
    %98 = arith.subf %96, %97 : vector<8x64xf32>
    %99 = arith.mulf %88, %98 : vector<8x64xf32>
    %cst_55 = arith.constant 1.000000e+00 : f32
    %100 = vector.broadcast %cst_55 : f32 to vector<8x64xf32>
    %101 = arith.addf %96, %100 : vector<8x64xf32>
    %102 = tpu.reciprocal %101 {approx = true} : vector<8x64xf32> -> vector<8x64xf32>
    %103 = arith.mulf %99, %102 : vector<8x64xf32>
    %104 = arith.truncf %103 : vector<8x64xf32> to vector<8x64xbf16>
    %c0_56 = arith.constant 0 : index
    %c0_57 = arith.constant 0 : index
    %105 = vector.load %arg15[%c0_56, %c0_57] : memref<64x64xbf16, #tpu.memory_space<vmem>>, vector<64x64xbf16>
    %cst_58 = arith.constant dense<0.000000e+00> : vector<8x64xf32>
    %106 = tpu.matmul %104, %105, %cst_58 {dimension_numbers = #tpu.dot_dimension_numbers<[1], [0], [0], [1], [0, 0, 1, 1], [], []>} : vector<8x64xbf16>, vector<64x64xbf16>, vector<8x64xf32> -> vector<8x64xf32>
    %c0_59 = arith.constant 0 : index
    %c0_60 = arith.constant 0 : index
    %107 = vector.load %arg16[%c0_59, %c0_60] : memref<1x64xf32, #tpu.memory_space<vmem>>, vector<1x64xf32>
    %108 = vector.broadcast %107 : vector<1x64xf32> to vector<8x64xf32>
    %109 = arith.addf %106, %108 : vector<8x64xf32>
    %110 = vector.extract_strided_slice %109 {offsets = [0, 0], sizes = [8, 32], strides = [1, 1]} : vector<8x64xf32> to vector<8x32xf32>
    %111 = arith.addf %77, %110 : vector<8x32xf32>
    %c24 = arith.constant 24 : index
    %c0_61 = arith.constant 0 : index
    %112 = vector.load %arg27[%c24, %c0_61] : memref<40x32xf32, #tpu.memory_space<vmem>>, vector<8x32xf32>
    tpu.vector_store %arg27[%c24, %c0_61], %111 {strides = array<i32>} : memref<40x32xf32, #tpu.memory_space<vmem>>, vector<8x32xf32>,
    %113 = vector.extract_strided_slice %109 {offsets = [0, 32], sizes = [8, 32], strides = [1, 1]} : vector<8x64xf32> to vector<8x32xf32>
    %114 = arith.addf %78, %113 : vector<8x32xf32>
    %c32 = arith.constant 32 : index
    %c0_62 = arith.constant 0 : index
    %115 = vector.load %arg27[%c32, %c0_62] : memref<40x32xf32, #tpu.memory_space<vmem>>, vector<8x32xf32>
    tpu.vector_store %arg27[%c32, %c0_62], %114 {strides = array<i32>} : memref<40x32xf32, #tpu.memory_space<vmem>>, vector<8x32xf32>,
    %c0_63 = arith.constant 0 : index
    %c0_64 = arith.constant 0 : index
    %116 = vector.load %arg27[%c0_63, %c0_64] : memref<40x32xf32, #tpu.memory_space<vmem>>, vector<40x32xf32>
    %117 = vector.shape_cast %116 : vector<40x32xf32> to vector<40x1x32xf32>
    %118 = vector.shape_cast %5 : vector<40x16xf32> to vector<40x16x1xf32>
    %119 = vector.broadcast %117 : vector<40x1x32xf32> to vector<40x16x32xf32>
    %120 = vector.broadcast %118 : vector<40x16x1xf32> to vector<40x16x32xf32>
    %121 = arith.addf %119, %120 : vector<40x16x32xf32>
    %cst_65 = arith.constant dense<0xFF800000> : vector<16x32xf32>
    %122 = vector.multi_reduction <maximumf>, %121, %cst_65 [0] : vector<40x16x32xf32> to vector<16x32xf32>
    %cst_66 = arith.constant 0xFF800000 : f32
    %123 = vector.broadcast %cst_66 : f32 to vector<16x32xf32>
    %124 = arith.cmpf oeq, %122, %123 : vector<16x32xf32>
    %cst_67 = arith.constant 0.000000e+00 : f32
    %125 = vector.broadcast %cst_67 : f32 to vector<16x32xf32>
    %126 = arith.select %124, %125, %122 : vector<16x32xi1>, vector<16x32xf32>
    %c0_68 = arith.constant 0 : index
    %c0_69 = arith.constant 0 : index
    %127 = vector.load %arg19[%c0_68, %c0_69] : memref<1x64xf32, #tpu.memory_space<vmem>>, vector<1x64xf32>
    %128 = arith.truncf %126 : vector<16x32xf32> to vector<16x32xbf16>
    %c0_70 = arith.constant 0 : index
    %c0_71 = arith.constant 0 : index
    %129 = vector.load %arg17[%c0_70, %c0_71] : memref<32x64xbf16, #tpu.memory_space<vmem>>, vector<32x64xbf16>
    %cst_72 = arith.constant dense<0.000000e+00> : vector<16x64xf32>
    %130 = tpu.matmul %128, %129, %cst_72 {dimension_numbers = #tpu.dot_dimension_numbers<[1], [0], [0], [1], [0, 0, 1, 1], [], []>} : vector<16x32xbf16>, vector<32x64xbf16>, vector<16x64xf32> -> vector<16x64xf32>
    %131 = vector.broadcast %127 : vector<1x64xf32> to vector<16x64xf32>
    %132 = arith.addf %131, %130 : vector<16x64xf32>
    %133 = arith.truncf %6 : vector<16x32xf32> to vector<16x32xbf16>
    %c0_73 = arith.constant 0 : index
    %c0_74 = arith.constant 0 : index
    %134 = vector.load %arg18[%c0_73, %c0_74] : memref<32x64xbf16, #tpu.memory_space<vmem>>, vector<32x64xbf16>
    %cst_75 = arith.constant dense<0.000000e+00> : vector<16x64xf32>
    %135 = tpu.matmul %133, %134, %cst_75 {dimension_numbers = #tpu.dot_dimension_numbers<[1], [0], [0], [1], [0, 0, 1, 1], [], []>} : vector<16x32xbf16>, vector<32x64xbf16>, vector<16x64xf32> -> vector<16x64xf32>
    %136 = arith.addf %132, %135 : vector<16x64xf32>
    %cst_76 = arith.constant 2.000000e+01 : f32
    %137 = vector.broadcast %cst_76 : f32 to vector<16x64xf32>
    %138 = arith.minimumf %136, %137 : vector<16x64xf32>
    %139 = math.exp %138 : vector<16x64xf32>
    %cst_77 = arith.constant 1.000000e+00 : f32
    %140 = vector.broadcast %cst_77 : f32 to vector<16x64xf32>
    %141 = arith.addf %140, %139 : vector<16x64xf32>
    %cst_78 = arith.constant 1.000000e+00 : f32
    %142 = vector.broadcast %cst_78 : f32 to vector<16x64xf32>
    %143 = arith.addf %142, %139 : vector<16x64xf32>
    %144 = arith.mulf %141, %143 : vector<16x64xf32>
    %cst_79 = arith.constant 1.000000e+00 : f32
    %145 = vector.broadcast %cst_79 : f32 to vector<16x64xf32>
    %146 = arith.subf %144, %145 : vector<16x64xf32>
    %147 = arith.mulf %136, %146 : vector<16x64xf32>
    %cst_80 = arith.constant 1.000000e+00 : f32
    %148 = vector.broadcast %cst_80 : f32 to vector<16x64xf32>
    %149 = arith.addf %144, %148 : vector<16x64xf32>
    %150 = tpu.reciprocal %149 {approx = true} : vector<16x64xf32> -> vector<16x64xf32>
    %151 = arith.mulf %147, %150 : vector<16x64xf32>
    %152 = arith.truncf %151 : vector<16x64xf32> to vector<16x64xbf16>
    %c0_81 = arith.constant 0 : index
    %c0_82 = arith.constant 0 : index
    %153 = vector.load %arg20[%c0_81, %c0_82] : memref<64x32xbf16, #tpu.memory_space<vmem>>, vector<64x32xbf16>
    %cst_83 = arith.constant dense<0.000000e+00> : vector<16x32xf32>
    %154 = tpu.matmul %152, %153, %cst_83 {dimension_numbers = #tpu.dot_dimension_numbers<[1], [0], [0], [1], [0, 0, 1, 1], [], []>} : vector<16x64xbf16>, vector<64x32xbf16>, vector<16x32xf32> -> vector<16x32xf32>
    %c0_84 = arith.constant 0 : index
    %c0_85 = arith.constant 0 : index
    %155 = vector.load %arg21[%c0_84, %c0_85] : memref<1x32xf32, #tpu.memory_space<vmem>>, vector<1x32xf32>
    %156 = vector.broadcast %155 : vector<1x32xf32> to vector<16x32xf32>
    %157 = arith.addf %154, %156 : vector<16x32xf32>
    %158 = arith.addf %6, %157 : vector<16x32xf32>
    %cst_86 = arith.constant dense<0.000000e+00> : vector<40x32xf32>
    %159 = tpu.matmul %0, %158, %cst_86 {dimension_numbers = #tpu.dot_dimension_numbers<[1], [0], [0], [1], [0, 0, 1, 1], [], []>} : vector<40x16xf32>, vector<16x32xf32>, vector<40x32xf32> -> vector<40x32xf32>
    %160 = vector.extract_strided_slice %159 {offsets = [0, 0], sizes = [8, 32], strides = [1, 1]} : vector<40x32xf32> to vector<8x32xf32>
    %c0_87 = arith.constant 0 : index
    %c0_88 = arith.constant 0 : index
    %161 = vector.load %arg4[%c0_87, %c0_88] : memref<1x32xf32, #tpu.memory_space<vmem>>, vector<1x32xf32>
    %162 = arith.truncf %160 : vector<8x32xf32> to vector<8x32xbf16>
    %c0_89 = arith.constant 0 : index
    %c0_90 = arith.constant 0 : index
    %163 = vector.load %arg3[%c0_89, %c0_90] : memref<32x32xbf16, #tpu.memory_space<vmem>>, vector<32x32xbf16>
    %cst_91 = arith.constant dense<0.000000e+00> : vector<8x32xf32>
    %164 = tpu.matmul %162, %163, %cst_91 {dimension_numbers = #tpu.dot_dimension_numbers<[1], [0], [0], [1], [0, 0, 1, 1], [], []>} : vector<8x32xbf16>, vector<32x32xbf16>, vector<8x32xf32> -> vector<8x32xf32>
    %165 = vector.broadcast %161 : vector<1x32xf32> to vector<8x32xf32>
    %166 = arith.addf %165, %164 : vector<8x32xf32>
    %cst_92 = arith.constant 2.000000e+01 : f32
    %167 = vector.broadcast %cst_92 : f32 to vector<8x32xf32>
    %168 = arith.minimumf %166, %167 : vector<8x32xf32>
    %169 = math.exp %168 : vector<8x32xf32>
    %cst_93 = arith.constant 1.000000e+00 : f32
    %170 = vector.broadcast %cst_93 : f32 to vector<8x32xf32>
    %171 = arith.addf %170, %169 : vector<8x32xf32>
    %cst_94 = arith.constant 1.000000e+00 : f32
    %172 = vector.broadcast %cst_94 : f32 to vector<8x32xf32>
    %173 = arith.addf %172, %169 : vector<8x32xf32>
    %174 = arith.mulf %171, %173 : vector<8x32xf32>
    %cst_95 = arith.constant 1.000000e+00 : f32
    %175 = vector.broadcast %cst_95 : f32 to vector<8x32xf32>
    %176 = arith.subf %174, %175 : vector<8x32xf32>
    %177 = arith.mulf %166, %176 : vector<8x32xf32>
    %cst_96 = arith.constant 1.000000e+00 : f32
    %178 = vector.broadcast %cst_96 : f32 to vector<8x32xf32>
    %179 = arith.addf %174, %178 : vector<8x32xf32>
    %180 = tpu.reciprocal %179 {approx = true} : vector<8x32xf32> -> vector<8x32xf32>
    %181 = arith.mulf %177, %180 : vector<8x32xf32>
    %182 = arith.truncf %181 : vector<8x32xf32> to vector<8x32xbf16>
    %c0_97 = arith.constant 0 : index
    %c0_98 = arith.constant 0 : index
    %183 = vector.load %arg5[%c0_97, %c0_98] : memref<32x32xbf16, #tpu.memory_space<vmem>>, vector<32x32xbf16>
    %cst_99 = arith.constant dense<0.000000e+00> : vector<8x32xf32>
    %184 = tpu.matmul %182, %183, %cst_99 {dimension_numbers = #tpu.dot_dimension_numbers<[1], [0], [0], [1], [0, 0, 1, 1], [], []>} : vector<8x32xbf16>, vector<32x32xbf16>, vector<8x32xf32> -> vector<8x32xf32>
    %c0_100 = arith.constant 0 : index
    %c0_101 = arith.constant 0 : index
    %185 = vector.load %arg6[%c0_100, %c0_101] : memref<1x32xf32, #tpu.memory_space<vmem>>, vector<1x32xf32>
    %186 = vector.broadcast %185 : vector<1x32xf32> to vector<8x32xf32>
    %187 = arith.addf %184, %186 : vector<8x32xf32>
    %188 = arith.addf %160, %187 : vector<8x32xf32>
    %c0_102 = arith.constant 0 : index
    %c0_103 = arith.constant 0 : index
    %189 = vector.load %arg27[%c0_102, %c0_103] : memref<40x32xf32, #tpu.memory_space<vmem>>, vector<8x32xf32>
    tpu.vector_store %arg27[%c0_102, %c0_103], %188 {strides = array<i32>} : memref<40x32xf32, #tpu.memory_space<vmem>>, vector<8x32xf32>,
    %190 = vector.extract_strided_slice %159 {offsets = [8, 0], sizes = [8, 32], strides = [1, 1]} : vector<40x32xf32> to vector<8x32xf32>
    %191 = vector.extract_strided_slice %159 {offsets = [16, 0], sizes = [8, 32], strides = [1, 1]} : vector<40x32xf32> to vector<8x32xf32>
    %c0_104 = arith.constant 0 : index
    %c0_105 = arith.constant 0 : index
    %192 = vector.load %arg9[%c0_104, %c0_105] : memref<1x64xf32, #tpu.memory_space<vmem>>, vector<1x64xf32>
    %193 = arith.truncf %190 : vector<8x32xf32> to vector<8x32xbf16>
    %c0_106 = arith.constant 0 : index
    %c0_107 = arith.constant 0 : index
    %194 = vector.load %arg7[%c0_106, %c0_107] : memref<32x64xbf16, #tpu.memory_space<vmem>>, vector<32x64xbf16>
    %cst_108 = arith.constant dense<0.000000e+00> : vector<8x64xf32>
    %195 = tpu.matmul %193, %194, %cst_108 {dimension_numbers = #tpu.dot_dimension_numbers<[1], [0], [0], [1], [0, 0, 1, 1], [], []>} : vector<8x32xbf16>, vector<32x64xbf16>, vector<8x64xf32> -> vector<8x64xf32>
    %196 = vector.broadcast %192 : vector<1x64xf32> to vector<8x64xf32>
    %197 = arith.addf %196, %195 : vector<8x64xf32>
    %198 = arith.truncf %191 : vector<8x32xf32> to vector<8x32xbf16>
    %c0_109 = arith.constant 0 : index
    %c0_110 = arith.constant 0 : index
    %199 = vector.load %arg8[%c0_109, %c0_110] : memref<32x64xbf16, #tpu.memory_space<vmem>>, vector<32x64xbf16>
    %cst_111 = arith.constant dense<0.000000e+00> : vector<8x64xf32>
    %200 = tpu.matmul %198, %199, %cst_111 {dimension_numbers = #tpu.dot_dimension_numbers<[1], [0], [0], [1], [0, 0, 1, 1], [], []>} : vector<8x32xbf16>, vector<32x64xbf16>, vector<8x64xf32> -> vector<8x64xf32>
    %201 = arith.addf %197, %200 : vector<8x64xf32>
    %cst_112 = arith.constant 2.000000e+01 : f32
    %202 = vector.broadcast %cst_112 : f32 to vector<8x64xf32>
    %203 = arith.minimumf %201, %202 : vector<8x64xf32>
    %204 = math.exp %203 : vector<8x64xf32>
    %cst_113 = arith.constant 1.000000e+00 : f32
    %205 = vector.broadcast %cst_113 : f32 to vector<8x64xf32>
    %206 = arith.addf %205, %204 : vector<8x64xf32>
    %cst_114 = arith.constant 1.000000e+00 : f32
    %207 = vector.broadcast %cst_114 : f32 to vector<8x64xf32>
    %208 = arith.addf %207, %204 : vector<8x64xf32>
    %209 = arith.mulf %206, %208 : vector<8x64xf32>
    %cst_115 = arith.constant 1.000000e+00 : f32
    %210 = vector.broadcast %cst_115 : f32 to vector<8x64xf32>
    %211 = arith.subf %209, %210 : vector<8x64xf32>
    %212 = arith.mulf %201, %211 : vector<8x64xf32>
    %cst_116 = arith.constant 1.000000e+00 : f32
    %213 = vector.broadcast %cst_116 : f32 to vector<8x64xf32>
    %214 = arith.addf %209, %213 : vector<8x64xf32>
    %215 = tpu.reciprocal %214 {approx = true} : vector<8x64xf32> -> vector<8x64xf32>
    %216 = arith.mulf %212, %215 : vector<8x64xf32>
    %217 = arith.truncf %216 : vector<8x64xf32> to vector<8x64xbf16>
    %c0_117 = arith.constant 0 : index
    %c0_118 = arith.constant 0 : index
    %218 = vector.load %arg10[%c0_117, %c0_118] : memref<64x64xbf16, #tpu.memory_space<vmem>>, vector<64x64xbf16>
    %cst_119 = arith.constant dense<0.000000e+00> : vector<8x64xf32>
    %219 = tpu.matmul %217, %218, %cst_119 {dimension_numbers = #tpu.dot_dimension_numbers<[1], [0], [0], [1], [0, 0, 1, 1], [], []>} : vector<8x64xbf16>, vector<64x64xbf16>, vector<8x64xf32> -> vector<8x64xf32>
    %c0_120 = arith.constant 0 : index
    %c0_121 = arith.constant 0 : index
    %220 = vector.load %arg11[%c0_120, %c0_121] : memref<1x64xf32, #tpu.memory_space<vmem>>, vector<1x64xf32>
    %221 = vector.broadcast %220 : vector<1x64xf32> to vector<8x64xf32>
    %222 = arith.addf %219, %221 : vector<8x64xf32>
    %223 = vector.extract_strided_slice %222 {offsets = [0, 0], sizes = [8, 32], strides = [1, 1]} : vector<8x64xf32> to vector<8x32xf32>
    %224 = arith.addf %190, %223 : vector<8x32xf32>
    %c8_122 = arith.constant 8 : index
    %c0_123 = arith.constant 0 : index
    %225 = vector.load %arg27[%c8_122, %c0_123] : memref<40x32xf32, #tpu.memory_space<vmem>>, vector<8x32xf32>
    tpu.vector_store %arg27[%c8_122, %c0_123], %224 {strides = array<i32>} : memref<40x32xf32, #tpu.memory_space<vmem>>, vector<8x32xf32>,
    %226 = vector.extract_strided_slice %222 {offsets = [0, 32], sizes = [8, 32], strides = [1, 1]} : vector<8x64xf32> to vector<8x32xf32>
    %227 = arith.addf %191, %226 : vector<8x32xf32>
    %c16_124 = arith.constant 16 : index
    %c0_125 = arith.constant 0 : index
    %228 = vector.load %arg27[%c16_124, %c0_125] : memref<40x32xf32, #tpu.memory_space<vmem>>, vector<8x32xf32>
    tpu.vector_store %arg27[%c16_124, %c0_125], %227 {strides = array<i32>} : memref<40x32xf32, #tpu.memory_space<vmem>>, vector<8x32xf32>,
    %229 = vector.extract_strided_slice %159 {offsets = [24, 0], sizes = [8, 32], strides = [1, 1]} : vector<40x32xf32> to vector<8x32xf32>
    %230 = vector.extract_strided_slice %159 {offsets = [32, 0], sizes = [8, 32], strides = [1, 1]} : vector<40x32xf32> to vector<8x32xf32>
    %c0_126 = arith.constant 0 : index
    %c0_127 = arith.constant 0 : index
    %231 = vector.load %arg14[%c0_126, %c0_127] : memref<1x64xf32, #tpu.memory_space<vmem>>, vector<1x64xf32>
    %232 = arith.truncf %229 : vector<8x32xf32> to vector<8x32xbf16>
    %c0_128 = arith.constant 0 : index
    %c0_129 = arith.constant 0 : index
    %233 = vector.load %arg12[%c0_128, %c0_129] : memref<32x64xbf16, #tpu.memory_space<vmem>>, vector<32x64xbf16>
    %cst_130 = arith.constant dense<0.000000e+00> : vector<8x64xf32>
    %234 = tpu.matmul %232, %233, %cst_130 {dimension_numbers = #tpu.dot_dimension_numbers<[1], [0], [0], [1], [0, 0, 1, 1], [], []>} : vector<8x32xbf16>, vector<32x64xbf16>, vector<8x64xf32> -> vector<8x64xf32>
    %235 = vector.broadcast %231 : vector<1x64xf32> to vector<8x64xf32>
    %236 = arith.addf %235, %234 : vector<8x64xf32>
    %237 = arith.truncf %230 : vector<8x32xf32> to vector<8x32xbf16>
    %c0_131 = arith.constant 0 : index
    %c0_132 = arith.constant 0 : index
    %238 = vector.load %arg13[%c0_131, %c0_132] : memref<32x64xbf16, #tpu.memory_space<vmem>>, vector<32x64xbf16>
    %cst_133 = arith.constant dense<0.000000e+00> : vector<8x64xf32>
    %239 = tpu.matmul %237, %238, %cst_133 {dimension_numbers = #tpu.dot_dimension_numbers<[1], [0], [0], [1], [0, 0, 1, 1], [], []>} : vector<8x32xbf16>, vector<32x64xbf16>, vector<8x64xf32> -> vector<8x64xf32>
    %240 = arith.addf %236, %239 : vector<8x64xf32>
    %cst_134 = arith.constant 2.000000e+01 : f32
    %241 = vector.broadcast %cst_134 : f32 to vector<8x64xf32>
    %242 = arith.minimumf %240, %241 : vector<8x64xf32>
    %243 = math.exp %242 : vector<8x64xf32>
    %cst_135 = arith.constant 1.000000e+00 : f32
    %244 = vector.broadcast %cst_135 : f32 to vector<8x64xf32>
    %245 = arith.addf %244, %243 : vector<8x64xf32>
    %cst_136 = arith.constant 1.000000e+00 : f32
    %246 = vector.broadcast %cst_136 : f32 to vector<8x64xf32>
    %247 = arith.addf %246, %243 : vector<8x64xf32>
    %248 = arith.mulf %245, %247 : vector<8x64xf32>
    %cst_137 = arith.constant 1.000000e+00 : f32
    %249 = vector.broadcast %cst_137 : f32 to vector<8x64xf32>
    %250 = arith.subf %248, %249 : vector<8x64xf32>
    %251 = arith.mulf %240, %250 : vector<8x64xf32>
    %cst_138 = arith.constant 1.000000e+00 : f32
    %252 = vector.broadcast %cst_138 : f32 to vector<8x64xf32>
    %253 = arith.addf %248, %252 : vector<8x64xf32>
    %254 = tpu.reciprocal %253 {approx = true} : vector<8x64xf32> -> vector<8x64xf32>
    %255 = arith.mulf %251, %254 : vector<8x64xf32>
    %256 = arith.truncf %255 : vector<8x64xf32> to vector<8x64xbf16>
    %c0_139 = arith.constant 0 : index
    %c0_140 = arith.constant 0 : index
    %257 = vector.load %arg15[%c0_139, %c0_140] : memref<64x64xbf16, #tpu.memory_space<vmem>>, vector<64x64xbf16>
    %cst_141 = arith.constant dense<0.000000e+00> : vector<8x64xf32>
    %258 = tpu.matmul %256, %257, %cst_141 {dimension_numbers = #tpu.dot_dimension_numbers<[1], [0], [0], [1], [0, 0, 1, 1], [], []>} : vector<8x64xbf16>, vector<64x64xbf16>, vector<8x64xf32> -> vector<8x64xf32>
    %c0_142 = arith.constant 0 : index
    %c0_143 = arith.constant 0 : index
    %259 = vector.load %arg16[%c0_142, %c0_143] : memref<1x64xf32, #tpu.memory_space<vmem>>, vector<1x64xf32>
    %260 = vector.broadcast %259 : vector<1x64xf32> to vector<8x64xf32>
    %261 = arith.addf %258, %260 : vector<8x64xf32>
    %262 = vector.extract_strided_slice %261 {offsets = [0, 0], sizes = [8, 32], strides = [1, 1]} : vector<8x64xf32> to vector<8x32xf32>
    %263 = arith.addf %229, %262 : vector<8x32xf32>
    %c24_144 = arith.constant 24 : index
    %c0_145 = arith.constant 0 : index
    %264 = vector.load %arg27[%c24_144, %c0_145] : memref<40x32xf32, #tpu.memory_space<vmem>>, vector<8x32xf32>
    tpu.vector_store %arg27[%c24_144, %c0_145], %263 {strides = array<i32>} : memref<40x32xf32, #tpu.memory_space<vmem>>, vector<8x32xf32>,
    %265 = vector.extract_strided_slice %261 {offsets = [0, 32], sizes = [8, 32], strides = [1, 1]} : vector<8x64xf32> to vector<8x32xf32>
    %266 = arith.addf %230, %265 : vector<8x32xf32>
    %c32_146 = arith.constant 32 : index
    %c0_147 = arith.constant 0 : index
    %267 = vector.load %arg27[%c32_146, %c0_147] : memref<40x32xf32, #tpu.memory_space<vmem>>, vector<8x32xf32>
    tpu.vector_store %arg27[%c32_146, %c0_147], %266 {strides = array<i32>} : memref<40x32xf32, #tpu.memory_space<vmem>>, vector<8x32xf32>,
    %c0_148 = arith.constant 0 : index
    %c0_149 = arith.constant 0 : index
    %268 = vector.load %arg27[%c0_148, %c0_149] : memref<40x32xf32, #tpu.memory_space<vmem>>, vector<40x32xf32>
    %269 = vector.shape_cast %268 : vector<40x32xf32> to vector<40x1x32xf32>
    %270 = vector.shape_cast %5 : vector<40x16xf32> to vector<40x16x1xf32>
    %271 = vector.broadcast %269 : vector<40x1x32xf32> to vector<40x16x32xf32>
    %272 = vector.broadcast %270 : vector<40x16x1xf32> to vector<40x16x32xf32>
    %273 = arith.addf %271, %272 : vector<40x16x32xf32>
    %cst_150 = arith.constant dense<0xFF800000> : vector<16x32xf32>
    %274 = vector.multi_reduction <maximumf>, %273, %cst_150 [0] : vector<40x16x32xf32> to vector<16x32xf32>
    %cst_151 = arith.constant 0xFF800000 : f32
    %275 = vector.broadcast %cst_151 : f32 to vector<16x32xf32>
    %276 = arith.cmpf oeq, %274, %275 : vector<16x32xf32>
    %cst_152 = arith.constant 0.000000e+00 : f32
    %277 = vector.broadcast %cst_152 : f32 to vector<16x32xf32>
    %278 = arith.select %276, %277, %274 : vector<16x32xi1>, vector<16x32xf32>
    %c0_153 = arith.constant 0 : index
    %c0_154 = arith.constant 0 : index
    %279 = vector.load %arg19[%c0_153, %c0_154] : memref<1x64xf32, #tpu.memory_space<vmem>>, vector<1x64xf32>
    %280 = arith.truncf %278 : vector<16x32xf32> to vector<16x32xbf16>
    %c0_155 = arith.constant 0 : index
    %c0_156 = arith.constant 0 : index
    %281 = vector.load %arg17[%c0_155, %c0_156] : memref<32x64xbf16, #tpu.memory_space<vmem>>, vector<32x64xbf16>
    %cst_157 = arith.constant dense<0.000000e+00> : vector<16x64xf32>
    %282 = tpu.matmul %280, %281, %cst_157 {dimension_numbers = #tpu.dot_dimension_numbers<[1], [0], [0], [1], [0, 0, 1, 1], [], []>} : vector<16x32xbf16>, vector<32x64xbf16>, vector<16x64xf32> -> vector<16x64xf32>
    %283 = vector.broadcast %279 : vector<1x64xf32> to vector<16x64xf32>
    %284 = arith.addf %283, %282 : vector<16x64xf32>
    %285 = arith.truncf %158 : vector<16x32xf32> to vector<16x32xbf16>
    %c0_158 = arith.constant 0 : index
    %c0_159 = arith.constant 0 : index
    %286 = vector.load %arg18[%c0_158, %c0_159] : memref<32x64xbf16, #tpu.memory_space<vmem>>, vector<32x64xbf16>
    %cst_160 = arith.constant dense<0.000000e+00> : vector<16x64xf32>
    %287 = tpu.matmul %285, %286, %cst_160 {dimension_numbers = #tpu.dot_dimension_numbers<[1], [0], [0], [1], [0, 0, 1, 1], [], []>} : vector<16x32xbf16>, vector<32x64xbf16>, vector<16x64xf32> -> vector<16x64xf32>
    %288 = arith.addf %284, %287 : vector<16x64xf32>
    %cst_161 = arith.constant 2.000000e+01 : f32
    %289 = vector.broadcast %cst_161 : f32 to vector<16x64xf32>
    %290 = arith.minimumf %288, %289 : vector<16x64xf32>
    %291 = math.exp %290 : vector<16x64xf32>
    %cst_162 = arith.constant 1.000000e+00 : f32
    %292 = vector.broadcast %cst_162 : f32 to vector<16x64xf32>
    %293 = arith.addf %292, %291 : vector<16x64xf32>
    %cst_163 = arith.constant 1.000000e+00 : f32
    %294 = vector.broadcast %cst_163 : f32 to vector<16x64xf32>
    %295 = arith.addf %294, %291 : vector<16x64xf32>
    %296 = arith.mulf %293, %295 : vector<16x64xf32>
    %cst_164 = arith.constant 1.000000e+00 : f32
    %297 = vector.broadcast %cst_164 : f32 to vector<16x64xf32>
    %298 = arith.subf %296, %297 : vector<16x64xf32>
    %299 = arith.mulf %288, %298 : vector<16x64xf32>
    %cst_165 = arith.constant 1.000000e+00 : f32
    %300 = vector.broadcast %cst_165 : f32 to vector<16x64xf32>
    %301 = arith.addf %296, %300 : vector<16x64xf32>
    %302 = tpu.reciprocal %301 {approx = true} : vector<16x64xf32> -> vector<16x64xf32>
    %303 = arith.mulf %299, %302 : vector<16x64xf32>
    %304 = arith.truncf %303 : vector<16x64xf32> to vector<16x64xbf16>
    %c0_166 = arith.constant 0 : index
    %c0_167 = arith.constant 0 : index
    %305 = vector.load %arg20[%c0_166, %c0_167] : memref<64x32xbf16, #tpu.memory_space<vmem>>, vector<64x32xbf16>
    %cst_168 = arith.constant dense<0.000000e+00> : vector<16x32xf32>
    %306 = tpu.matmul %304, %305, %cst_168 {dimension_numbers = #tpu.dot_dimension_numbers<[1], [0], [0], [1], [0, 0, 1, 1], [], []>} : vector<16x64xbf16>, vector<64x32xbf16>, vector<16x32xf32> -> vector<16x32xf32>
    %c0_169 = arith.constant 0 : index
    %c0_170 = arith.constant 0 : index
    %307 = vector.load %arg21[%c0_169, %c0_170] : memref<1x32xf32, #tpu.memory_space<vmem>>, vector<1x32xf32>
    %308 = vector.broadcast %307 : vector<1x32xf32> to vector<16x32xf32>
    %309 = arith.addf %306, %308 : vector<16x32xf32>
    %310 = arith.addf %158, %309 : vector<16x32xf32>
    %c0_171 = arith.constant 0 : index
    %c0_172 = arith.constant 0 : index
    %311 = vector.load %arg2[%c0_171, %c0_172] : memref<2x16xf32, #tpu.memory_space<vmem>>, vector<2x16xf32>
    %cst_173 = arith.constant dense<0.000000e+00> : vector<2x32xf32>
    %312 = tpu.matmul %311, %310, %cst_173 {dimension_numbers = #tpu.dot_dimension_numbers<[1], [0], [0], [1], [0, 0, 1, 1], [], []>} : vector<2x16xf32>, vector<16x32xf32>, vector<2x32xf32> -> vector<2x32xf32>
    %c0_174 = arith.constant 0 : index
    %c0_175 = arith.constant 0 : index
    %313 = vector.load %arg22[%c0_174, %c0_175] : memref<32x64xf32, #tpu.memory_space<vmem>>, vector<32x64xf32>
    %cst_176 = arith.constant dense<0.000000e+00> : vector<2x64xf32>
    %314 = tpu.matmul %312, %313, %cst_176 {dimension_numbers = #tpu.dot_dimension_numbers<[1], [0], [0], [1], [0, 0, 1, 1], [], []>} : vector<2x32xf32>, vector<32x64xf32>, vector<2x64xf32> -> vector<2x64xf32>
    %c0_177 = arith.constant 0 : index
    %c0_178 = arith.constant 0 : index
    %315 = vector.load %arg23[%c0_177, %c0_178] : memref<1x64xf32, #tpu.memory_space<vmem>>, vector<1x64xf32>
    %316 = vector.broadcast %315 : vector<1x64xf32> to vector<2x64xf32>
    %317 = arith.addf %314, %316 : vector<2x64xf32>
    %cst_179 = arith.constant 2.000000e+01 : f32
    %318 = vector.broadcast %cst_179 : f32 to vector<2x64xf32>
    %319 = arith.minimumf %317, %318 : vector<2x64xf32>
    %320 = math.exp %319 : vector<2x64xf32>
    %cst_180 = arith.constant 1.000000e+00 : f32
    %321 = vector.broadcast %cst_180 : f32 to vector<2x64xf32>
    %322 = arith.addf %321, %320 : vector<2x64xf32>
    %cst_181 = arith.constant 1.000000e+00 : f32
    %323 = vector.broadcast %cst_181 : f32 to vector<2x64xf32>
    %324 = arith.addf %323, %320 : vector<2x64xf32>
    %325 = arith.mulf %322, %324 : vector<2x64xf32>
    %cst_182 = arith.constant 1.000000e+00 : f32
    %326 = vector.broadcast %cst_182 : f32 to vector<2x64xf32>
    %327 = arith.subf %325, %326 : vector<2x64xf32>
    %328 = arith.mulf %317, %327 : vector<2x64xf32>
    %cst_183 = arith.constant 1.000000e+00 : f32
    %329 = vector.broadcast %cst_183 : f32 to vector<2x64xf32>
    %330 = arith.addf %325, %329 : vector<2x64xf32>
    %331 = tpu.reciprocal %330 {approx = true} : vector<2x64xf32> -> vector<2x64xf32>
    %332 = arith.mulf %328, %331 : vector<2x64xf32>
    %c0_184 = arith.constant 0 : index
    %c0_185 = arith.constant 0 : index
    %333 = vector.load %arg24[%c0_184, %c0_185] : memref<64x2xf32, #tpu.memory_space<vmem>>, vector<64x2xf32>
    %cst_186 = arith.constant dense<0.000000e+00> : vector<2x2xf32>
    %334 = tpu.matmul %332, %333, %cst_186 {dimension_numbers = #tpu.dot_dimension_numbers<[1], [0], [0], [1], [0, 0, 1, 1], [], []>} : vector<2x64xf32>, vector<64x2xf32>, vector<2x2xf32> -> vector<2x2xf32>
    %c0_187 = arith.constant 0 : index
    %c0_188 = arith.constant 0 : index
    %335 = vector.load %arg25[%c0_187, %c0_188] : memref<1x2xf32, #tpu.memory_space<vmem>>, vector<1x2xf32>
    %336 = vector.broadcast %335 : vector<1x2xf32> to vector<2x2xf32>
    %337 = arith.addf %334, %336 : vector<2x2xf32>
    %c0_189 = arith.constant 0 : index
    %c0_190 = arith.constant 0 : index
    %338 = vector.load %arg26[%c0_189, %c0_190] : memref<2x2xf32, #tpu.memory_space<vmem>>, vector<2x2xf32>
    tpu.vector_store %arg26[%c0_189, %c0_190], %337 {strides = array<i32>} : memref<2x2xf32, #tpu.memory_space<vmem>>, vector<2x2xf32>,
    return
  }
}

</mosaic_0001>

<llo_original>
// kernel: tpu_custom_call.1
$region0: #{tpu_custom_call.1}
  #allocation0 [shape = 'u32[]', space=smem, size = 0x4, offset = 0x4, fixed_abs, tag = 'smem constant byte address 0x4 - core index']
  #allocation1 [shape = 'u32[144,128]{1,0:T(1,128)}', space=vmem, size = 0x12000, scoped, tag = 'internal scratch']
  #allocation2 [shape = 'f32[40,32]{1,0:T(8,128)}', space=vmem, size = 0x5000, scoped, tag = 'scratch operand']
  %s0 = inlined_call_operand.vmem [shape: f32[16,32], index: 0, kind: input, shape index: {}]
  %s1 = inlined_call_operand.vmem [shape: f32[40,16], index: 1, kind: input, shape index: {}]
  %s2 = inlined_call_operand.hbm [shape: f32[2,16], index: 2, kind: input, shape index: {}]
  %s3 = inlined_call_operand.vmem [shape: bf16[32,32], index: 3, kind: input, shape index: {}]
  %s4 = inlined_call_operand.hbm [shape: f32[1,32], index: 4, kind: input, shape index: {}]
  %s5 = inlined_call_operand.vmem [shape: bf16[32,32], index: 5, kind: input, shape index: {}]
  %s6 = inlined_call_operand.hbm [shape: f32[1,32], index: 6, kind: input, shape index: {}]
  %s7 = inlined_call_operand.vmem [shape: bf16[32,64], index: 7, kind: input, shape index: {}]
  %s8 = inlined_call_operand.hbm [shape: bf16[32,64], index: 8, kind: input, shape index: {}]
  %s9 = inlined_call_operand.hbm [shape: f32[1,64], index: 9, kind: input, shape index: {}]
  %s10 = inlined_call_operand.vmem [shape: bf16[64,64], index: 10, kind: input, shape index: {}]
  %s11 = inlined_call_operand.hbm [shape: f32[1,64], index: 11, kind: input, shape index: {}]
  %s12 = inlined_call_operand.vmem [shape: bf16[32,64], index: 12, kind: input, shape index: {}]
  %s13 = inlined_call_operand.hbm [shape: bf16[32,64], index: 13, kind: input, shape index: {}]
  %s14 = inlined_call_operand.hbm [shape: f32[1,64], index: 14, kind: input, shape index: {}]
  %s15 = inlined_call_operand.vmem [shape: bf16[64,64], index: 15, kind: input, shape index: {}]
  %s16 = inlined_call_operand.vmem [shape: f32[1,64], index: 16, kind: input, shape index: {}]
  %s17 = inlined_call_operand.vmem [shape: bf16[32,64], index: 17, kind: input, shape index: {}]
  %s18 = inlined_call_operand.hbm [shape: bf16[32,64], index: 18, kind: input, shape index: {}]
  %s19 = inlined_call_operand.vmem [shape: f32[1,64], index: 19, kind: input, shape index: {}]
  %s20 = inlined_call_operand.vmem [shape: bf16[64,32], index: 20, kind: input, shape index: {}]
  %s21 = inlined_call_operand.vmem [shape: f32[1,32], index: 21, kind: input, shape index: {}]
  %s22 = inlined_call_operand.vmem [shape: f32[32,64], index: 22, kind: input, shape index: {}]
  %s23 = inlined_call_operand.vmem [shape: f32[1,64], index: 23, kind: input, shape index: {}]
  %s24 = inlined_call_operand.vmem [shape: f32[64,2], index: 24, kind: input, shape index: {}]
  %s25 = inlined_call_operand.vmem [shape: f32[1,2], index: 25, kind: input, shape index: {}]
  %s26 = inlined_call_operand.hbm [shape: f32[2,2], index: 26, kind: output, shape index: {}]
  %s27 = sld [smem:[#allocation0]]
  $region150: #{tpu_custom_call.1} parent=0
    _
  %s29 = ssub.s32 1, %s27
  %s30 = scalar_select 0, %s29, %s27
  $region1: #{tpu_custom_call.1} parent=0
    #allocation3 [shape = 'u8[1024]{0}', space=vmem, size = 0x400, scoped, tag = 'input window, operand 2, single buffered']
    #allocation4 [shape = 's32[1]{0}', space=sflag, size = 0x4, scoped, tag = 'scoped memory for tpu_custom_call.1']
    #allocation5 [shape = 's32[1]{0}', space=sflag, size = 0x4, scoped, tag = 'scoped memory for tpu_custom_call.1']
    #allocation6 [shape = 'u8[512]{0}', space=vmem, size = 0x400, scoped, tag = 'input window, operand 4, single buffered']
    #allocation7 [shape = 's32[1]{0}', space=sflag, size = 0x4, scoped, tag = 'scoped memory for tpu_custom_call.1']
    #allocation8 [shape = 'u8[512]{0}', space=vmem, size = 0x400, scoped, tag = 'input window, operand 6, single buffered']
    #allocation9 [shape = 'u8[8192]{0}', space=vmem, size = 0x2000, scoped, tag = 'input window, operand 8, single buffered']
    #allocation10 [shape = 's32[1]{0}', space=sflag, size = 0x4, scoped, tag = 'scoped memory for tpu_custom_call.1']
    #allocation11 [shape = 'u8[512]{0}', space=vmem, size = 0x400, scoped, tag = 'input window, operand 9, single buffered']
    #allocation12 [shape = 'u8[512]{0}', space=vmem, size = 0x400, scoped, tag = 'input window, operand 11, single buffered']
    #allocation13 [shape = 's32[1]{0}', space=sflag, size = 0x4, scoped, tag = 'scoped memory for tpu_custom_call.1']
    #allocation14 [shape = 'u8[8192]{0}', space=vmem, size = 0x2000, scoped, tag = 'input window, operand 13, single buffered']
    #allocation15 [shape = 'u8[512]{0}', space=vmem, size = 0x400, scoped, tag = 'input window, operand 14, single buffered']
    #allocation16 [shape = 's32[1]{0}', space=sflag, size = 0x4, scoped, tag = 'scoped memory for tpu_custom_call.1']
    #allocation17 [shape = 'u8[8192]{0}', space=vmem, size = 0x2000, scoped, tag = 'input window, operand 18, single buffered']
    #allocation18 [shape = 'u8[1024]{0}', space=vmem, size = 0x400, scoped, tag = 'output window, operand 0, single buffered']
    %31 = vsyncpa [#allocation4], 0
    %32 = vsyncpa [#allocation7], 0
    %33 = vsyncpa [#allocation10], 0
    %34 = vsyncpa [#allocation13], 0
    %35 = vsyncpa [#allocation16], 0
    %36 = vsyncpa [#allocation5], 0
    // Predicated region
    $region2: #{tpu_custom_call.1} parent=1 // pred_check
      _
    $region3: #{tpu_custom_call.1} parent=1 // pred_check_branch
      %38 = sbr.rel (0) target = $region5
    $region4: #{tpu_custom_call.1} parent=1 // pred_region
      _
    $region5: #{tpu_custom_call.1} parent=1 // pred_fallthru
      _
    // Predicated region
    $region6: #{tpu_custom_call.1} parent=1 // pred_check
      _
    $region7: #{tpu_custom_call.1} parent=1 // pred_check_branch
      %40 = sbr.rel (0) target = $region9
    $region8: #{tpu_custom_call.1} parent=1 // pred_region
      _
    $region9: #{tpu_custom_call.1} parent=1 // pred_fallthru
      _
    // Predicated region
    $region10: #{tpu_custom_call.1} parent=1 // pred_check
      _
    $region11: #{tpu_custom_call.1} parent=1 // pred_check_branch
      %42 = sbr.rel (0) target = $region13
    $region12: #{tpu_custom_call.1} parent=1 // pred_region
      %s44 = ssub.s32 32, 32
      %45 = vsyncadd [#allocation4], %s44
      %s47 = sshll.u32 [#allocation3], 4
      %s48 = int_to_ptr.vmem [resolvable:$true] %s47
      %50 = dma.hbm_to_vmem [thread:$0]  %s2, 32, %s48, [#allocation4]
    $region13: #{tpu_custom_call.1} parent=1 // pred_fallthru
      _
    // Predicated region
    $region14: #{tpu_custom_call.1} parent=1 // pred_check
      _
    $region15: #{tpu_custom_call.1} parent=1 // pred_check_branch
      %52 = sbr.rel (0) target = $region17
    $region16: #{tpu_custom_call.1} parent=1 // pred_region
      _
    $region17: #{tpu_custom_call.1} parent=1 // pred_fallthru
      _
    // Predicated region
    $region18: #{tpu_custom_call.1} parent=1 // pred_check
      _
    $region19: #{tpu_custom_call.1} parent=1 // pred_check_branch
      %54 = sbr.rel (0) target = $region21
    $region20: #{tpu_custom_call.1} parent=1 // pred_region
      %s56 = ssub.s32 16, 16
      %57 = vsyncadd [#allocation7], %s56
      %s59 = sshll.u32 [#allocation6], 4
      %s60 = int_to_ptr.vmem [resolvable:$true] %s59
      %62 = dma.hbm_to_vmem [thread:$0]  %s4, 16, %s60, [#allocation7]
    $region21: #{tpu_custom_call.1} parent=1 // pred_fallthru
      _
    // Predicated region
    $region22: #{tpu_custom_call.1} parent=1 // pred_check
      _
    $region23: #{tpu_custom_call.1} parent=1 // pred_check_branch
      %64 = sbr.rel (0) target = $region25
    $region24: #{tpu_custom_call.1} parent=1 // pred_region
      _
    $region25: #{tpu_custom_call.1} parent=1 // pred_fallthru
      _
    // Predicated region
    $region26: #{tpu_custom_call.1} parent=1 // pred_check
      _
    $region27: #{tpu_custom_call.1} parent=1 // pred_check_branch
      %66 = sbr.rel (0) target = $region29
    $region28: #{tpu_custom_call.1} parent=1 // pred_region
      %s68 = ssub.s32 16, 16
      %69 = vsyncadd [#allocation7], %s68
      %s71 = sshll.u32 [#allocation8], 4
      %s72 = int_to_ptr.vmem [resolvable:$true] %s71
      %74 = dma.hbm_to_vmem [thread:$0]  %s6, 16, %s72, [#allocation7]
    $region29: #{tpu_custom_call.1} parent=1 // pred_fallthru
      _
    // Predicated region
    $region30: #{tpu_custom_call.1} parent=1 // pred_check
      _
    $region31: #{tpu_custom_call.1} parent=1 // pred_check_branch
      %76 = sbr.rel (0) target = $region33
    $region32: #{tpu_custom_call.1} parent=1 // pred_region
      _
    $region33: #{tpu_custom_call.1} parent=1 // pred_fallthru
      _
    // Predicated region
    $region34: #{tpu_custom_call.1} parent=1 // pred_check
      _
    $region35: #{tpu_custom_call.1} parent=1 // pred_check_branch
      %78 = sbr.rel (0) target = $region37
    $region36: #{tpu_custom_call.1} parent=1 // pred_region
      %s80 = ssub.s32 256, 256
      %81 = vsyncadd [#allocation10], %s80
      %s82 = sshll.u32 [#allocation9], 4
      %s83 = int_to_ptr.vmem [resolvable:$true] %s82
      %88 = dma.hbm_to_vmem [thread:$0]  %s8, 256, %s83, [#allocation10], 64, 64, 4
    $region37: #{tpu_custom_call.1} parent=1 // pred_fallthru
      _
    // Predicated region
    $region38: #{tpu_custom_call.1} parent=1 // pred_check
      _
    $region39: #{tpu_custom_call.1} parent=1 // pred_check_branch
      %90 = sbr.rel (0) target = $region41
    $region40: #{tpu_custom_call.1} parent=1 // pred_region
      %s92 = ssub.s32 16, 16
      %93 = vsyncadd [#allocation10], %s92
      %s95 = sshll.u32 [#allocation11], 4
      %s96 = int_to_ptr.vmem [resolvable:$true] %s95
      %98 = dma.hbm_to_vmem [thread:$0]  %s9, 16, %s96, [#allocation10]
    $region41: #{tpu_custom_call.1} parent=1 // pred_fallthru
      _
    // Predicated region
    $region42: #{tpu_custom_call.1} parent=1 // pred_check
      _
    $region43: #{tpu_custom_call.1} parent=1 // pred_check_branch
      %100 = sbr.rel (0) target = $region45
    $region44: #{tpu_custom_call.1} parent=1 // pred_region
      _
    $region45: #{tpu_custom_call.1} parent=1 // pred_fallthru
      _
    // Predicated region
    $region46: #{tpu_custom_call.1} parent=1 // pred_check
      _
    $region47: #{tpu_custom_call.1} parent=1 // pred_check_branch
      %102 = sbr.rel (0) target = $region49
    $region48: #{tpu_custom_call.1} parent=1 // pred_region
      %s104 = ssub.s32 16, 16
      %105 = vsyncadd [#allocation13], %s104
      %s107 = sshll.u32 [#allocation12], 4
      %s108 = int_to_ptr.vmem [resolvable:$true] %s107
      %110 = dma.hbm_to_vmem [thread:$0]  %s11, 16, %s108, [#allocation13]
    $region49: #{tpu_custom_call.1} parent=1 // pred_fallthru
      _
    // Predicated region
    $region50: #{tpu_custom_call.1} parent=1 // pred_check
      _
    $region51: #{tpu_custom_call.1} parent=1 // pred_check_branch
      %112 = sbr.rel (0) target = $region53
    $region52: #{tpu_custom_call.1} parent=1 // pred_region
      _
    $region53: #{tpu_custom_call.1} parent=1 // pred_fallthru
      _
    // Predicated region
    $region54: #{tpu_custom_call.1} parent=1 // pred_check
      _
    $region55: #{tpu_custom_call.1} parent=1 // pred_check_branch
      %114 = sbr.rel (0) target = $region57
    $region56: #{tpu_custom_call.1} parent=1 // pred_region
      %s116 = ssub.s32 256, 256
      %117 = vsyncadd [#allocation13], %s116
      %s118 = sshll.u32 [#allocation14], 4
      %s119 = int_to_ptr.vmem [resolvable:$true] %s118
      %124 = dma.hbm_to_vmem [thread:$0]  %s13, 256, %s119, [#allocation13], 64, 64, 4
    $region57: #{tpu_custom_call.1} parent=1 // pred_fallthru
      _
    // Predicated region
    $region58: #{tpu_custom_call.1} parent=1 // pred_check
      _
    $region59: #{tpu_custom_call.1} parent=1 // pred_check_branch
      %126 = sbr.rel (0) target = $region61
    $region60: #{tpu_custom_call.1} parent=1 // pred_region
      %s128 = ssub.s32 16, 16
      %129 = vsyncadd [#allocation16], %s128
      %s131 = sshll.u32 [#allocation15], 4
      %s132 = int_to_ptr.vmem [resolvable:$true] %s131
      %134 = dma.hbm_to_vmem [thread:$0]  %s14, 16, %s132, [#allocation16]
    $region61: #{tpu_custom_call.1} parent=1 // pred_fallthru
      _
    // Predicated region
    $region62: #{tpu_custom_call.1} parent=1 // pred_check
      _
    $region63: #{tpu_custom_call.1} parent=1 // pred_check_branch
      %136 = sbr.rel (0) target = $region65
    $region64: #{tpu_custom_call.1} parent=1 // pred_region
      _
    $region65: #{tpu_custom_call.1} parent=1 // pred_fallthru
      _
    // Predicated region
    $region66: #{tpu_custom_call.1} parent=1 // pred_check
      _
    $region67: #{tpu_custom_call.1} parent=1 // pred_check_branch
      %138 = sbr.rel (0) target = $region69
    $region68: #{tpu_custom_call.1} parent=1 // pred_region
      _
    $region69: #{tpu_custom_call.1} parent=1 // pred_fallthru
      _
    // Predicated region
    $region70: #{tpu_custom_call.1} parent=1 // pred_check
      _
    $region71: #{tpu_custom_call.1} parent=1 // pred_check_branch
      %140 = sbr.rel (0) target = $region73
    $region72: #{tpu_custom_call.1} parent=1 // pred_region
      _
    $region73: #{tpu_custom_call.1} parent=1 // pred_fallthru
      _
    // Predicated region
    $region74: #{tpu_custom_call.1} parent=1 // pred_check
      _
    $region75: #{tpu_custom_call.1} parent=1 // pred_check_branch
      %142 = sbr.rel (0) target = $region77
    $region76: #{tpu_custom_call.1} parent=1 // pred_region
      %s144 = ssub.s32 256, 256
      %145 = vsyncadd [#allocation16], %s144
      %s146 = sshll.u32 [#allocation17], 4
      %s147 = int_to_ptr.vmem [resolvable:$true] %s146
      %152 = dma.hbm_to_vmem [thread:$0]  %s18, 256, %s147, [#allocation16], 64, 64, 4
    $region77: #{tpu_custom_call.1} parent=1 // pred_fallthru
      _
    // Predicated region
    $region78: #{tpu_custom_call.1} parent=1 // pred_check
      _
    $region79: #{tpu_custom_call.1} parent=1 // pred_check_branch
      %154 = sbr.rel (0) target = $region81
    $region80: #{tpu_custom_call.1} parent=1 // pred_region
      _
    $region81: #{tpu_custom_call.1} parent=1 // pred_fallthru
      _
    // Predicated region
    $region82: #{tpu_custom_call.1} parent=1 // pred_check
      _
    $region83: #{tpu_custom_call.1} parent=1 // pred_check_branch
      %156 = sbr.rel (0) target = $region85
    $region84: #{tpu_custom_call.1} parent=1 // pred_region
      _
    $region85: #{tpu_custom_call.1} parent=1 // pred_fallthru
      _
    // Predicated region
    $region86: #{tpu_custom_call.1} parent=1 // pred_check
      _
    $region87: #{tpu_custom_call.1} parent=1 // pred_check_branch
      %158 = sbr.rel (0) target = $region89
    $region88: #{tpu_custom_call.1} parent=1 // pred_region
      _
    $region89: #{tpu_custom_call.1} parent=1 // pred_fallthru
      _
    // Predicated region
    $region90: #{tpu_custom_call.1} parent=1 // pred_check
      _
    $region91: #{tpu_custom_call.1} parent=1 // pred_check_branch
      %160 = sbr.rel (0) target = $region93
    $region92: #{tpu_custom_call.1} parent=1 // pred_region
      _
    $region93: #{tpu_custom_call.1} parent=1 // pred_fallthru
      _
    // Predicated region
    $region94: #{tpu_custom_call.1} parent=1 // pred_check
      _
    $region95: #{tpu_custom_call.1} parent=1 // pred_check_branch
      %162 = sbr.rel (0) target = $region97
    $region96: #{tpu_custom_call.1} parent=1 // pred_region
      _
    $region97: #{tpu_custom_call.1} parent=1 // pred_fallthru
      _
    // Predicated region
    $region98: #{tpu_custom_call.1} parent=1 // pred_check
      _
    $region99: #{tpu_custom_call.1} parent=1 // pred_check_branch
      %164 = sbr.rel (0) target = $region101
    $region100: #{tpu_custom_call.1} parent=1 // pred_region
      _
    $region101: #{tpu_custom_call.1} parent=1 // pred_fallthru
      _
    // Predicated region
    $region102: #{tpu_custom_call.1} parent=1 // pred_check
      _
    $region103: #{tpu_custom_call.1} parent=1 // pred_check_branch
      %166 = sbr.rel (0) target = $region105
    $region104: #{tpu_custom_call.1} parent=1 // pred_region
      _
    $region105: #{tpu_custom_call.1} parent=1 // pred_fallthru
      _
    // Predicated region
    $region106: #{tpu_custom_call.1} parent=1 // pred_check
      _
    $region107: #{tpu_custom_call.1} parent=1 // pred_check_branch
      %168 = sbr.rel (0) target = $region109
    $region108: #{tpu_custom_call.1} parent=1 // pred_region
      %169 = dma.done [#allocation4], 32
    $region109: #{tpu_custom_call.1} parent=1 // pred_fallthru
      _
    // Predicated region
    $region110: #{tpu_custom_call.1} parent=1 // pred_check
      _
    $region111: #{tpu_custom_call.1} parent=1 // pred_check_branch
      %171 = sbr.rel (0) target = $region113
    $region112: #{tpu_custom_call.1} parent=1 // pred_region
      %172 = dma.done [#allocation7], 16
    $region113: #{tpu_custom_call.1} parent=1 // pred_fallthru
      _
    // Predicated region
    $region114: #{tpu_custom_call.1} parent=1 // pred_check
      _
    $region115: #{tpu_custom_call.1} parent=1 // pred_check_branch
      %174 = sbr.rel (0) target = $region117
    $region116: #{tpu_custom_call.1} parent=1 // pred_region
      %175 = dma.done [#allocation7], 16
    $region117: #{tpu_custom_call.1} parent=1 // pred_fallthru
      _
    // Predicated region
    $region118: #{tpu_custom_call.1} parent=1 // pred_check
      _
    $region119: #{tpu_custom_call.1} parent=1 // pred_check_branch
      %177 = sbr.rel (0) target = $region121
    $region120: #{tpu_custom_call.1} parent=1 // pred_region
      %178 = dma.done [#allocation10], 256
    $region121: #{tpu_custom_call.1} parent=1 // pred_fallthru
      _
    // Predicated region
    $region122: #{tpu_custom_call.1} parent=1 // pred_check
      _
    $region123: #{tpu_custom_call.1} parent=1 // pred_check_branch
      %180 = sbr.rel (0) target = $region125
    $region124: #{tpu_custom_call.1} parent=1 // pred_region
      %181 = dma.done [#allocation10], 16
    $region125: #{tpu_custom_call.1} parent=1 // pred_fallthru
      _
    // Predicated region
    $region126: #{tpu_custom_call.1} parent=1 // pred_check
      _
    $region127: #{tpu_custom_call.1} parent=1 // pred_check_branch
      %183 = sbr.rel (0) target = $region129
    $region128: #{tpu_custom_call.1} parent=1 // pred_region
      %184 = dma.done [#allocation13], 16
    $region129: #{tpu_custom_call.1} parent=1 // pred_fallthru
      _
    // Predicated region
    $region130: #{tpu_custom_call.1} parent=1 // pred_check
      _
    $region131: #{tpu_custom_call.1} parent=1 // pred_check_branch
      %186 = sbr.rel (0) target = $region133
    $region132: #{tpu_custom_call.1} parent=1 // pred_region
      %187 = dma.done [#allocation13], 256
    $region133: #{tpu_custom_call.1} parent=1 // pred_fallthru
      _
    // Predicated region
    $region134: #{tpu_custom_call.1} parent=1 // pred_check
      _
    $region135: #{tpu_custom_call.1} parent=1 // pred_check_branch
      %189 = sbr.rel (0) target = $region137
    $region136: #{tpu_custom_call.1} parent=1 // pred_region
      %190 = dma.done [#allocation16], 16
    $region137: #{tpu_custom_call.1} parent=1 // pred_fallthru
      _
    // Predicated region
    $region138: #{tpu_custom_call.1} parent=1 // pred_check
      _
    $region139: #{tpu_custom_call.1} parent=1 // pred_check_branch
      %192 = sbr.rel (0) target = $region141
    $region140: #{tpu_custom_call.1} parent=1 // pred_region
      %193 = dma.done [#allocation16], 256
    $region141: #{tpu_custom_call.1} parent=1 // pred_fallthru
      _
    %v195 = vld [vmem:[%s1] sm:$0xff]
    %v196 = vld [vmem:[%s1 + $0x8] sm:$0xff]
    %v197 = vld [vmem:[%s1 + $0x10] sm:$0xff]
    %v198 = vld [vmem:[%s1 + $0x18] sm:$0xff]
    %v199 = vld [vmem:[%s1 + $0x20] sm:$0xff]
    %vm200 = vcmp.gt.f32.partialorder %v195, 0.5
    %vm201 = vcmp.gt.f32.partialorder %v196, 0.5
    %vm202 = vcmp.gt.f32.partialorder %v197, 0.5
    %vm203 = vcmp.gt.f32.partialorder %v198, 0.5
    %vm204 = vcmp.gt.f32.partialorder %v199, 0.5
    %v205 = vsel %vm200, 0.0, -inf
    %v206 = vsel %vm201, 0.0, -inf
    %v207 = vsel %vm202, 0.0, -inf
    %v208 = vsel %vm203, 0.0, -inf
    %v209 = vsel %vm204, 0.0, -inf
    %v210 = vld [vmem:[%s0] sm:$0xff]
    %v211 = vld [vmem:[%s0 + $0x8] sm:$0xff]
    %vm212 = vcmask 130048
    %v214 = vsel %vm212, %v195, 0
    %v217 = vsel %vm212, %v196, 0
    %v220 = vsel %vm212, %v197, 0
    %v223 = vsel %vm212, %v198, 0
    %v226 = vsel %vm212, %v199, 0
    %228 = vmatprep.subr.mxu0 0.0
    %229 = vmatpush1.msra.mxu0 %v210
    %230 = vmatprep.subr.mxu0 0.0
    %231 = vmatpush1.msra.mxu0 %v211
    %232 = vmatprep.subr.mxu0 0.0
    %233 = vmatpush1.msra.mxu0 0.0
    %234 = vmatprep.subr.mxu0 0.0
    %235 = vmatpush1.msra.mxu0 0.0
    %236 = vmatprep.subr.mxu0 0.0
    %237 = vmatpush1.msra.mxu0 0.0
    %238 = vmatprep.subr.mxu0 0.0
    %239 = vmatpush1.msra.mxu0 0.0
    %240 = vmatprep.subr.mxu0 0.0
    %241 = vmatpush1.msra.mxu0 0.0
    %242 = vmatprep.subr.mxu0 0.0
    %243 = vmatpush1.msra.mxu0 0.0
    %244 = vmatprep.subr.mxu0 0.0
    %245 = vmatpush1.msra.mxu0 0.0
    %246 = vmatprep.subr.mxu0 0.0
    %247 = vmatpush1.msra.mxu0 0.0
    %248 = vmatprep.subr.mxu0 0.0
    %249 = vmatpush1.msra.mxu0 0.0
    %250 = vmatprep.subr.mxu0 0.0
    %251 = vmatpush1.msra.mxu0 0.0
    %252 = vmatprep.subr.mxu0 0.0
    %253 = vmatpush1.msra.mxu0 0.0
    %254 = vmatprep.subr.mxu0 0.0
    %255 = vmatpush1.msra.mxu0 0.0
    %256 = vmatprep.subr.mxu0 0.0
    %257 = vmatpush1.msra.mxu0 0.0
    %258 = vmatprep.subr.mxu0 0.0
    %259 = vmatpush1.msra.mxu0 0.0
    %260 = vmatprep.subr.mxu0 0.0
    %261 = vmatpush1.msra.mxu0 0.0
    %262 = vmatprep.subr.mxu0 0.0
    %263 = vmatpush1.msra.mxu0 0.0
    %264 = vmatprep.subr.mxu0 0.0
    %265 = vmatpush1.msra.mxu0 0.0
    %266 = vmatprep.subr.mxu0 0.0
    %267 = vmatpush1.msra.mxu0 0.0
    %268 = vmatprep.subr.mxu0 0.0
    %269 = vmatpush1.msra.mxu0 0.0
    %270 = vmatprep.subr.mxu0 0.0
    %271 = vmatpush1.msra.mxu0 0.0
    %272 = vmatprep.subr.mxu0 0.0
    %273 = vmatpush1.msra.mxu0 0.0
    %274 = vmatprep.subr.mxu0 0.0
    %275 = vmatpush1.msra.mxu0 0.0
    %276 = vmatprep.subr.mxu0 0.0
    %277 = vmatpush1.msra.mxu0 0.0
    %278 = vmatprep.subr.mxu0 0.0
    %279 = vmatpush1.msra.mxu0 0.0
    %280 = vmatprep.subr.mxu0 0.0
    %281 = vmatpush1.msra.mxu0 0.0
    %282 = vmatprep.subr.mxu0 0.0
    %283 = vmatpush1.msra.mxu0 0.0
    %284 = vmatprep.subr.mxu0 0.0
    %285 = vmatpush1.msra.mxu0 0.0
    %286 = vmatprep.subr.mxu0 0.0
    %287 = vmatpush1.msra.mxu0 0.0
    %288 = vmatprep.subr.mxu0 0.0
    %289 = vmatpush1.msra.mxu0 0.0
    %290 = vmatprep.subr.mxu0 0.0
    %291 = vmatpush1.msra.mxu0 0.0
    %292 = vmatprep.mubr.f32.mxu0 0.0
    %293 = vmatmul.mubr.f32.gmra.mrb[0].mxu0 %v214
    %v294 = vpop.f32.mrb[0].mxu0
    %v295 = vadd.f32 0.0, %v294
    %v296 = vpop.f32.mrb[0].mxu0
    %297 = vmatprep.mubr.f32.mxu0 0.0
    %298 = vmatmul.mubr.f32.gmra.mrb[0].mxu0 %v217
    %v299 = vpop.f32.mrb[0].mxu0
    %v300 = vadd.f32 0.0, %v299
    %v301 = vpop.f32.mrb[0].mxu0
    %302 = vmatprep.mubr.f32.mxu0 0.0
    %303 = vmatmul.mubr.f32.gmra.mrb[0].mxu0 %v220
    %v304 = vpop.f32.mrb[0].mxu0
    %v305 = vadd.f32 0.0, %v304
    %v306 = vpop.f32.mrb[0].mxu0
    %307 = vmatprep.mubr.f32.mxu0 0.0
    %308 = vmatmul.mubr.f32.gmra.mrb[0].mxu0 %v223
    %v309 = vpop.f32.mrb[0].mxu0
    %v310 = vadd.f32 0.0, %v309
    %v311 = vpop.f32.mrb[0].mxu0
    %312 = vmatprep.mubr.f32.mxu0 0.0
    %313 = vmatmul.mubr.f32.gmra.mrb[0].mxu0 %v226
    %v314 = vpop.f32.mrb[0].mxu0
    %v315 = vadd.f32 0.0, %v314
    %v316 = vpop.f32.mrb[0].mxu0
    %317 = vdwg.mxu0
    %v318 = vld [vmem:[#allocation6] sm:$0x1]
    %v319 = vpack.c.bf16 %v295, %v295
    %v320 = vld [vmem:[%s3] sm:$0xf]
    %v321 = vld [vmem:[%s3 + $0x4] sm:$0xf]
    %v322 = vld [vmem:[%s3 + $0x8] sm:$0xf]
    %v323 = vld [vmem:[%s3 + $0xc] sm:$0xf]
    %v328 = vunpack.c.l.b16 %v320
    %v329 = vunpack.c.l.b16 %v321
    %v330 = vunpack.c.l.b16 %v322
    %v331 = vunpack.c.l.b16 %v323
    %v332 = vpack.c.b16 %v329, %v328
    %v333 = vpack.c.b16 %v331, %v330
    %vm336 = vcmask 261120
    %v338 = vsel %vm336, %v319, 0
    %340 = vmatprep.subr.bf16.mxu0 0
    %341 = vmatpush1.bf16.msra.mxu0 %v332
    %342 = vmatprep.subr.bf16.mxu0 0
    %343 = vmatpush1.bf16.msra.mxu0 %v333
    %344 = vmatprep.subr.bf16.mxu0 0
    %345 = vmatpush1.bf16.msra.mxu0 0
    %346 = vmatprep.subr.bf16.mxu0 0
    %347 = vmatpush1.bf16.msra.mxu0 0
    %348 = vmatprep.subr.bf16.mxu0 0
    %349 = vmatpush1.bf16.msra.mxu0 0
    %350 = vmatprep.subr.bf16.mxu0 0
    %351 = vmatpush1.bf16.msra.mxu0 0
    %352 = vmatprep.subr.bf16.mxu0 0
    %353 = vmatpush1.bf16.msra.mxu0 0
    %354 = vmatprep.subr.bf16.mxu0 0
    %355 = vmatpush1.bf16.msra.mxu0 0
    %356 = vmatprep.subr.bf16.mxu0 0
    %357 = vmatpush1.bf16.msra.mxu0 0
    %358 = vmatprep.subr.bf16.mxu0 0
    %359 = vmatpush1.bf16.msra.mxu0 0
    %360 = vmatprep.subr.bf16.mxu0 0
    %361 = vmatpush1.bf16.msra.mxu0 0
    %362 = vmatprep.subr.bf16.mxu0 0
    %363 = vmatpush1.bf16.msra.mxu0 0
    %364 = vmatprep.subr.bf16.mxu0 0
    %365 = vmatpush1.bf16.msra.mxu0 0
    %366 = vmatprep.subr.bf16.mxu0 0
    %367 = vmatpush1.bf16.msra.mxu0 0
    %368 = vmatprep.subr.bf16.mxu0 0
    %369 = vmatpush1.bf16.msra.mxu0 0
    %370 = vmatprep.subr.bf16.mxu0 0
    %371 = vmatpush1.bf16.msra.mxu0 0
    %372 = vmatprep.mubr.bf16.mxu0 0
    %373 = vmatmul.mubr.bf16.gmra.mrb[0].mxu0 %v338
    %v374 = vpop.f32.mrb[0].mxu0
    %v375 = vadd.f32 0.0, %v374
    %v376 = vpop.f32.mrb[0].mxu0
    %v377 = vpop.f32.mrb[0].mxu0
    %v378 = vpop.f32.mrb[0].mxu0
    %379 = vdwg.mxu0
    %v381 = vlaneseq
    %v382 = vshrl.u32 %v381, 7
    %v383 = vsub.s32 0, %v382
    %v384 = vrot.slane %v318, %v383
    %v386 = vadd.f32 %v384, %v375
    %v387 = vmin.f32 %v386, 20.0
    %v388 = vmul.f32 %v387, 1.442695
    %v389 = vpow.pop %v388
    %v390 = vadd.f32 %v389, 1.0
    %v391 = vmul.f32 %v390, %v390
    %v392 = vsub.f32 %v391, 1.0
    %v393 = vmul.f32 %v386, %v392
    %v394 = vadd.f32 %v391, 1.0
    %v395 = vrcp.pop %v394
    %v396 = vmul.f32 %v393, %v395
    %v397 = vpack.c.bf16 %v396, %v396
    %v398 = vld [vmem:[%s5] sm:$0xf]
    %v399 = vld [vmem:[%s5 + $0x4] sm:$0xf]
    %v400 = vld [vmem:[%s5 + $0x8] sm:$0xf]
    %v401 = vld [vmem:[%s5 + $0xc] sm:$0xf]
    %v402 = vld [vmem:[#allocation8] sm:$0x1]
    %v404 = vlaneseq
    %v405 = vshrl.u32 %v404, 7
    %v406 = vsub.s32 0, %v405
    %v407 = vrot.slane %v402, %v406
    %v413 = vunpack.c.l.b16 %v398
    %v414 = vunpack.c.l.b16 %v399
    %v415 = vunpack.c.l.b16 %v400
    %v416 = vunpack.c.l.b16 %v401
    %v417 = vpack.c.b16 %v414, %v413
    %v418 = vpack.c.b16 %v416, %v415
    %v422 = vsel %vm336, %v397, 0
    %424 = vmatprep.subr.bf16.mxu0 0
    %425 = vmatpush1.bf16.msra.mxu0 %v417
    %426 = vmatprep.subr.bf16.mxu0 0
    %427 = vmatpush1.bf16.msra.mxu0 %v418
    %428 = vmatprep.subr.bf16.mxu0 0
    %429 = vmatpush1.bf16.msra.mxu0 0
    %430 = vmatprep.subr.bf16.mxu0 0
    %431 = vmatpush1.bf16.msra.mxu0 0
    %432 = vmatprep.subr.bf16.mxu0 0
    %433 = vmatpush1.bf16.msra.mxu0 0
    %434 = vmatprep.subr.bf16.mxu0 0
    %435 = vmatpush1.bf16.msra.mxu0 0
    %436 = vmatprep.subr.bf16.mxu0 0
    %437 = vmatpush1.bf16.msra.mxu0 0
    %438 = vmatprep.subr.bf16.mxu0 0
    %439 = vmatpush1.bf16.msra.mxu0 0
    %440 = vmatprep.subr.bf16.mxu0 0
    %441 = vmatpush1.bf16.msra.mxu0 0
    %442 = vmatprep.subr.bf16.mxu0 0
    %443 = vmatpush1.bf16.msra.mxu0 0
    %444 = vmatprep.subr.bf16.mxu0 0
    %445 = vmatpush1.bf16.msra.mxu0 0
    %446 = vmatprep.subr.bf16.mxu0 0
    %447 = vmatpush1.bf16.msra.mxu0 0
    %448 = vmatprep.subr.bf16.mxu0 0
    %449 = vmatpush1.bf16.msra.mxu0 0
    %450 = vmatprep.subr.bf16.mxu0 0
    %451 = vmatpush1.bf16.msra.mxu0 0
    %452 = vmatprep.subr.bf16.mxu0 0
    %453 = vmatpush1.bf16.msra.mxu0 0
    %454 = vmatprep.subr.bf16.mxu0 0
    %455 = vmatpush1.bf16.msra.mxu0 0
    %456 = vmatprep.mubr.bf16.mxu0 0
    %457 = vmatmul.mubr.bf16.gmra.mrb[0].mxu0 %v422
    %v458 = vpop.f32.mrb[0].mxu0
    %v459 = vadd.f32 %v407, %v458
    %v460 = vpop.f32.mrb[0].mxu0
    %v461 = vpop.f32.mrb[0].mxu0
    %v462 = vpop.f32.mrb[0].mxu0
    %463 = vdwg.mxu0
    %v464 = vadd.f32 %v295, %v459
    %465 = vst.msk [vmem:[#allocation2] sm:$0xff] %vm336, %v464
    %v466 = vld [vmem:[#allocation11] sm:$0x1]
    %v467 = vpack.c.bf16 %v300, %v300
    %v468 = vld [vmem:[%s7] sm:$0xf]
    %v469 = vld [vmem:[%s7 + $0x4] sm:$0xf]
    %v470 = vld [vmem:[%s7 + $0x8] sm:$0xf]
    %v471 = vld [vmem:[%s7 + $0xc] sm:$0xf]
    %v476 = vunpack.c.l.b16 %v468
    %v477 = vunpack.c.l.b16 %v469
    %v478 = vunpack.c.l.b16 %v470
    %v479 = vunpack.c.l.b16 %v471
    %v480 = vpack.c.b16 %v477, %v476
    %v481 = vpack.c.b16 %v479, %v478
    %v485 = vsel %vm336, %v467, 0
    %487 = vmatprep.subr.bf16.mxu0 0
    %488 = vmatpush1.bf16.msra.mxu0 %v480
    %489 = vmatprep.subr.bf16.mxu0 0
    %490 = vmatpush1.bf16.msra.mxu0 %v481
    %491 = vmatprep.subr.bf16.mxu0 0
    %492 = vmatpush1.bf16.msra.mxu0 0
    %493 = vmatprep.subr.bf16.mxu0 0
    %494 = vmatpush1.bf16.msra.mxu0 0
    %495 = vmatprep.subr.bf16.mxu0 0
    %496 = vmatpush1.bf16.msra.mxu0 0
    %497 = vmatprep.subr.bf16.mxu0 0
    %498 = vmatpush1.bf16.msra.mxu0 0
    %499 = vmatprep.subr.bf16.mxu0 0
    %500 = vmatpush1.bf16.msra.mxu0 0
    %501 = vmatprep.subr.bf16.mxu0 0
    %502 = vmatpush1.bf16.msra.mxu0 0
    %503 = vmatprep.subr.bf16.mxu0 0
    %504 = vmatpush1.bf16.msra.mxu0 0
    %505 = vmatprep.subr.bf16.mxu0 0
    %506 = vmatpush1.bf16.msra.mxu0 0
    %507 = vmatprep.subr.bf16.mxu0 0
    %508 = vmatpush1.bf16.msra.mxu0 0
    %509 = vmatprep.subr.bf16.mxu0 0
    %510 = vmatpush1.bf16.msra.mxu0 0
    %511 = vmatprep.subr.bf16.mxu0 0
    %512 = vmatpush1.bf16.msra.mxu0 0
    %513 = vmatprep.subr.bf16.mxu0 0
    %514 = vmatpush1.bf16.msra.mxu0 0
    %515 = vmatprep.subr.bf16.mxu0 0
    %516 = vmatpush1.bf16.msra.mxu0 0
    %517 = vmatprep.subr.bf16.mxu0 0
    %518 = vmatpush1.bf16.msra.mxu0 0
    %519 = vmatprep.mubr.bf16.mxu0 0
    %520 = vmatmul.mubr.bf16.gmra.mrb[0].mxu0 %v485
    %v521 = vpop.f32.mrb[0].mxu0
    %v522 = vadd.f32 0.0, %v521
    %v523 = vpop.f32.mrb[0].mxu0
    %v524 = vpop.f32.mrb[0].mxu0
    %v525 = vpop.f32.mrb[0].mxu0
    %526 = vdwg.mxu0
    %v528 = vlaneseq
    %v529 = vshrl.u32 %v528, 7
    %v530 = vsub.s32 0, %v529
    %v531 = vrot.slane %v466, %v530
    %v533 = vadd.f32 %v531, %v522
    %v534 = vpack.c.bf16 %v305, %v305
    %v535 = vld [vmem:[#allocation9] sm:$0xf]
    %v536 = vld [vmem:[#allocation9 + $0x4] sm:$0xf]
    %v537 = vld [vmem:[#allocation9 + $0x8] sm:$0xf]
    %v538 = vld [vmem:[#allocation9 + $0xc] sm:$0xf]
    %v543 = vunpack.c.l.b16 %v535
    %v544 = vunpack.c.l.b16 %v536
    %v545 = vunpack.c.l.b16 %v537
    %v546 = vunpack.c.l.b16 %v538
    %v547 = vpack.c.b16 %v544, %v543
    %v548 = vpack.c.b16 %v546, %v545
    %v552 = vsel %vm336, %v534, 0
    %554 = vmatprep.subr.bf16.mxu0 0
    %555 = vmatpush1.bf16.msra.mxu0 %v547
    %556 = vmatprep.subr.bf16.mxu0 0
    %557 = vmatpush1.bf16.msra.mxu0 %v548
    %558 = vmatprep.subr.bf16.mxu0 0
    %559 = vmatpush1.bf16.msra.mxu0 0
    %560 = vmatprep.subr.bf16.mxu0 0
    %561 = vmatpush1.bf16.msra.mxu0 0
    %562 = vmatprep.subr.bf16.mxu0 0
    %563 = vmatpush1.bf16.msra.mxu0 0
    %564 = vmatprep.subr.bf16.mxu0 0
    %565 = vmatpush1.bf16.msra.mxu0 0
    %566 = vmatprep.subr.bf16.mxu0 0
    %567 = vmatpush1.bf16.msra.mxu0 0
    %568 = vmatprep.subr.bf16.mxu0 0
    %569 = vmatpush1.bf16.msra.mxu0 0
    %570 = vmatprep.subr.bf16.mxu0 0
    %571 = vmatpush1.bf16.msra.mxu0 0
    %572 = vmatprep.subr.bf16.mxu0 0
    %573 = vmatpush1.bf16.msra.mxu0 0
    %574 = vmatprep.subr.bf16.mxu0 0
    %575 = vmatpush1.bf16.msra.mxu0 0
    %576 = vmatprep.subr.bf16.mxu0 0
    %577 = vmatpush1.bf16.msra.mxu0 0
    %578 = vmatprep.subr.bf16.mxu0 0
    %579 = vmatpush1.bf16.msra.mxu0 0
    %580 = vmatprep.subr.bf16.mxu0 0
    %581 = vmatpush1.bf16.msra.mxu0 0
    %582 = vmatprep.subr.bf16.mxu0 0
    %583 = vmatpush1.bf16.msra.mxu0 0
    %584 = vmatprep.subr.bf16.mxu0 0
    %585 = vmatpush1.bf16.msra.mxu0 0
    %586 = vmatprep.mubr.bf16.mxu0 0
    %587 = vmatmul.mubr.bf16.gmra.mrb[0].mxu0 %v552
    %v588 = vpop.f32.mrb[0].mxu0
    %v589 = vadd.f32 0.0, %v588
    %v590 = vpop.f32.mrb[0].mxu0
    %v591 = vpop.f32.mrb[0].mxu0
    %v592 = vpop.f32.mrb[0].mxu0
    %593 = vdwg.mxu0
    %v594 = vadd.f32 %v533, %v589
    %v595 = vmin.f32 %v594, 20.0
    %v596 = vmul.f32 %v595, 1.442695
    %v597 = vpow.pop %v596
    %v598 = vadd.f32 %v597, 1.0
    %v599 = vmul.f32 %v598, %v598
    %v600 = vsub.f32 %v599, 1.0
    %v601 = vmul.f32 %v594, %v600
    %v602 = vadd.f32 %v599, 1.0
    %v603 = vrcp.pop %v602
    %v604 = vmul.f32 %v601, %v603
    %v605 = vpack.c.bf16 %v604, %v604
    %v606 = vld [vmem:[%s10] sm:$0xf]
    %v607 = vld [vmem:[%s10 + $0x4] sm:$0xf]
    %v608 = vld [vmem:[%s10 + $0x8] sm:$0xf]
    %v609 = vld [vmem:[%s10 + $0xc] sm:$0xf]
    %v610 = vld [vmem:[%s10 + $0x10] sm:$0xf]
    %v611 = vld [vmem:[%s10 + $0x14] sm:$0xf]
    %v612 = vld [vmem:[%s10 + $0x18] sm:$0xf]
    %v613 = vld [vmem:[%s10 + $0x1c] sm:$0xf]
    %v614 = vld [vmem:[#allocation12] sm:$0x1]
    %v616 = vlaneseq
    %v617 = vshrl.u32 %v616, 7
    %v618 = vsub.s32 0, %v617
    %v619 = vrot.slane %v614, %v618
    %v629 = vunpack.c.l.b16 %v606
    %v630 = vunpack.c.l.b16 %v607
    %v631 = vunpack.c.l.b16 %v608
    %v632 = vunpack.c.l.b16 %v609
    %v633 = vunpack.c.l.b16 %v610
    %v634 = vunpack.c.l.b16 %v611
    %v635 = vunpack.c.l.b16 %v612
    %v636 = vunpack.c.l.b16 %v613
    %v637 = vpack.c.b16 %v630, %v629
    %v638 = vpack.c.b16 %v632, %v631
    %v639 = vpack.c.b16 %v634, %v633
    %v640 = vpack.c.b16 %v636, %v635
    %vm645 = vcmask 523264
    %v647 = vsel %vm645, %v605, 0
    %649 = vmatprep.subr.bf16.mxu0 0
    %650 = vmatpush1.bf16.msra.mxu0 %v637
    %651 = vmatprep.subr.bf16.mxu0 0
    %652 = vmatpush1.bf16.msra.mxu0 %v638
    %653 = vmatprep.subr.bf16.mxu0 0
    %654 = vmatpush1.bf16.msra.mxu0 %v639
    %655 = vmatprep.subr.bf16.mxu0 0
    %656 = vmatpush1.bf16.msra.mxu0 %v640
    %657 = vmatprep.subr.bf16.mxu0 0
    %658 = vmatpush1.bf16.msra.mxu0 0
    %659 = vmatprep.subr.bf16.mxu0 0
    %660 = vmatpush1.bf16.msra.mxu0 0
    %661 = vmatprep.subr.bf16.mxu0 0
    %662 = vmatpush1.bf16.msra.mxu0 0
    %663 = vmatprep.subr.bf16.mxu0 0
    %664 = vmatpush1.bf16.msra.mxu0 0
    %665 = vmatprep.subr.bf16.mxu0 0
    %666 = vmatpush1.bf16.msra.mxu0 0
    %667 = vmatprep.subr.bf16.mxu0 0
    %668 = vmatpush1.bf16.msra.mxu0 0
    %669 = vmatprep.subr.bf16.mxu0 0
    %670 = vmatpush1.bf16.msra.mxu0 0
    %671 = vmatprep.subr.bf16.mxu0 0
    %672 = vmatpush1.bf16.msra.mxu0 0
    %673 = vmatprep.subr.bf16.mxu0 0
    %674 = vmatpush1.bf16.msra.mxu0 0
    %675 = vmatprep.subr.bf16.mxu0 0
    %676 = vmatpush1.bf16.msra.mxu0 0
    %677 = vmatprep.subr.bf16.mxu0 0
    %678 = vmatpush1.bf16.msra.mxu0 0
    %679 = vmatprep.subr.bf16.mxu0 0
    %680 = vmatpush1.bf16.msra.mxu0 0
    %681 = vmatprep.mubr.bf16.mxu0 0
    %682 = vmatmul.mubr.bf16.gmra.mrb[0].mxu0 %v647
    %v683 = vpop.f32.mrb[0].mxu0
    %v684 = vadd.f32 %v619, %v683
    %v685 = vpop.f32.mrb[0].mxu0
    %v686 = vpop.f32.mrb[0].mxu0
    %v687 = vpop.f32.mrb[0].mxu0
    %688 = vdwg.mxu0
    %v689 = vadd.f32 %v300, %v684
    %690 = vst.msk [vmem:[#allocation2 + $0x8] sm:$0xff] %vm336, %v689
    %692 = vrot.lane.b32.xlu0 %v684, 96
    %v693 = vpop.permute.xlu0 %692
    %v695 = vadd.f32 %v305, %v693
    %696 = vst.msk [vmem:[#allocation2 + $0x10] sm:$0xff] %vm336, %v695
    %v697 = vld [vmem:[#allocation15] sm:$0x1]
    %v698 = vpack.c.bf16 %v310, %v310
    %v699 = vld [vmem:[%s12] sm:$0xf]
    %v700 = vld [vmem:[%s12 + $0x4] sm:$0xf]
    %v701 = vld [vmem:[%s12 + $0x8] sm:$0xf]
    %v702 = vld [vmem:[%s12 + $0xc] sm:$0xf]
    %v707 = vunpack.c.l.b16 %v699
    %v708 = vunpack.c.l.b16 %v700
    %v709 = vunpack.c.l.b16 %v701
    %v710 = vunpack.c.l.b16 %v702
    %v711 = vpack.c.b16 %v708, %v707
    %v712 = vpack.c.b16 %v710, %v709
    %v716 = vsel %vm336, %v698, 0
    %718 = vmatprep.subr.bf16.mxu0 0
    %719 = vmatpush1.bf16.msra.mxu0 %v711
    %720 = vmatprep.subr.bf16.mxu0 0
    %721 = vmatpush1.bf16.msra.mxu0 %v712
    %722 = vmatprep.subr.bf16.mxu0 0
    %723 = vmatpush1.bf16.msra.mxu0 0
    %724 = vmatprep.subr.bf16.mxu0 0
    %725 = vmatpush1.bf16.msra.mxu0 0
    %726 = vmatprep.subr.bf16.mxu0 0
    %727 = vmatpush1.bf16.msra.mxu0 0
    %728 = vmatprep.subr.bf16.mxu0 0
    %729 = vmatpush1.bf16.msra.mxu0 0
    %730 = vmatprep.subr.bf16.mxu0 0
    %731 = vmatpush1.bf16.msra.mxu0 0
    %732 = vmatprep.subr.bf16.mxu0 0
    %733 = vmatpush1.bf16.msra.mxu0 0
    %734 = vmatprep.subr.bf16.mxu0 0
    %735 = vmatpush1.bf16.msra.mxu0 0
    %736 = vmatprep.subr.bf16.mxu0 0
    %737 = vmatpush1.bf16.msra.mxu0 0
    %738 = vmatprep.subr.bf16.mxu0 0
    %739 = vmatpush1.bf16.msra.mxu0 0
    %740 = vmatprep.subr.bf16.mxu0 0
    %741 = vmatpush1.bf16.msra.mxu0 0
    %742 = vmatprep.subr.bf16.mxu0 0
    %743 = vmatpush1.bf16.msra.mxu0 0
    %744 = vmatprep.subr.bf16.mxu0 0
    %745 = vmatpush1.bf16.msra.mxu0 0
    %746 = vmatprep.subr.bf16.mxu0 0
    %747 = vmatpush1.bf16.msra.mxu0 0
    %748 = vmatprep.subr.bf16.mxu0 0
    %749 = vmatpush1.bf16.msra.mxu0 0
    %750 = vmatprep.mubr.bf16.mxu0 0
    %751 = vmatmul.mubr.bf16.gmra.mrb[0].mxu0 %v716
    %v752 = vpop.f32.mrb[0].mxu0
    %v753 = vadd.f32 0.0, %v752
    %v754 = vpop.f32.mrb[0].mxu0
    %v755 = vpop.f32.mrb[0].mxu0
    %v756 = vpop.f32.mrb[0].mxu0
    %757 = vdwg.mxu0
    %v759 = vlaneseq
    %v760 = vshrl.u32 %v759, 7
    %v761 = vsub.s32 0, %v760
    %v762 = vrot.slane %v697, %v761
    %v764 = vadd.f32 %v762, %v753
    %v765 = vpack.c.bf16 %v315, %v315
    %v766 = vld [vmem:[#allocation14] sm:$0xf]
    %v767 = vld [vmem:[#allocation14 + $0x4] sm:$0xf]
    %v768 = vld [vmem:[#allocation14 + $0x8] sm:$0xf]
    %v769 = vld [vmem:[#allocation14 + $0xc] sm:$0xf]
    %v774 = vunpack.c.l.b16 %v766
    %v775 = vunpack.c.l.b16 %v767
    %v776 = vunpack.c.l.b16 %v768
    %v777 = vunpack.c.l.b16 %v769
    %v778 = vpack.c.b16 %v775, %v774
    %v779 = vpack.c.b16 %v777, %v776
    %v783 = vsel %vm336, %v765, 0
    %785 = vmatprep.subr.bf16.mxu0 0
    %786 = vmatpush1.bf16.msra.mxu0 %v778
    %787 = vmatprep.subr.bf16.mxu0 0
    %788 = vmatpush1.bf16.msra.mxu0 %v779
    %789 = vmatprep.subr.bf16.mxu0 0
    %790 = vmatpush1.bf16.msra.mxu0 0
    %791 = vmatprep.subr.bf16.mxu0 0
    %792 = vmatpush1.bf16.msra.mxu0 0
    %793 = vmatprep.subr.bf16.mxu0 0
    %794 = vmatpush1.bf16.msra.mxu0 0
    %795 = vmatprep.subr.bf16.mxu0 0
    %796 = vmatpush1.bf16.msra.mxu0 0
    %797 = vmatprep.subr.bf16.mxu0 0
    %798 = vmatpush1.bf16.msra.mxu0 0
    %799 = vmatprep.subr.bf16.mxu0 0
    %800 = vmatpush1.bf16.msra.mxu0 0
    %801 = vmatprep.subr.bf16.mxu0 0
    %802 = vmatpush1.bf16.msra.mxu0 0
    %803 = vmatprep.subr.bf16.mxu0 0
    %804 = vmatpush1.bf16.msra.mxu0 0
    %805 = vmatprep.subr.bf16.mxu0 0
    %806 = vmatpush1.bf16.msra.mxu0 0
    %807 = vmatprep.subr.bf16.mxu0 0
    %808 = vmatpush1.bf16.msra.mxu0 0
    %809 = vmatprep.subr.bf16.mxu0 0
    %810 = vmatpush1.bf16.msra.mxu0 0
    %811 = vmatprep.subr.bf16.mxu0 0
    %812 = vmatpush1.bf16.msra.mxu0 0
    %813 = vmatprep.subr.bf16.mxu0 0
    %814 = vmatpush1.bf16.msra.mxu0 0
    %815 = vmatprep.subr.bf16.mxu0 0
    %816 = vmatpush1.bf16.msra.mxu0 0
    %817 = vmatprep.mubr.bf16.mxu0 0
    %818 = vmatmul.mubr.bf16.gmra.mrb[0].mxu0 %v783
    %v819 = vpop.f32.mrb[0].mxu0
    %v820 = vadd.f32 0.0, %v819
    %v821 = vpop.f32.mrb[0].mxu0
    %v822 = vpop.f32.mrb[0].mxu0
    %v823 = vpop.f32.mrb[0].mxu0
    %824 = vdwg.mxu0
    %v825 = vadd.f32 %v764, %v820
    %v826 = vmin.f32 %v825, 20.0
    %v827 = vmul.f32 %v826, 1.442695
    %v828 = vpow.pop %v827
    %v829 = vadd.f32 %v828, 1.0
    %v830 = vmul.f32 %v829, %v829
    %v831 = vsub.f32 %v830, 1.0
    %v832 = vmul.f32 %v825, %v831
    %v833 = vadd.f32 %v830, 1.0
    %v834 = vrcp.pop %v833
    %v835 = vmul.f32 %v832, %v834
    %v836 = vpack.c.bf16 %v835, %v835
    %v837 = vld [vmem:[%s15] sm:$0xf]
    %v838 = vld [vmem:[%s15 + $0x4] sm:$0xf]
    %v839 = vld [vmem:[%s15 + $0x8] sm:$0xf]
    %v840 = vld [vmem:[%s15 + $0xc] sm:$0xf]
    %v841 = vld [vmem:[%s15 + $0x10] sm:$0xf]
    %v842 = vld [vmem:[%s15 + $0x14] sm:$0xf]
    %v843 = vld [vmem:[%s15 + $0x18] sm:$0xf]
    %v844 = vld [vmem:[%s15 + $0x1c] sm:$0xf]
    %v845 = vld [vmem:[%s16] sm:$0x1]
    %v847 = vlaneseq
    %v848 = vshrl.u32 %v847, 7
    %v849 = vsub.s32 0, %v848
    %v850 = vrot.slane %v845, %v849
    %v860 = vunpack.c.l.b16 %v837
    %v861 = vunpack.c.l.b16 %v838
    %v862 = vunpack.c.l.b16 %v839
    %v863 = vunpack.c.l.b16 %v840
    %v864 = vunpack.c.l.b16 %v841
    %v865 = vunpack.c.l.b16 %v842
    %v866 = vunpack.c.l.b16 %v843
    %v867 = vunpack.c.l.b16 %v844
    %v868 = vpack.c.b16 %v861, %v860
    %v869 = vpack.c.b16 %v863, %v862
    %v870 = vpack.c.b16 %v865, %v864
    %v871 = vpack.c.b16 %v867, %v866
    %v877 = vsel %vm645, %v836, 0
    %879 = vmatprep.subr.bf16.mxu0 0
    %880 = vmatpush1.bf16.msra.mxu0 %v868
    %881 = vmatprep.subr.bf16.mxu0 0
    %882 = vmatpush1.bf16.msra.mxu0 %v869
    %883 = vmatprep.subr.bf16.mxu0 0
    %884 = vmatpush1.bf16.msra.mxu0 %v870
    %885 = vmatprep.subr.bf16.mxu0 0
    %886 = vmatpush1.bf16.msra.mxu0 %v871
    %887 = vmatprep.subr.bf16.mxu0 0
    %888 = vmatpush1.bf16.msra.mxu0 0
    %889 = vmatprep.subr.bf16.mxu0 0
    %890 = vmatpush1.bf16.msra.mxu0 0
    %891 = vmatprep.subr.bf16.mxu0 0
    %892 = vmatpush1.bf16.msra.mxu0 0
    %893 = vmatprep.subr.bf16.mxu0 0
    %894 = vmatpush1.bf16.msra.mxu0 0
    %895 = vmatprep.subr.bf16.mxu0 0
    %896 = vmatpush1.bf16.msra.mxu0 0
    %897 = vmatprep.subr.bf16.mxu0 0
    %898 = vmatpush1.bf16.msra.mxu0 0
    %899 = vmatprep.subr.bf16.mxu0 0
    %900 = vmatpush1.bf16.msra.mxu0 0
    %901 = vmatprep.subr.bf16.mxu0 0
    %902 = vmatpush1.bf16.msra.mxu0 0
    %903 = vmatprep.subr.bf16.mxu0 0
    %904 = vmatpush1.bf16.msra.mxu0 0
    %905 = vmatprep.subr.bf16.mxu0 0
    %906 = vmatpush1.bf16.msra.mxu0 0
    %907 = vmatprep.subr.bf16.mxu0 0
    %908 = vmatpush1.bf16.msra.mxu0 0
    %909 = vmatprep.subr.bf16.mxu0 0
    %910 = vmatpush1.bf16.msra.mxu0 0
    %911 = vmatprep.mubr.bf16.mxu0 0
    %912 = vmatmul.mubr.bf16.gmra.mrb[0].mxu0 %v877
    %v913 = vpop.f32.mrb[0].mxu0
    %v914 = vadd.f32 %v850, %v913
    %v915 = vpop.f32.mrb[0].mxu0
    %v916 = vpop.f32.mrb[0].mxu0
    %v917 = vpop.f32.mrb[0].mxu0
    %918 = vdwg.mxu0
    %v919 = vadd.f32 %v310, %v914
    %920 = vst.msk [vmem:[#allocation2 + $0x18] sm:$0xff] %vm336, %v919
    %922 = vrot.lane.b32.xlu0 %v914, 96
    %v923 = vpop.permute.xlu0 %922
    %v925 = vadd.f32 %v315, %v923
    %926 = vst.msk [vmem:[#allocation2 + $0x20] sm:$0xff] %vm336, %v925
    %v927 = vld [vmem:[#allocation2] sm:$0xff]
    %v928 = vld [vmem:[#allocation2 + $0x8] sm:$0xff]
    %v929 = vld [vmem:[#allocation2 + $0x10] sm:$0xff]
    %v930 = vld [vmem:[#allocation2 + $0x18] sm:$0xff]
    %v931 = vld [vmem:[#allocation2 + $0x20] sm:$0xff]
    %v937 = vcombine.high %v927, %v927
    %v939 = vunpack.c.l.s4 1966171168
    %v940 = vunpack.c.0.s8 %v939
    %v941 = vlaneseq
    %v942 = vshrl.u32 %v941, 7
    %v943 = vsub.s32 %v940, %v942
    %v944 = vrot.slane %v927, %v943
    %v946 = vunpack.c.l.s4 1966171168
    %v947 = vunpack.c.0.s8 %v946
    %v948 = vlaneseq
    %v949 = vshrl.u32 %v948, 7
    %v950 = vsub.s32 %v947, %v949
    %v951 = vrot.slane %v937, %v950
    %v952 = vcombine.high %v944, %v944
    %v953 = vcombine.high %v951, %v951
    %v955 = vunpack.c.l.s4 1966171168
    %v956 = vunpack.c.0.s8 %v955
    %v957 = vlaneseq
    %v958 = vshrl.u32 %v957, 7
    %v959 = vsub.s32 %v956, %v958
    %v960 = vrot.slane %v944, %v959
    %v962 = vunpack.c.l.s4 1966171168
    %v963 = vunpack.c.0.s8 %v962
    %v964 = vlaneseq
    %v965 = vshrl.u32 %v964, 7
    %v966 = vsub.s32 %v963, %v965
    %v967 = vrot.slane %v951, %v966
    %v969 = vunpack.c.l.s4 1966171168
    %v970 = vunpack.c.0.s8 %v969
    %v971 = vlaneseq
    %v972 = vshrl.u32 %v971, 7
    %v973 = vsub.s32 %v970, %v972
    %v974 = vrot.slane %v952, %v973
    %v976 = vunpack.c.l.s4 1966171168
    %v977 = vunpack.c.0.s8 %v976
    %v978 = vlaneseq
    %v979 = vshrl.u32 %v978, 7
    %v980 = vsub.s32 %v977, %v979
    %v981 = vrot.slane %v953, %v980
    %v982 = vcombine.high %v960, %v960
    %v983 = vcombine.high %v967, %v967
    %v984 = vcombine.high %v974, %v974
    %v985 = vcombine.high %v981, %v981
    %v986 = vcombine.high %v928, %v928
    %v988 = vunpack.c.l.s4 1966171168
    %v989 = vunpack.c.0.s8 %v988
    %v990 = vlaneseq
    %v991 = vshrl.u32 %v990, 7
    %v992 = vsub.s32 %v989, %v991
    %v993 = vrot.slane %v928, %v992
    %v995 = vunpack.c.l.s4 1966171168
    %v996 = vunpack.c.0.s8 %v995
    %v997 = vlaneseq
    %v998 = vshrl.u32 %v997, 7
    %v999 = vsub.s32 %v996, %v998
    %v1000 = vrot.slane %v986, %v999
    %v1001 = vcombine.high %v993, %v993
    %v1002 = vcombine.high %v1000, %v1000
    %v1004 = vunpack.c.l.s4 1966171168
    %v1005 = vunpack.c.0.s8 %v1004
    %v1006 = vlaneseq
    %v1007 = vshrl.u32 %v1006, 7
    %v1008 = vsub.s32 %v1005, %v1007
    %v1009 = vrot.slane %v993, %v1008
    %v1011 = vunpack.c.l.s4 1966171168
    %v1012 = vunpack.c.0.s8 %v1011
    %v1013 = vlaneseq
    %v1014 = vshrl.u32 %v1013, 7
    %v1015 = vsub.s32 %v1012, %v1014
    %v1016 = vrot.slane %v1000, %v1015
    %v1018 = vunpack.c.l.s4 1966171168
    %v1019 = vunpack.c.0.s8 %v1018
    %v1020 = vlaneseq
    %v1021 = vshrl.u32 %v1020, 7
    %v1022 = vsub.s32 %v1019, %v1021
    %v1023 = vrot.slane %v1001, %v1022
    %v1025 = vunpack.c.l.s4 1966171168
    %v1026 = vunpack.c.0.s8 %v1025
    %v1027 = vlaneseq
    %v1028 = vshrl.u32 %v1027, 7
    %v1029 = vsub.s32 %v1026, %v1028
    %v1030 = vrot.slane %v1002, %v1029
    %v1031 = vcombine.high %v1009, %v1009
    %v1032 = vcombine.high %v1016, %v1016
    %v1033 = vcombine.high %v1023, %v1023
    %v1034 = vcombine.high %v1030, %v1030
    %v1035 = vcombine.high %v929, %v929
    %v1037 = vunpack.c.l.s4 1966171168
    %v1038 = vunpack.c.0.s8 %v1037
    %v1039 = vlaneseq
    %v1040 = vshrl.u32 %v1039, 7
    %v1041 = vsub.s32 %v1038, %v1040
    %v1042 = vrot.slane %v929, %v1041
    %v1044 = vunpack.c.l.s4 1966171168
    %v1045 = vunpack.c.0.s8 %v1044
    %v1046 = vlaneseq
    %v1047 = vshrl.u32 %v1046, 7
    %v1048 = vsub.s32 %v1045, %v1047
    %v1049 = vrot.slane %v1035, %v1048
    %v1050 = vcombine.high %v1042, %v1042
    %v1051 = vcombine.high %v1049, %v1049
    %v1053 = vunpack.c.l.s4 1966171168
    %v1054 = vunpack.c.0.s8 %v1053
    %v1055 = vlaneseq
    %v1056 = vshrl.u32 %v1055, 7
    %v1057 = vsub.s32 %v1054, %v1056
    %v1058 = vrot.slane %v1042, %v1057
    %v1060 = vunpack.c.l.s4 1966171168
    %v1061 = vunpack.c.0.s8 %v1060
    %v1062 = vlaneseq
    %v1063 = vshrl.u32 %v1062, 7
    %v1064 = vsub.s32 %v1061, %v1063
    %v1065 = vrot.slane %v1049, %v1064
    %v1067 = vunpack.c.l.s4 1966171168
    %v1068 = vunpack.c.0.s8 %v1067
    %v1069 = vlaneseq
    %v1070 = vshrl.u32 %v1069, 7
    %v1071 = vsub.s32 %v1068, %v1070
    %v1072 = vrot.slane %v1050, %v1071
    %v1074 = vunpack.c.l.s4 1966171168
    %v1075 = vunpack.c.0.s8 %v1074
    %v1076 = vlaneseq
    %v1077 = vshrl.u32 %v1076, 7
    %v1078 = vsub.s32 %v1075, %v1077
    %v1079 = vrot.slane %v1051, %v1078
    %v1080 = vcombine.high %v1058, %v1058
    %v1081 = vcombine.high %v1065, %v1065
    %v1082 = vcombine.high %v1072, %v1072
    %v1083 = vcombine.high %v1079, %v1079
    %v1084 = vcombine.high %v930, %v930
    %v1086 = vunpack.c.l.s4 1966171168
    %v1087 = vunpack.c.0.s8 %v1086
    %v1088 = vlaneseq
    %v1089 = vshrl.u32 %v1088, 7
    %v1090 = vsub.s32 %v1087, %v1089
    %v1091 = vrot.slane %v930, %v1090
    %v1093 = vunpack.c.l.s4 1966171168
    %v1094 = vunpack.c.0.s8 %v1093
    %v1095 = vlaneseq
    %v1096 = vshrl.u32 %v1095, 7
    %v1097 = vsub.s32 %v1094, %v1096
    %v1098 = vrot.slane %v1084, %v1097
    %v1099 = vcombine.high %v1091, %v1091
    %v1100 = vcombine.high %v1098, %v1098
    %v1102 = vunpack.c.l.s4 1966171168
    %v1103 = vunpack.c.0.s8 %v1102
    %v1104 = vlaneseq
    %v1105 = vshrl.u32 %v1104, 7
    %v1106 = vsub.s32 %v1103, %v1105
    %v1107 = vrot.slane %v1091, %v1106
    %v1109 = vunpack.c.l.s4 1966171168
    %v1110 = vunpack.c.0.s8 %v1109
    %v1111 = vlaneseq
    %v1112 = vshrl.u32 %v1111, 7
    %v1113 = vsub.s32 %v1110, %v1112
    %v1114 = vrot.slane %v1098, %v1113
    %v1116 = vunpack.c.l.s4 1966171168
    %v1117 = vunpack.c.0.s8 %v1116
    %v1118 = vlaneseq
    %v1119 = vshrl.u32 %v1118, 7
    %v1120 = vsub.s32 %v1117, %v1119
    %v1121 = vrot.slane %v1099, %v1120
    %v1123 = vunpack.c.l.s4 1966171168
    %v1124 = vunpack.c.0.s8 %v1123
    %v1125 = vlaneseq
    %v1126 = vshrl.u32 %v1125, 7
    %v1127 = vsub.s32 %v1124, %v1126
    %v1128 = vrot.slane %v1100, %v1127
    %v1129 = vcombine.high %v1107, %v1107
    %v1130 = vcombine.high %v1114, %v1114
    %v1131 = vcombine.high %v1121, %v1121
    %v1132 = vcombine.high %v1128, %v1128
    %v1133 = vcombine.high %v931, %v931
    %v1135 = vunpack.c.l.s4 1966171168
    %v1136 = vunpack.c.0.s8 %v1135
    %v1137 = vlaneseq
    %v1138 = vshrl.u32 %v1137, 7
    %v1139 = vsub.s32 %v1136, %v1138
    %v1140 = vrot.slane %v931, %v1139
    %v1142 = vunpack.c.l.s4 1966171168
    %v1143 = vunpack.c.0.s8 %v1142
    %v1144 = vlaneseq
    %v1145 = vshrl.u32 %v1144, 7
    %v1146 = vsub.s32 %v1143, %v1145
    %v1147 = vrot.slane %v1133, %v1146
    %v1148 = vcombine.high %v1140, %v1140
    %v1149 = vcombine.high %v1147, %v1147
    %v1151 = vunpack.c.l.s4 1966171168
    %v1152 = vunpack.c.0.s8 %v1151
    %v1153 = vlaneseq
    %v1154 = vshrl.u32 %v1153, 7
    %v1155 = vsub.s32 %v1152, %v1154
    %v1156 = vrot.slane %v1140, %v1155
    %v1158 = vunpack.c.l.s4 1966171168
    %v1159 = vunpack.c.0.s8 %v1158
    %v1160 = vlaneseq
    %v1161 = vshrl.u32 %v1160, 7
    %v1162 = vsub.s32 %v1159, %v1161
    %v1163 = vrot.slane %v1147, %v1162
    %v1165 = vunpack.c.l.s4 1966171168
    %v1166 = vunpack.c.0.s8 %v1165
    %v1167 = vlaneseq
    %v1168 = vshrl.u32 %v1167, 7
    %v1169 = vsub.s32 %v1166, %v1168
    %v1170 = vrot.slane %v1148, %v1169
    %v1172 = vunpack.c.l.s4 1966171168
    %v1173 = vunpack.c.0.s8 %v1172
    %v1174 = vlaneseq
    %v1175 = vshrl.u32 %v1174, 7
    %v1176 = vsub.s32 %v1173, %v1175
    %v1177 = vrot.slane %v1149, %v1176
    %v1178 = vcombine.high %v1156, %v1156
    %v1179 = vcombine.high %v1163, %v1163
    %v1180 = vcombine.high %v1170, %v1170
    %v1181 = vcombine.high %v1177, %v1177
    %v1182 = vlaneseq
    %v1183 = vshrl.u32 %v1182, 7
    %v1184 = vsub.s32 0, %v1183
    %v1185 = vrot.slane %v205, %v1184
    %1187 = vbcast.lane.b32.xlu0 %v1185, 256
    %v1188 = vpop.permute.xlu0 %1187
    %s1190 = sor.u32 256, 8
    %1191 = vbcast.lane.b32.xlu0 %v1185, %s1190
    %v1192 = vpop.permute.xlu0 %1191
    %v1193 = vlaneseq
    %v1194 = vshrl.u32 %v1193, 7
    %v1195 = vsub.s32 1, %v1194
    %v1196 = vrot.slane %v205, %v1195
    %1198 = vbcast.lane.b32.xlu0 %v1196, 256
    %v1199 = vpop.permute.xlu0 %1198
    %s1201 = sor.u32 256, 8
    %1202 = vbcast.lane.b32.xlu0 %v1196, %s1201
    %v1203 = vpop.permute.xlu0 %1202
    %v1204 = vlaneseq
    %v1205 = vshrl.u32 %v1204, 7
    %v1206 = vsub.s32 2, %v1205
    %v1207 = vrot.slane %v205, %v1206
    %1209 = vbcast.lane.b32.xlu0 %v1207, 256
    %v1210 = vpop.permute.xlu0 %1209
    %s1212 = sor.u32 256, 8
    %1213 = vbcast.lane.b32.xlu0 %v1207, %s1212
    %v1214 = vpop.permute.xlu0 %1213
    %v1215 = vlaneseq
    %v1216 = vshrl.u32 %v1215, 7
    %v1217 = vsub.s32 3, %v1216
    %v1218 = vrot.slane %v205, %v1217
    %1220 = vbcast.lane.b32.xlu0 %v1218, 256
    %v1221 = vpop.permute.xlu0 %1220
    %s1223 = sor.u32 256, 8
    %1224 = vbcast.lane.b32.xlu0 %v1218, %s1223
    %v1225 = vpop.permute.xlu0 %1224
    %v1226 = vlaneseq
    %v1227 = vshrl.u32 %v1226, 7
    %v1228 = vsub.s32 4, %v1227
    %v1229 = vrot.slane %v205, %v1228
    %1231 = vbcast.lane.b32.xlu0 %v1229, 256
    %v1232 = vpop.permute.xlu0 %1231
    %s1234 = sor.u32 256, 8
    %1235 = vbcast.lane.b32.xlu0 %v1229, %s1234
    %v1236 = vpop.permute.xlu0 %1235
    %v1237 = vlaneseq
    %v1238 = vshrl.u32 %v1237, 7
    %v1239 = vsub.s32 5, %v1238
    %v1240 = vrot.slane %v205, %v1239
    %1242 = vbcast.lane.b32.xlu0 %v1240, 256
    %v1243 = vpop.permute.xlu0 %1242
    %s1245 = sor.u32 256, 8
    %1246 = vbcast.lane.b32.xlu0 %v1240, %s1245
    %v1247 = vpop.permute.xlu0 %1246
    %v1248 = vlaneseq
    %v1249 = vshrl.u32 %v1248, 7
    %v1250 = vsub.s32 6, %v1249
    %v1251 = vrot.slane %v205, %v1250
    %1253 = vbcast.lane.b32.xlu0 %v1251, 256
    %v1254 = vpop.permute.xlu0 %1253
    %s1256 = sor.u32 256, 8
    %1257 = vbcast.lane.b32.xlu0 %v1251, %s1256
    %v1258 = vpop.permute.xlu0 %1257
    %v1259 = vlaneseq
    %v1260 = vshrl.u32 %v1259, 7
    %v1261 = vsub.s32 7, %v1260
    %v1262 = vrot.slane %v205, %v1261
    %1264 = vbcast.lane.b32.xlu0 %v1262, 256
    %v1265 = vpop.permute.xlu0 %1264
    %s1267 = sor.u32 256, 8
    %1268 = vbcast.lane.b32.xlu0 %v1262, %s1267
    %v1269 = vpop.permute.xlu0 %1268
    %v1270 = vlaneseq
    %v1271 = vshrl.u32 %v1270, 7
    %v1272 = vsub.s32 0, %v1271
    %v1273 = vrot.slane %v206, %v1272
    %1275 = vbcast.lane.b32.xlu0 %v1273, 256
    %v1276 = vpop.permute.xlu0 %1275
    %s1278 = sor.u32 256, 8
    %1279 = vbcast.lane.b32.xlu0 %v1273, %s1278
    %v1280 = vpop.permute.xlu0 %1279
    %v1281 = vlaneseq
    %v1282 = vshrl.u32 %v1281, 7
    %v1283 = vsub.s32 1, %v1282
    %v1284 = vrot.slane %v206, %v1283
    %1286 = vbcast.lane.b32.xlu0 %v1284, 256
    %v1287 = vpop.permute.xlu0 %1286
    %s1289 = sor.u32 256, 8
    %1290 = vbcast.lane.b32.xlu0 %v1284, %s1289
    %v1291 = vpop.permute.xlu0 %1290
    %v1292 = vlaneseq
    %v1293 = vshrl.u32 %v1292, 7
    %v1294 = vsub.s32 2, %v1293
    %v1295 = vrot.slane %v206, %v1294
    %1297 = vbcast.lane.b32.xlu0 %v1295, 256
    %v1298 = vpop.permute.xlu0 %1297
    %s1300 = sor.u32 256, 8
    %1301 = vbcast.lane.b32.xlu0 %v1295, %s1300
    %v1302 = vpop.permute.xlu0 %1301
    %v1303 = vlaneseq
    %v1304 = vshrl.u32 %v1303, 7
    %v1305 = vsub.s32 3, %v1304
    %v1306 = vrot.slane %v206, %v1305
    %1308 = vbcast.lane.b32.xlu0 %v1306, 256
    %v1309 = vpop.permute.xlu0 %1308
    %s1311 = sor.u32 256, 8
    %1312 = vbcast.lane.b32.xlu0 %v1306, %s1311
    %v1313 = vpop.permute.xlu0 %1312
    %v1314 = vlaneseq
    %v1315 = vshrl.u32 %v1314, 7
    %v1316 = vsub.s32 4, %v1315
    %v1317 = vrot.slane %v206, %v1316
    %1319 = vbcast.lane.b32.xlu0 %v1317, 256
    %v1320 = vpop.permute.xlu0 %1319
    %s1322 = sor.u32 256, 8
    %1323 = vbcast.lane.b32.xlu0 %v1317, %s1322
    %v1324 = vpop.permute.xlu0 %1323
    %v1325 = vlaneseq
    %v1326 = vshrl.u32 %v1325, 7
    %v1327 = vsub.s32 5, %v1326
    %v1328 = vrot.slane %v206, %v1327
    %1330 = vbcast.lane.b32.xlu0 %v1328, 256
    %v1331 = vpop.permute.xlu0 %1330
    %s1333 = sor.u32 256, 8
    %1334 = vbcast.lane.b32.xlu0 %v1328, %s1333
    %v1335 = vpop.permute.xlu0 %1334
    %v1336 = vlaneseq
    %v1337 = vshrl.u32 %v1336, 7
    %v1338 = vsub.s32 6, %v1337
    %v1339 = vrot.slane %v206, %v1338
    %1341 = vbcast.lane.b32.xlu0 %v1339, 256
    %v1342 = vpop.permute.xlu0 %1341
    %s1344 = sor.u32 256, 8
    %1345 = vbcast.lane.b32.xlu0 %v1339, %s1344
    %v1346 = vpop.permute.xlu0 %1345
    %v1347 = vlaneseq
    %v1348 = vshrl.u32 %v1347, 7
    %v1349 = vsub.s32 7, %v1348
    %v1350 = vrot.slane %v206, %v1349
    %1352 = vbcast.lane.b32.xlu0 %v1350, 256
    %v1353 = vpop.permute.xlu0 %1352
    %s1355 = sor.u32 256, 8
    %1356 = vbcast.lane.b32.xlu0 %v1350, %s1355
    %v1357 = vpop.permute.xlu0 %1356
    %v1358 = vlaneseq
    %v1359 = vshrl.u32 %v1358, 7
    %v1360 = vsub.s32 0, %v1359
    %v1361 = vrot.slane %v207, %v1360
    %1363 = vbcast.lane.b32.xlu0 %v1361, 256
    %v1364 = vpop.permute.xlu0 %1363
    %s1366 = sor.u32 256, 8
    %1367 = vbcast.lane.b32.xlu0 %v1361, %s1366
    %v1368 = vpop.permute.xlu0 %1367
    %v1369 = vlaneseq
    %v1370 = vshrl.u32 %v1369, 7
    %v1371 = vsub.s32 1, %v1370
    %v1372 = vrot.slane %v207, %v1371
    %1374 = vbcast.lane.b32.xlu0 %v1372, 256
    %v1375 = vpop.permute.xlu0 %1374
    %s1377 = sor.u32 256, 8
    %1378 = vbcast.lane.b32.xlu0 %v1372, %s1377
    %v1379 = vpop.permute.xlu0 %1378
    %v1380 = vlaneseq
    %v1381 = vshrl.u32 %v1380, 7
    %v1382 = vsub.s32 2, %v1381
    %v1383 = vrot.slane %v207, %v1382
    %1385 = vbcast.lane.b32.xlu0 %v1383, 256
    %v1386 = vpop.permute.xlu0 %1385
    %s1388 = sor.u32 256, 8
    %1389 = vbcast.lane.b32.xlu0 %v1383, %s1388
    %v1390 = vpop.permute.xlu0 %1389
    %v1391 = vlaneseq
    %v1392 = vshrl.u32 %v1391, 7
    %v1393 = vsub.s32 3, %v1392
    %v1394 = vrot.slane %v207, %v1393
    %1396 = vbcast.lane.b32.xlu0 %v1394, 256
    %v1397 = vpop.permute.xlu0 %1396
    %s1399 = sor.u32 256, 8
    %1400 = vbcast.lane.b32.xlu0 %v1394, %s1399
    %v1401 = vpop.permute.xlu0 %1400
    %v1402 = vlaneseq
    %v1403 = vshrl.u32 %v1402, 7
    %v1404 = vsub.s32 4, %v1403
    %v1405 = vrot.slane %v207, %v1404
    %1407 = vbcast.lane.b32.xlu0 %v1405, 256
    %v1408 = vpop.permute.xlu0 %1407
    %s1410 = sor.u32 256, 8
    %1411 = vbcast.lane.b32.xlu0 %v1405, %s1410
    %v1412 = vpop.permute.xlu0 %1411
    %v1413 = vlaneseq
    %v1414 = vshrl.u32 %v1413, 7
    %v1415 = vsub.s32 5, %v1414
    %v1416 = vrot.slane %v207, %v1415
    %1418 = vbcast.lane.b32.xlu0 %v1416, 256
    %v1419 = vpop.permute.xlu0 %1418
    %s1421 = sor.u32 256, 8
    %1422 = vbcast.lane.b32.xlu0 %v1416, %s1421
    %v1423 = vpop.permute.xlu0 %1422
    %v1424 = vlaneseq
    %v1425 = vshrl.u32 %v1424, 7
    %v1426 = vsub.s32 6, %v1425
    %v1427 = vrot.slane %v207, %v1426
    %1429 = vbcast.lane.b32.xlu0 %v1427, 256
    %v1430 = vpop.permute.xlu0 %1429
    %s1432 = sor.u32 256, 8
    %1433 = vbcast.lane.b32.xlu0 %v1427, %s1432
    %v1434 = vpop.permute.xlu0 %1433
    %v1435 = vlaneseq
    %v1436 = vshrl.u32 %v1435, 7
    %v1437 = vsub.s32 7, %v1436
    %v1438 = vrot.slane %v207, %v1437
    %1440 = vbcast.lane.b32.xlu0 %v1438, 256
    %v1441 = vpop.permute.xlu0 %1440
    %s1443 = sor.u32 256, 8
    %1444 = vbcast.lane.b32.xlu0 %v1438, %s1443
    %v1445 = vpop.permute.xlu0 %1444
    %v1446 = vlaneseq
    %v1447 = vshrl.u32 %v1446, 7
    %v1448 = vsub.s32 0, %v1447
    %v1449 = vrot.slane %v208, %v1448
    %1451 = vbcast.lane.b32.xlu0 %v1449, 256
    %v1452 = vpop.permute.xlu0 %1451
    %s1454 = sor.u32 256, 8
    %1455 = vbcast.lane.b32.xlu0 %v1449, %s1454
    %v1456 = vpop.permute.xlu0 %1455
    %v1457 = vlaneseq
    %v1458 = vshrl.u32 %v1457, 7
    %v1459 = vsub.s32 1, %v1458
    %v1460 = vrot.slane %v208, %v1459
    %1462 = vbcast.lane.b32.xlu0 %v1460, 256
    %v1463 = vpop.permute.xlu0 %1462
    %s1465 = sor.u32 256, 8
    %1466 = vbcast.lane.b32.xlu0 %v1460, %s1465
    %v1467 = vpop.permute.xlu0 %1466
    %v1468 = vlaneseq
    %v1469 = vshrl.u32 %v1468, 7
    %v1470 = vsub.s32 2, %v1469
    %v1471 = vrot.slane %v208, %v1470
    %1473 = vbcast.lane.b32.xlu0 %v1471, 256
    %v1474 = vpop.permute.xlu0 %1473
    %s1476 = sor.u32 256, 8
    %1477 = vbcast.lane.b32.xlu0 %v1471, %s1476
    %v1478 = vpop.permute.xlu0 %1477
    %v1479 = vlaneseq
    %v1480 = vshrl.u32 %v1479, 7
    %v1481 = vsub.s32 3, %v1480
    %v1482 = vrot.slane %v208, %v1481
    %1484 = vbcast.lane.b32.xlu0 %v1482, 256
    %v1485 = vpop.permute.xlu0 %1484
    %s1487 = sor.u32 256, 8
    %1488 = vbcast.lane.b32.xlu0 %v1482, %s1487
    %v1489 = vpop.permute.xlu0 %1488
    %v1490 = vlaneseq
    %v1491 = vshrl.u32 %v1490, 7
    %v1492 = vsub.s32 4, %v1491
    %v1493 = vrot.slane %v208, %v1492
    %1495 = vbcast.lane.b32.xlu0 %v1493, 256
    %v1496 = vpop.permute.xlu0 %1495
    %s1498 = sor.u32 256, 8
    %1499 = vbcast.lane.b32.xlu0 %v1493, %s1498
    %v1500 = vpop.permute.xlu0 %1499
    %v1501 = vlaneseq
    %v1502 = vshrl.u32 %v1501, 7
    %v1503 = vsub.s32 5, %v1502
    %v1504 = vrot.slane %v208, %v1503
    %1506 = vbcast.lane.b32.xlu0 %v1504, 256
    %v1507 = vpop.permute.xlu0 %1506
    %s1509 = sor.u32 256, 8
    %1510 = vbcast.lane.b32.xlu0 %v1504, %s1509
    %v1511 = vpop.permute.xlu0 %1510
    %v1512 = vlaneseq
    %v1513 = vshrl.u32 %v1512, 7
    %v1514 = vsub.s32 6, %v1513
    %v1515 = vrot.slane %v208, %v1514
    %1517 = vbcast.lane.b32.xlu0 %v1515, 256
    %v1518 = vpop.permute.xlu0 %1517
    %s1520 = sor.u32 256, 8
    %1521 = vbcast.lane.b32.xlu0 %v1515, %s1520
    %v1522 = vpop.permute.xlu0 %1521
    %v1523 = vlaneseq
    %v1524 = vshrl.u32 %v1523, 7
    %v1525 = vsub.s32 7, %v1524
    %v1526 = vrot.slane %v208, %v1525
    %1528 = vbcast.lane.b32.xlu0 %v1526, 256
    %v1529 = vpop.permute.xlu0 %1528
    %s1531 = sor.u32 256, 8
    %1532 = vbcast.lane.b32.xlu0 %v1526, %s1531
    %v1533 = vpop.permute.xlu0 %1532
    %v1534 = vlaneseq
    %v1535 = vshrl.u32 %v1534, 7
    %v1536 = vsub.s32 0, %v1535
    %v1537 = vrot.slane %v209, %v1536
    %1539 = vbcast.lane.b32.xlu0 %v1537, 256
    %v1540 = vpop.permute.xlu0 %1539
    %s1542 = sor.u32 256, 8
    %1543 = vbcast.lane.b32.xlu0 %v1537, %s1542
    %v1544 = vpop.permute.xlu0 %1543
    %v1545 = vlaneseq
    %v1546 = vshrl.u32 %v1545, 7
    %v1547 = vsub.s32 1, %v1546
    %v1548 = vrot.slane %v209, %v1547
    %1550 = vbcast.lane.b32.xlu0 %v1548, 256
    %v1551 = vpop.permute.xlu0 %1550
    %s1553 = sor.u32 256, 8
    %1554 = vbcast.lane.b32.xlu0 %v1548, %s1553
    %v1555 = vpop.permute.xlu0 %1554
    %v1556 = vlaneseq
    %v1557 = vshrl.u32 %v1556, 7
    %v1558 = vsub.s32 2, %v1557
    %v1559 = vrot.slane %v209, %v1558
    %1561 = vbcast.lane.b32.xlu0 %v1559, 256
    %v1562 = vpop.permute.xlu0 %1561
    %s1564 = sor.u32 256, 8
    %1565 = vbcast.lane.b32.xlu0 %v1559, %s1564
    %v1566 = vpop.permute.xlu0 %1565
    %v1567 = vlaneseq
    %v1568 = vshrl.u32 %v1567, 7
    %v1569 = vsub.s32 3, %v1568
    %v1570 = vrot.slane %v209, %v1569
    %1572 = vbcast.lane.b32.xlu0 %v1570, 256
    %v1573 = vpop.permute.xlu0 %1572
    %s1575 = sor.u32 256, 8
    %1576 = vbcast.lane.b32.xlu0 %v1570, %s1575
    %v1577 = vpop.permute.xlu0 %1576
    %v1578 = vlaneseq
    %v1579 = vshrl.u32 %v1578, 7
    %v1580 = vsub.s32 4, %v1579
    %v1581 = vrot.slane %v209, %v1580
    %1583 = vbcast.lane.b32.xlu0 %v1581, 256
    %v1584 = vpop.permute.xlu0 %1583
    %s1586 = sor.u32 256, 8
    %1587 = vbcast.lane.b32.xlu0 %v1581, %s1586
    %v1588 = vpop.permute.xlu0 %1587
    %v1589 = vlaneseq
    %v1590 = vshrl.u32 %v1589, 7
    %v1591 = vsub.s32 5, %v1590
    %v1592 = vrot.slane %v209, %v1591
    %1594 = vbcast.lane.b32.xlu0 %v1592, 256
    %v1595 = vpop.permute.xlu0 %1594
    %s1597 = sor.u32 256, 8
    %1598 = vbcast.lane.b32.xlu0 %v1592, %s1597
    %v1599 = vpop.permute.xlu0 %1598
    %v1600 = vlaneseq
    %v1601 = vshrl.u32 %v1600, 7
    %v1602 = vsub.s32 6, %v1601
    %v1603 = vrot.slane %v209, %v1602
    %1605 = vbcast.lane.b32.xlu0 %v1603, 256
    %v1606 = vpop.permute.xlu0 %1605
    %s1608 = sor.u32 256, 8
    %1609 = vbcast.lane.b32.xlu0 %v1603, %s1608
    %v1610 = vpop.permute.xlu0 %1609
    %v1611 = vlaneseq
    %v1612 = vshrl.u32 %v1611, 7
    %v1613 = vsub.s32 7, %v1612
    %v1614 = vrot.slane %v209, %v1613
    %1616 = vbcast.lane.b32.xlu0 %v1614, 256
    %v1617 = vpop.permute.xlu0 %1616
    %s1619 = sor.u32 256, 8
    %1620 = vbcast.lane.b32.xlu0 %v1614, %s1619
    %v1621 = vpop.permute.xlu0 %1620
    %v1622 = vlaneseq
    %v1623 = vshrl.u32 %v1622, 7
    %v1624 = vsub.s32 0, %v1623
    %v1625 = vrot.slane %v960, %v1624
    %v1626 = vlaneseq
    %v1627 = vshrl.u32 %v1626, 7
    %v1628 = vsub.s32 0, %v1627
    %v1629 = vrot.slane %v974, %v1628
    %v1630 = vlaneseq
    %v1631 = vshrl.u32 %v1630, 7
    %v1632 = vsub.s32 0, %v1631
    %v1633 = vrot.slane %v982, %v1632
    %v1634 = vlaneseq
    %v1635 = vshrl.u32 %v1634, 7
    %v1636 = vsub.s32 0, %v1635
    %v1637 = vrot.slane %v984, %v1636
    %v1638 = vlaneseq
    %v1639 = vshrl.u32 %v1638, 7
    %v1640 = vsub.s32 0, %v1639
    %v1641 = vrot.slane %v967, %v1640
    %v1642 = vlaneseq
    %v1643 = vshrl.u32 %v1642, 7
    %v1644 = vsub.s32 0, %v1643
    %v1645 = vrot.slane %v981, %v1644
    %v1646 = vlaneseq
    %v1647 = vshrl.u32 %v1646, 7
    %v1648 = vsub.s32 0, %v1647
    %v1649 = vrot.slane %v983, %v1648
    %v1650 = vlaneseq
    %v1651 = vshrl.u32 %v1650, 7
    %v1652 = vsub.s32 0, %v1651
    %v1653 = vrot.slane %v985, %v1652
    %v1654 = vlaneseq
    %v1655 = vshrl.u32 %v1654, 7
    %v1656 = vsub.s32 0, %v1655
    %v1657 = vrot.slane %v1009, %v1656
    %v1658 = vlaneseq
    %v1659 = vshrl.u32 %v1658, 7
    %v1660 = vsub.s32 0, %v1659
    %v1661 = vrot.slane %v1023, %v1660
    %v1662 = vlaneseq
    %v1663 = vshrl.u32 %v1662, 7
    %v1664 = vsub.s32 0, %v1663
    %v1665 = vrot.slane %v1031, %v1664
    %v1666 = vlaneseq
    %v1667 = vshrl.u32 %v1666, 7
    %v1668 = vsub.s32 0, %v1667
    %v1669 = vrot.slane %v1033, %v1668
    %v1670 = vlaneseq
    %v1671 = vshrl.u32 %v1670, 7
    %v1672 = vsub.s32 0, %v1671
    %v1673 = vrot.slane %v1016, %v1672
    %v1674 = vlaneseq
    %v1675 = vshrl.u32 %v1674, 7
    %v1676 = vsub.s32 0, %v1675
    %v1677 = vrot.slane %v1030, %v1676
    %v1678 = vlaneseq
    %v1679 = vshrl.u32 %v1678, 7
    %v1680 = vsub.s32 0, %v1679
    %v1681 = vrot.slane %v1032, %v1680
    %v1682 = vlaneseq
    %v1683 = vshrl.u32 %v1682, 7
    %v1684 = vsub.s32 0, %v1683
    %v1685 = vrot.slane %v1034, %v1684
    %v1686 = vlaneseq
    %v1687 = vshrl.u32 %v1686, 7
    %v1688 = vsub.s32 0, %v1687
    %v1689 = vrot.slane %v1058, %v1688
    %v1690 = vlaneseq
    %v1691 = vshrl.u32 %v1690, 7
    %v1692 = vsub.s32 0, %v1691
    %v1693 = vrot.slane %v1072, %v1692
    %v1694 = vlaneseq
    %v1695 = vshrl.u32 %v1694, 7
    %v1696 = vsub.s32 0, %v1695
    %v1697 = vrot.slane %v1080, %v1696
    %v1698 = vlaneseq
    %v1699 = vshrl.u32 %v1698, 7
    %v1700 = vsub.s32 0, %v1699
    %v1701 = vrot.slane %v1082, %v1700
    %v1702 = vlaneseq
    %v1703 = vshrl.u32 %v1702, 7
    %v1704 = vsub.s32 0, %v1703
    %v1705 = vrot.slane %v1065, %v1704
    %v1706 = vlaneseq
    %v1707 = vshrl.u32 %v1706, 7
    %v1708 = vsub.s32 0, %v1707
    %v1709 = vrot.slane %v1079, %v1708
    %v1710 = vlaneseq
    %v1711 = vshrl.u32 %v1710, 7
    %v1712 = vsub.s32 0, %v1711
    %v1713 = vrot.slane %v1081, %v1712
    %v1714 = vlaneseq
    %v1715 = vshrl.u32 %v1714, 7
    %v1716 = vsub.s32 0, %v1715
    %v1717 = vrot.slane %v1083, %v1716
    %v1718 = vlaneseq
    %v1719 = vshrl.u32 %v1718, 7
    %v1720 = vsub.s32 0, %v1719
    %v1721 = vrot.slane %v1107, %v1720
    %v1722 = vlaneseq
    %v1723 = vshrl.u32 %v1722, 7
    %v1724 = vsub.s32 0, %v1723
    %v1725 = vrot.slane %v1121, %v1724
    %v1726 = vlaneseq
    %v1727 = vshrl.u32 %v1726, 7
    %v1728 = vsub.s32 0, %v1727
    %v1729 = vrot.slane %v1129, %v1728
    %v1730 = vlaneseq
    %v1731 = vshrl.u32 %v1730, 7
    %v1732 = vsub.s32 0, %v1731
    %v1733 = vrot.slane %v1131, %v1732
    %v1734 = vlaneseq
    %v1735 = vshrl.u32 %v1734, 7
    %v1736 = vsub.s32 0, %v1735
    %v1737 = vrot.slane %v1114, %v1736
    %v1738 = vlaneseq
    %v1739 = vshrl.u32 %v1738, 7
    %v1740 = vsub.s32 0, %v1739
    %v1741 = vrot.slane %v1128, %v1740
    %v1742 = vlaneseq
    %v1743 = vshrl.u32 %v1742, 7
    %v1744 = vsub.s32 0, %v1743
    %v1745 = vrot.slane %v1130, %v1744
    %v1746 = vlaneseq
    %v1747 = vshrl.u32 %v1746, 7
    %v1748 = vsub.s32 0, %v1747
    %v1749 = vrot.slane %v1132, %v1748
    %v1750 = vlaneseq
    %v1751 = vshrl.u32 %v1750, 7
    %v1752 = vsub.s32 0, %v1751
    %v1753 = vrot.slane %v1156, %v1752
    %v1754 = vlaneseq
    %v1755 = vshrl.u32 %v1754, 7
    %v1756 = vsub.s32 0, %v1755
    %v1757 = vrot.slane %v1170, %v1756
    %v1758 = vlaneseq
    %v1759 = vshrl.u32 %v1758, 7
    %v1760 = vsub.s32 0, %v1759
    %v1761 = vrot.slane %v1178, %v1760
    %v1762 = vlaneseq
    %v1763 = vshrl.u32 %v1762, 7
    %v1764 = vsub.s32 0, %v1763
    %v1765 = vrot.slane %v1180, %v1764
    %v1766 = vlaneseq
    %v1767 = vshrl.u32 %v1766, 7
    %v1768 = vsub.s32 0, %v1767
    %v1769 = vrot.slane %v1163, %v1768
    %v1770 = vlaneseq
    %v1771 = vshrl.u32 %v1770, 7
    %v1772 = vsub.s32 0, %v1771
    %v1773 = vrot.slane %v1177, %v1772
    %v1774 = vlaneseq
    %v1775 = vshrl.u32 %v1774, 7
    %v1776 = vsub.s32 0, %v1775
    %v1777 = vrot.slane %v1179, %v1776
    %v1778 = vlaneseq
    %v1779 = vshrl.u32 %v1778, 7
    %v1780 = vsub.s32 0, %v1779
    %v1781 = vrot.slane %v1181, %v1780
    %v1822 = vadd.f32 %v1625, %v1188
    %v1823 = vadd.f32 %v1625, %v1192
    %v1824 = vadd.f32 %v1629, %v1199
    %v1825 = vadd.f32 %v1629, %v1203
    %v1826 = vadd.f32 %v1633, %v1210
    %v1827 = vadd.f32 %v1633, %v1214
    %v1828 = vadd.f32 %v1637, %v1221
    %v1829 = vadd.f32 %v1637, %v1225
    %v1830 = vadd.f32 %v1641, %v1232
    %v1831 = vadd.f32 %v1641, %v1236
    %v1832 = vadd.f32 %v1645, %v1243
    %v1833 = vadd.f32 %v1645, %v1247
    %v1834 = vadd.f32 %v1649, %v1254
    %v1835 = vadd.f32 %v1649, %v1258
    %v1836 = vadd.f32 %v1653, %v1265
    %v1837 = vadd.f32 %v1653, %v1269
    %v1838 = vadd.f32 %v1657, %v1276
    %v1839 = vadd.f32 %v1657, %v1280
    %v1840 = vadd.f32 %v1661, %v1287
    %v1841 = vadd.f32 %v1661, %v1291
    %v1842 = vadd.f32 %v1665, %v1298
    %v1843 = vadd.f32 %v1665, %v1302
    %v1844 = vadd.f32 %v1669, %v1309
    %v1845 = vadd.f32 %v1669, %v1313
    %v1846 = vadd.f32 %v1673, %v1320
    %v1847 = vadd.f32 %v1673, %v1324
    %v1848 = vadd.f32 %v1677, %v1331
    %v1849 = vadd.f32 %v1677, %v1335
    %v1850 = vadd.f32 %v1681, %v1342
    %v1851 = vadd.f32 %v1681, %v1346
    %v1852 = vadd.f32 %v1685, %v1353
    %v1853 = vadd.f32 %v1685, %v1357
    %v1854 = vadd.f32 %v1689, %v1364
    %v1855 = vadd.f32 %v1689, %v1368
    %v1856 = vadd.f32 %v1693, %v1375
    %v1857 = vadd.f32 %v1693, %v1379
    %v1858 = vadd.f32 %v1697, %v1386
    %v1859 = vadd.f32 %v1697, %v1390
    %v1860 = vadd.f32 %v1701, %v1397
    %v1861 = vadd.f32 %v1701, %v1401
    %v1862 = vadd.f32 %v1705, %v1408
    %v1863 = vadd.f32 %v1705, %v1412
    %v1864 = vadd.f32 %v1709, %v1419
    %v1865 = vadd.f32 %v1709, %v1423
    %v1866 = vadd.f32 %v1713, %v1430
    %v1867 = vadd.f32 %v1713, %v1434
    %v1868 = vadd.f32 %v1717, %v1441
    %v1869 = vadd.f32 %v1717, %v1445
    %v1870 = vadd.f32 %v1721, %v1452
    %v1871 = vadd.f32 %v1721, %v1456
    %v1872 = vadd.f32 %v1725, %v1463
    %v1873 = vadd.f32 %v1725, %v1467
    %v1874 = vadd.f32 %v1729, %v1474
    %v1875 = vadd.f32 %v1729, %v1478
    %v1876 = vadd.f32 %v1733, %v1485
    %v1877 = vadd.f32 %v1733, %v1489
    %v1878 = vadd.f32 %v1737, %v1496
    %v1879 = vadd.f32 %v1737, %v1500
    %v1880 = vadd.f32 %v1741, %v1507
    %v1881 = vadd.f32 %v1741, %v1511
    %v1882 = vadd.f32 %v1745, %v1518
    %v1883 = vadd.f32 %v1745, %v1522
    %v1884 = vadd.f32 %v1749, %v1529
    %v1885 = vadd.f32 %v1749, %v1533
    %v1886 = vadd.f32 %v1753, %v1540
    %v1887 = vadd.f32 %v1753, %v1544
    %v1888 = vadd.f32 %v1757, %v1551
    %v1889 = vadd.f32 %v1757, %v1555
    %v1890 = vadd.f32 %v1761, %v1562
    %v1891 = vadd.f32 %v1761, %v1566
    %v1892 = vadd.f32 %v1765, %v1573
    %v1893 = vadd.f32 %v1765, %v1577
    %v1894 = vadd.f32 %v1769, %v1584
    %v1895 = vadd.f32 %v1769, %v1588
    %v1896 = vadd.f32 %v1773, %v1595
    %v1897 = vadd.f32 %v1773, %v1599
    %v1898 = vadd.f32 %v1777, %v1606
    %v1899 = vadd.f32 %v1777, %v1610
    %v1900 = vadd.f32 %v1781, %v1617
    %v1901 = vadd.f32 %v1781, %v1621
    %v1902 = vsel %vm336, %v1822, -inf
    %v1903 = vsel %vm336, %v1824, -inf
    %v1904 = vsel %vm336, %v1826, -inf
    %v1905 = vmax.f32 %v1902, %v1904
    %v1906 = vsel %vm336, %v1828, -inf
    %v1907 = vmax.f32 %v1903, %v1906
    %v1908 = vsel %vm336, %v1830, -inf
    %v1909 = vmax.f32 %v1905, %v1908
    %v1910 = vsel %vm336, %v1832, -inf
    %v1911 = vmax.f32 %v1907, %v1910
    %v1912 = vsel %vm336, %v1834, -inf
    %v1913 = vmax.f32 %v1909, %v1912
    %v1914 = vsel %vm336, %v1836, -inf
    %v1915 = vmax.f32 %v1911, %v1914
    %v1916 = vsel %vm336, %v1838, -inf
    %v1917 = vmax.f32 %v1913, %v1916
    %v1918 = vsel %vm336, %v1840, -inf
    %v1919 = vmax.f32 %v1915, %v1918
    %v1920 = vsel %vm336, %v1842, -inf
    %v1921 = vmax.f32 %v1917, %v1920
    %v1922 = vsel %vm336, %v1844, -inf
    %v1923 = vmax.f32 %v1919, %v1922
    %v1924 = vsel %vm336, %v1846, -inf
    %v1925 = vmax.f32 %v1921, %v1924
    %v1926 = vsel %vm336, %v1848, -inf
    %v1927 = vmax.f32 %v1923, %v1926
    %v1928 = vsel %vm336, %v1850, -inf
    %v1929 = vmax.f32 %v1925, %v1928
    %v1930 = vsel %vm336, %v1852, -inf
    %v1931 = vmax.f32 %v1927, %v1930
    %v1932 = vsel %vm336, %v1854, -inf
    %v1933 = vmax.f32 %v1929, %v1932
    %v1934 = vsel %vm336, %v1856, -inf
    %v1935 = vmax.f32 %v1931, %v1934
    %v1936 = vsel %vm336, %v1858, -inf
    %v1937 = vmax.f32 %v1933, %v1936
    %v1938 = vsel %vm336, %v1860, -inf
    %v1939 = vmax.f32 %v1935, %v1938
    %v1940 = vsel %vm336, %v1862, -inf
    %v1941 = vmax.f32 %v1937, %v1940
    %v1942 = vsel %vm336, %v1864, -inf
    %v1943 = vmax.f32 %v1939, %v1942
    %v1944 = vsel %vm336, %v1866, -inf
    %v1945 = vmax.f32 %v1941, %v1944
    %v1946 = vsel %vm336, %v1868, -inf
    %v1947 = vmax.f32 %v1943, %v1946
    %v1948 = vsel %vm336, %v1870, -inf
    %v1949 = vmax.f32 %v1945, %v1948
    %v1950 = vsel %vm336, %v1872, -inf
    %v1951 = vmax.f32 %v1947, %v1950
    %v1952 = vsel %vm336, %v1874, -inf
    %v1953 = vmax.f32 %v1949, %v1952
    %v1954 = vsel %vm336, %v1876, -inf
    %v1955 = vmax.f32 %v1951, %v1954
    %v1956 = vsel %vm336, %v1878, -inf
    %v1957 = vmax.f32 %v1953, %v1956
    %v1958 = vsel %vm336, %v1880, -inf
    %v1959 = vmax.f32 %v1955, %v1958
    %v1960 = vsel %vm336, %v1882, -inf
    %v1961 = vmax.f32 %v1957, %v1960
    %v1962 = vsel %vm336, %v1884, -inf
    %v1963 = vmax.f32 %v1959, %v1962
    %v1964 = vsel %vm336, %v1886, -inf
    %v1965 = vmax.f32 %v1961, %v1964
    %v1966 = vsel %vm336, %v1888, -inf
    %v1967 = vmax.f32 %v1963, %v1966
    %v1968 = vsel %vm336, %v1890, -inf
    %v1969 = vmax.f32 %v1965, %v1968
    %v1970 = vsel %vm336, %v1892, -inf
    %v1971 = vmax.f32 %v1967, %v1970
    %v1972 = vsel %vm336, %v1894, -inf
    %v1973 = vmax.f32 %v1969, %v1972
    %v1974 = vsel %vm336, %v1896, -inf
    %v1975 = vmax.f32 %v1971, %v1974
    %v1976 = vsel %vm336, %v1898, -inf
    %v1977 = vmax.f32 %v1973, %v1976
    %v1978 = vsel %vm336, %v1900, -inf
    %v1979 = vmax.f32 %v1975, %v1978
    %v1980 = vmax.f32 %v1977, %v1979
    %v1981 = vsel %vm336, %v1823, -inf
    %v1982 = vsel %vm336, %v1825, -inf
    %v1983 = vsel %vm336, %v1827, -inf
    %v1984 = vmax.f32 %v1981, %v1983
    %v1985 = vsel %vm336, %v1829, -inf
    %v1986 = vmax.f32 %v1982, %v1985
    %v1987 = vsel %vm336, %v1831, -inf
    %v1988 = vmax.f32 %v1984, %v1987
    %v1989 = vsel %vm336, %v1833, -inf
    %v1990 = vmax.f32 %v1986, %v1989
    %v1991 = vsel %vm336, %v1835, -inf
    %v1992 = vmax.f32 %v1988, %v1991
    %v1993 = vsel %vm336, %v1837, -inf
    %v1994 = vmax.f32 %v1990, %v1993
    %v1995 = vsel %vm336, %v1839, -inf
    %v1996 = vmax.f32 %v1992, %v1995
    %v1997 = vsel %vm336, %v1841, -inf
    %v1998 = vmax.f32 %v1994, %v1997
    %v1999 = vsel %vm336, %v1843, -inf
    %v2000 = vmax.f32 %v1996, %v1999
    %v2001 = vsel %vm336, %v1845, -inf
    %v2002 = vmax.f32 %v1998, %v2001
    %v2003 = vsel %vm336, %v1847, -inf
    %v2004 = vmax.f32 %v2000, %v2003
    %v2005 = vsel %vm336, %v1849, -inf
    %v2006 = vmax.f32 %v2002, %v2005
    %v2007 = vsel %vm336, %v1851, -inf
    %v2008 = vmax.f32 %v2004, %v2007
    %v2009 = vsel %vm336, %v1853, -inf
    %v2010 = vmax.f32 %v2006, %v2009
    %v2011 = vsel %vm336, %v1855, -inf
    %v2012 = vmax.f32 %v2008, %v2011
    %v2013 = vsel %vm336, %v1857, -inf
    %v2014 = vmax.f32 %v2010, %v2013
    %v2015 = vsel %vm336, %v1859, -inf
    %v2016 = vmax.f32 %v2012, %v2015
    %v2017 = vsel %vm336, %v1861, -inf
    %v2018 = vmax.f32 %v2014, %v2017
    %v2019 = vsel %vm336, %v1863, -inf
    %v2020 = vmax.f32 %v2016, %v2019
    %v2021 = vsel %vm336, %v1865, -inf
    %v2022 = vmax.f32 %v2018, %v2021
    %v2023 = vsel %vm336, %v1867, -inf
    %v2024 = vmax.f32 %v2020, %v2023
    %v2025 = vsel %vm336, %v1869, -inf
    %v2026 = vmax.f32 %v2022, %v2025
    %v2027 = vsel %vm336, %v1871, -inf
    %v2028 = vmax.f32 %v2024, %v2027
    %v2029 = vsel %vm336, %v1873, -inf
    %v2030 = vmax.f32 %v2026, %v2029
    %v2031 = vsel %vm336, %v1875, -inf
    %v2032 = vmax.f32 %v2028, %v2031
    %v2033 = vsel %vm336, %v1877, -inf
    %v2034 = vmax.f32 %v2030, %v2033
    %v2035 = vsel %vm336, %v1879, -inf
    %v2036 = vmax.f32 %v2032, %v2035
    %v2037 = vsel %vm336, %v1881, -inf
    %v2038 = vmax.f32 %v2034, %v2037
    %v2039 = vsel %vm336, %v1883, -inf
    %v2040 = vmax.f32 %v2036, %v2039
    %v2041 = vsel %vm336, %v1885, -inf
    %v2042 = vmax.f32 %v2038, %v2041
    %v2043 = vsel %vm336, %v1887, -inf
    %v2044 = vmax.f32 %v2040, %v2043
    %v2045 = vsel %vm336, %v1889, -inf
    %v2046 = vmax.f32 %v2042, %v2045
    %v2047 = vsel %vm336, %v1891, -inf
    %v2048 = vmax.f32 %v2044, %v2047
    %v2049 = vsel %vm336, %v1893, -inf
    %v2050 = vmax.f32 %v2046, %v2049
    %v2051 = vsel %vm336, %v1895, -inf
    %v2052 = vmax.f32 %v2048, %v2051
    %v2053 = vsel %vm336, %v1897, -inf
    %v2054 = vmax.f32 %v2050, %v2053
    %v2055 = vsel %vm336, %v1899, -inf
    %v2056 = vmax.f32 %v2052, %v2055
    %v2057 = vsel %vm336, %v1901, -inf
    %v2058 = vmax.f32 %v2054, %v2057
    %v2059 = vmax.f32 %v2056, %v2058
    %vm2060 = vcmp.eq.f32.partialorder %v1980, -inf
    %vm2061 = vcmp.eq.f32.partialorder %v2059, -inf
    %v2062 = vsel %vm2060, 0.0, %v1980
    %v2063 = vsel %vm2061, 0.0, %v2059
    %v2064 = vld [vmem:[%s19] sm:$0x1]
    %v2065 = vpack.c.bf16 %v2063, %v2062
    %v2066 = vld [vmem:[%s17] sm:$0xf]
    %v2067 = vld [vmem:[%s17 + $0x4] sm:$0xf]
    %v2068 = vld [vmem:[%s17 + $0x8] sm:$0xf]
    %v2069 = vld [vmem:[%s17 + $0xc] sm:$0xf]
    %v2074 = vunpack.c.l.b16 %v2066
    %v2075 = vunpack.c.l.b16 %v2067
    %v2076 = vunpack.c.l.b16 %v2068
    %v2077 = vunpack.c.l.b16 %v2069
    %v2078 = vpack.c.b16 %v2075, %v2074
    %v2079 = vpack.c.b16 %v2077, %v2076
    %v2083 = vsel %vm336, %v2065, 0
    %2085 = vmatprep.subr.bf16.mxu0 0
    %2086 = vmatpush1.bf16.msra.mxu0 %v2078
    %2087 = vmatprep.subr.bf16.mxu0 0
    %2088 = vmatpush1.bf16.msra.mxu0 %v2079
    %2089 = vmatprep.subr.bf16.mxu0 0
    %2090 = vmatpush1.bf16.msra.mxu0 0
    %2091 = vmatprep.subr.bf16.mxu0 0
    %2092 = vmatpush1.bf16.msra.mxu0 0
    %2093 = vmatprep.subr.bf16.mxu0 0
    %2094 = vmatpush1.bf16.msra.mxu0 0
    %2095 = vmatprep.subr.bf16.mxu0 0
    %2096 = vmatpush1.bf16.msra.mxu0 0
    %2097 = vmatprep.subr.bf16.mxu0 0
    %2098 = vmatpush1.bf16.msra.mxu0 0
    %2099 = vmatprep.subr.bf16.mxu0 0
    %2100 = vmatpush1.bf16.msra.mxu0 0
    %2101 = vmatprep.subr.bf16.mxu0 0
    %2102 = vmatpush1.bf16.msra.mxu0 0
    %2103 = vmatprep.subr.bf16.mxu0 0
    %2104 = vmatpush1.bf16.msra.mxu0 0
    %2105 = vmatprep.subr.bf16.mxu0 0
    %2106 = vmatpush1.bf16.msra.mxu0 0
    %2107 = vmatprep.subr.bf16.mxu0 0
    %2108 = vmatpush1.bf16.msra.mxu0 0
    %2109 = vmatprep.subr.bf16.mxu0 0
    %2110 = vmatpush1.bf16.msra.mxu0 0
    %2111 = vmatprep.subr.bf16.mxu0 0
    %2112 = vmatpush1.bf16.msra.mxu0 0
    %2113 = vmatprep.subr.bf16.mxu0 0
    %2114 = vmatpush1.bf16.msra.mxu0 0
    %2115 = vmatprep.subr.bf16.mxu0 0
    %2116 = vmatpush1.bf16.msra.mxu0 0
    %2117 = vmatprep.mubr.bf16.mxu0 0
    %2118 = vmatmul.mubr.bf16.gmra.mrb[0].mxu0 %v2083
    %v2119 = vpop.f32.mrb[0].mxu0
    %v2120 = vadd.f32 0.0, %v2119
    %v2121 = vpop.f32.mrb[0].mxu0
    %v2122 = vpop.f32.mrb[0].mxu0
    %v2123 = vadd.f32 0.0, %v2122
    %v2124 = vpop.f32.mrb[0].mxu0
    %2125 = vdwg.mxu0
    %v2127 = vlaneseq
    %v2128 = vshrl.u32 %v2127, 7
    %v2129 = vsub.s32 0, %v2128
    %v2130 = vrot.slane %v2064, %v2129
    %v2132 = vadd.f32 %v2130, %v2120
    %v2133 = vadd.f32 %v2130, %v2123
    %v2134 = vpack.c.bf16 %v211, %v210
    %v2135 = vld [vmem:[#allocation17] sm:$0xf]
    %v2136 = vld [vmem:[#allocation17 + $0x4] sm:$0xf]
    %v2137 = vld [vmem:[#allocation17 + $0x8] sm:$0xf]
    %v2138 = vld [vmem:[#allocation17 + $0xc] sm:$0xf]
    %v2143 = vunpack.c.l.b16 %v2135
    %v2144 = vunpack.c.l.b16 %v2136
    %v2145 = vunpack.c.l.b16 %v2137
    %v2146 = vunpack.c.l.b16 %v2138
    %v2147 = vpack.c.b16 %v2144, %v2143
    %v2148 = vpack.c.b16 %v2146, %v2145
    %v2152 = vsel %vm336, %v2134, 0
    %2154 = vmatprep.subr.bf16.mxu0 0
    %2155 = vmatpush1.bf16.msra.mxu0 %v2147
    %2156 = vmatprep.subr.bf16.mxu0 0
    %2157 = vmatpush1.bf16.msra.mxu0 %v2148
    %2158 = vmatprep.subr.bf16.mxu0 0
    %2159 = vmatpush1.bf16.msra.mxu0 0
    %2160 = vmatprep.subr.bf16.mxu0 0
    %2161 = vmatpush1.bf16.msra.mxu0 0
    %2162 = vmatprep.subr.bf16.mxu0 0
    %2163 = vmatpush1.bf16.msra.mxu0 0
    %2164 = vmatprep.subr.bf16.mxu0 0
    %2165 = vmatpush1.bf16.msra.mxu0 0
    %2166 = vmatprep.subr.bf16.mxu0 0
    %2167 = vmatpush1.bf16.msra.mxu0 0
    %2168 = vmatprep.subr.bf16.mxu0 0
    %2169 = vmatpush1.bf16.msra.mxu0 0
    %2170 = vmatprep.subr.bf16.mxu0 0
    %2171 = vmatpush1.bf16.msra.mxu0 0
    %2172 = vmatprep.subr.bf16.mxu0 0
    %2173 = vmatpush1.bf16.msra.mxu0 0
    %2174 = vmatprep.subr.bf16.mxu0 0
    %2175 = vmatpush1.bf16.msra.mxu0 0
    %2176 = vmatprep.subr.bf16.mxu0 0
    %2177 = vmatpush1.bf16.msra.mxu0 0
    %2178 = vmatprep.subr.bf16.mxu0 0
    %2179 = vmatpush1.bf16.msra.mxu0 0
    %2180 = vmatprep.subr.bf16.mxu0 0
    %2181 = vmatpush1.bf16.msra.mxu0 0
    %2182 = vmatprep.subr.bf16.mxu0 0
    %2183 = vmatpush1.bf16.msra.mxu0 0
    %2184 = vmatprep.subr.bf16.mxu0 0
    %2185 = vmatpush1.bf16.msra.mxu0 0
    %2186 = vmatprep.mubr.bf16.mxu0 0
    %2187 = vmatmul.mubr.bf16.gmra.mrb[0].mxu0 %v2152
    %v2188 = vpop.f32.mrb[0].mxu0
    %v2189 = vadd.f32 0.0, %v2188
    %v2190 = vpop.f32.mrb[0].mxu0
    %v2191 = vpop.f32.mrb[0].mxu0
    %v2192 = vadd.f32 0.0, %v2191
    %v2193 = vpop.f32.mrb[0].mxu0
    %2194 = vdwg.mxu0
    %v2195 = vadd.f32 %v2132, %v2189
    %v2196 = vadd.f32 %v2133, %v2192
    %v2197 = vmin.f32 %v2195, 20.0
    %v2198 = vmin.f32 %v2196, 20.0
    %v2199 = vmul.f32 %v2197, 1.442695
    %v2200 = vpow.pop %v2199
    %v2201 = vmul.f32 %v2198, 1.442695
    %v2202 = vpow.pop %v2201
    %v2203 = vadd.f32 %v2200, 1.0
    %v2204 = vadd.f32 %v2202, 1.0
    %v2205 = vmul.f32 %v2203, %v2203
    %v2206 = vmul.f32 %v2204, %v2204
    %v2207 = vsub.f32 %v2205, 1.0
    %v2208 = vsub.f32 %v2206, 1.0
    %v2209 = vmul.f32 %v2195, %v2207
    %v2210 = vmul.f32 %v2196, %v2208
    %v2211 = vadd.f32 %v2205, 1.0
    %v2212 = vadd.f32 %v2206, 1.0
    %v2213 = vrcp.pop %v2211
    %v2214 = vrcp.pop %v2212
    %v2215 = vmul.f32 %v2209, %v2213
    %v2216 = vmul.f32 %v2210, %v2214
    %v2217 = vpack.c.bf16 %v2216, %v2215
    %v2218 = vld [vmem:[%s20] sm:$0xf]
    %v2219 = vld [vmem:[%s20 + $0x4] sm:$0xf]
    %v2220 = vld [vmem:[%s20 + $0x8] sm:$0xf]
    %v2221 = vld [vmem:[%s20 + $0xc] sm:$0xf]
    %v2222 = vld [vmem:[%s20 + $0x10] sm:$0xf]
    %v2223 = vld [vmem:[%s20 + $0x14] sm:$0xf]
    %v2224 = vld [vmem:[%s20 + $0x18] sm:$0xf]
    %v2225 = vld [vmem:[%s20 + $0x1c] sm:$0xf]
    %v2226 = vld [vmem:[%s21] sm:$0x1]
    %v2228 = vlaneseq
    %v2229 = vshrl.u32 %v2228, 7
    %v2230 = vsub.s32 0, %v2229
    %v2231 = vrot.slane %v2226, %v2230
    %v2241 = vunpack.c.l.b16 %v2218
    %v2242 = vunpack.c.l.b16 %v2219
    %v2243 = vunpack.c.l.b16 %v2220
    %v2244 = vunpack.c.l.b16 %v2221
    %v2245 = vunpack.c.l.b16 %v2222
    %v2246 = vunpack.c.l.b16 %v2223
    %v2247 = vunpack.c.l.b16 %v2224
    %v2248 = vunpack.c.l.b16 %v2225
    %v2249 = vpack.c.b16 %v2242, %v2241
    %v2250 = vpack.c.b16 %v2244, %v2243
    %v2251 = vpack.c.b16 %v2246, %v2245
    %v2252 = vpack.c.b16 %v2248, %v2247
    %v2258 = vsel %vm645, %v2217, 0
    %2260 = vmatprep.subr.bf16.mxu0 0
    %2261 = vmatpush1.bf16.msra.mxu0 %v2249
    %2262 = vmatprep.subr.bf16.mxu0 0
    %2263 = vmatpush1.bf16.msra.mxu0 %v2250
    %2264 = vmatprep.subr.bf16.mxu0 0
    %2265 = vmatpush1.bf16.msra.mxu0 %v2251
    %2266 = vmatprep.subr.bf16.mxu0 0
    %2267 = vmatpush1.bf16.msra.mxu0 %v2252
    %2268 = vmatprep.subr.bf16.mxu0 0
    %2269 = vmatpush1.bf16.msra.mxu0 0
    %2270 = vmatprep.subr.bf16.mxu0 0
    %2271 = vmatpush1.bf16.msra.mxu0 0
    %2272 = vmatprep.subr.bf16.mxu0 0
    %2273 = vmatpush1.bf16.msra.mxu0 0
    %2274 = vmatprep.subr.bf16.mxu0 0
    %2275 = vmatpush1.bf16.msra.mxu0 0
    %2276 = vmatprep.subr.bf16.mxu0 0
    %2277 = vmatpush1.bf16.msra.mxu0 0
    %2278 = vmatprep.subr.bf16.mxu0 0
    %2279 = vmatpush1.bf16.msra.mxu0 0
    %2280 = vmatprep.subr.bf16.mxu0 0
    %2281 = vmatpush1.bf16.msra.mxu0 0
    %2282 = vmatprep.subr.bf16.mxu0 0
    %2283 = vmatpush1.bf16.msra.mxu0 0
    %2284 = vmatprep.subr.bf16.mxu0 0
    %2285 = vmatpush1.bf16.msra.mxu0 0
    %2286 = vmatprep.subr.bf16.mxu0 0
    %2287 = vmatpush1.bf16.msra.mxu0 0
    %2288 = vmatprep.subr.bf16.mxu0 0
    %2289 = vmatpush1.bf16.msra.mxu0 0
    %2290 = vmatprep.subr.bf16.mxu0 0
    %2291 = vmatpush1.bf16.msra.mxu0 0
    %2292 = vmatprep.mubr.bf16.mxu0 0
    %2293 = vmatmul.mubr.bf16.gmra.mrb[0].mxu0 %v2258
    %v2294 = vpop.f32.mrb[0].mxu0
    %v2295 = vadd.f32 %v2231, %v2294
    %v2296 = vpop.f32.mrb[0].mxu0
    %v2297 = vpop.f32.mrb[0].mxu0
    %v2298 = vadd.f32 %v2231, %v2297
    %v2299 = vpop.f32.mrb[0].mxu0
    %2300 = vdwg.mxu0
    %v2301 = vadd.f32 %v210, %v2295
    %v2302 = vadd.f32 %v211, %v2298
    %2303 = vmatprep.subr.mxu0 0.0
    %2304 = vmatpush1.msra.mxu0 %v2301
    %2305 = vmatprep.subr.mxu0 0.0
    %2306 = vmatpush1.msra.mxu0 %v2302
    %2307 = vmatprep.subr.mxu0 0.0
    %2308 = vmatpush1.msra.mxu0 0.0
    %2309 = vmatprep.subr.mxu0 0.0
    %2310 = vmatpush1.msra.mxu0 0.0
    %2311 = vmatprep.subr.mxu0 0.0
    %2312 = vmatpush1.msra.mxu0 0.0
    %2313 = vmatprep.subr.mxu0 0.0
    %2314 = vmatpush1.msra.mxu0 0.0
    %2315 = vmatprep.subr.mxu0 0.0
    %2316 = vmatpush1.msra.mxu0 0.0
    %2317 = vmatprep.subr.mxu0 0.0
    %2318 = vmatpush1.msra.mxu0 0.0
    %2319 = vmatprep.subr.mxu0 0.0
    %2320 = vmatpush1.msra.mxu0 0.0
    %2321 = vmatprep.subr.mxu0 0.0
    %2322 = vmatpush1.msra.mxu0 0.0
    %2323 = vmatprep.subr.mxu0 0.0
    %2324 = vmatpush1.msra.mxu0 0.0
    %2325 = vmatprep.subr.mxu0 0.0
    %2326 = vmatpush1.msra.mxu0 0.0
    %2327 = vmatprep.subr.mxu0 0.0
    %2328 = vmatpush1.msra.mxu0 0.0
    %2329 = vmatprep.subr.mxu0 0.0
    %2330 = vmatpush1.msra.mxu0 0.0
    %2331 = vmatprep.subr.mxu0 0.0
    %2332 = vmatpush1.msra.mxu0 0.0
    %2333 = vmatprep.subr.mxu0 0.0
    %2334 = vmatpush1.msra.mxu0 0.0
    %2335 = vmatprep.subr.mxu0 0.0
    %2336 = vmatpush1.msra.mxu0 0.0
    %2337 = vmatprep.subr.mxu0 0.0
    %2338 = vmatpush1.msra.mxu0 0.0
    %2339 = vmatprep.subr.mxu0 0.0
    %2340 = vmatpush1.msra.mxu0 0.0
    %2341 = vmatprep.subr.mxu0 0.0
    %2342 = vmatpush1.msra.mxu0 0.0
    %2343 = vmatprep.subr.mxu0 0.0
    %2344 = vmatpush1.msra.mxu0 0.0
    %2345 = vmatprep.subr.mxu0 0.0
    %2346 = vmatpush1.msra.mxu0 0.0
    %2347 = vmatprep.subr.mxu0 0.0
    %2348 = vmatpush1.msra.mxu0 0.0
    %2349 = vmatprep.subr.mxu0 0.0
    %2350 = vmatpush1.msra.mxu0 0.0
    %2351 = vmatprep.subr.mxu0 0.0
    %2352 = vmatpush1.msra.mxu0 0.0
    %2353 = vmatprep.subr.mxu0 0.0
    %2354 = vmatpush1.msra.mxu0 0.0
    %2355 = vmatprep.subr.mxu0 0.0
    %2356 = vmatpush1.msra.mxu0 0.0
    %2357 = vmatprep.subr.mxu0 0.0
    %2358 = vmatpush1.msra.mxu0 0.0
    %2359 = vmatprep.subr.mxu0 0.0
    %2360 = vmatpush1.msra.mxu0 0.0
    %2361 = vmatprep.subr.mxu0 0.0
    %2362 = vmatpush1.msra.mxu0 0.0
    %2363 = vmatprep.subr.mxu0 0.0
    %2364 = vmatpush1.msra.mxu0 0.0
    %2365 = vmatprep.subr.mxu0 0.0
    %2366 = vmatpush1.msra.mxu0 0.0
    %2367 = vmatprep.mubr.f32.mxu0 0.0
    %2368 = vmatmul.mubr.f32.gmra.mrb[0].mxu0 %v214
    %v2369 = vpop.f32.mrb[0].mxu0
    %v2370 = vadd.f32 0.0, %v2369
    %v2371 = vpop.f32.mrb[0].mxu0
    %2372 = vmatprep.mubr.f32.mxu0 0.0
    %2373 = vmatmul.mubr.f32.gmra.mrb[0].mxu0 %v217
    %v2374 = vpop.f32.mrb[0].mxu0
    %v2375 = vadd.f32 0.0, %v2374
    %v2376 = vpop.f32.mrb[0].mxu0
    %2377 = vmatprep.mubr.f32.mxu0 0.0
    %2378 = vmatmul.mubr.f32.gmra.mrb[0].mxu0 %v220
    %v2379 = vpop.f32.mrb[0].mxu0
    %v2380 = vadd.f32 0.0, %v2379
    %v2381 = vpop.f32.mrb[0].mxu0
    %2382 = vmatprep.mubr.f32.mxu0 0.0
    %2383 = vmatmul.mubr.f32.gmra.mrb[0].mxu0 %v223
    %v2384 = vpop.f32.mrb[0].mxu0
    %v2385 = vadd.f32 0.0, %v2384
    %v2386 = vpop.f32.mrb[0].mxu0
    %2387 = vmatprep.mubr.f32.mxu0 0.0
    %2388 = vmatmul.mubr.f32.gmra.mrb[0].mxu0 %v226
    %v2389 = vpop.f32.mrb[0].mxu0
    %v2390 = vadd.f32 0.0, %v2389
    %v2391 = vpop.f32.mrb[0].mxu0
    %2392 = vdwg.mxu0
    %v2393 = vld [vmem:[#allocation6] sm:$0x1]
    %v2394 = vpack.c.bf16 %v2370, %v2370
    %v2395 = vld [vmem:[%s3] sm:$0xf]
    %v2396 = vld [vmem:[%s3 + $0x4] sm:$0xf]
    %v2397 = vld [vmem:[%s3 + $0x8] sm:$0xf]
    %v2398 = vld [vmem:[%s3 + $0xc] sm:$0xf]
    %v2403 = vunpack.c.l.b16 %v2395
    %v2404 = vunpack.c.l.b16 %v2396
    %v2405 = vunpack.c.l.b16 %v2397
    %v2406 = vunpack.c.l.b16 %v2398
    %v2407 = vpack.c.b16 %v2404, %v2403
    %v2408 = vpack.c.b16 %v2406, %v2405
    %v2412 = vsel %vm336, %v2394, 0
    %2414 = vmatprep.subr.bf16.mxu0 0
    %2415 = vmatpush1.bf16.msra.mxu0 %v2407
    %2416 = vmatprep.subr.bf16.mxu0 0
    %2417 = vmatpush1.bf16.msra.mxu0 %v2408
    %2418 = vmatprep.subr.bf16.mxu0 0
    %2419 = vmatpush1.bf16.msra.mxu0 0
    %2420 = vmatprep.subr.bf16.mxu0 0
    %2421 = vmatpush1.bf16.msra.mxu0 0
    %2422 = vmatprep.subr.bf16.mxu0 0
    %2423 = vmatpush1.bf16.msra.mxu0 0
    %2424 = vmatprep.subr.bf16.mxu0 0
    %2425 = vmatpush1.bf16.msra.mxu0 0
    %2426 = vmatprep.subr.bf16.mxu0 0
    %2427 = vmatpush1.bf16.msra.mxu0 0
    %2428 = vmatprep.subr.bf16.mxu0 0
    %2429 = vmatpush1.bf16.msra.mxu0 0
    %2430 = vmatprep.subr.bf16.mxu0 0
    %2431 = vmatpush1.bf16.msra.mxu0 0
    %2432 = vmatprep.subr.bf16.mxu0 0
    %2433 = vmatpush1.bf16.msra.mxu0 0
    %2434 = vmatprep.subr.bf16.mxu0 0
    %2435 = vmatpush1.bf16.msra.mxu0 0
    %2436 = vmatprep.subr.bf16.mxu0 0
    %2437 = vmatpush1.bf16.msra.mxu0 0
    %2438 = vmatprep.subr.bf16.mxu0 0
    %2439 = vmatpush1.bf16.msra.mxu0 0
    %2440 = vmatprep.subr.bf16.mxu0 0
    %2441 = vmatpush1.bf16.msra.mxu0 0
    %2442 = vmatprep.subr.bf16.mxu0 0
    %2443 = vmatpush1.bf16.msra.mxu0 0
    %2444 = vmatprep.subr.bf16.mxu0 0
    %2445 = vmatpush1.bf16.msra.mxu0 0
    %2446 = vmatprep.mubr.bf16.mxu0 0
    %2447 = vmatmul.mubr.bf16.gmra.mrb[0].mxu0 %v2412
    %v2448 = vpop.f32.mrb[0].mxu0
    %v2449 = vadd.f32 0.0, %v2448
    %v2450 = vpop.f32.mrb[0].mxu0
    %v2451 = vpop.f32.mrb[0].mxu0
    %v2452 = vpop.f32.mrb[0].mxu0
    %2453 = vdwg.mxu0
    %v2455 = vlaneseq
    %v2456 = vshrl.u32 %v2455, 7
    %v2457 = vsub.s32 0, %v2456
    %v2458 = vrot.slane %v2393, %v2457
    %v2460 = vadd.f32 %v2458, %v2449
    %v2461 = vmin.f32 %v2460, 20.0
    %v2462 = vmul.f32 %v2461, 1.442695
    %v2463 = vpow.pop %v2462
    %v2464 = vadd.f32 %v2463, 1.0
    %v2465 = vmul.f32 %v2464, %v2464
    %v2466 = vsub.f32 %v2465, 1.0
    %v2467 = vmul.f32 %v2460, %v2466
    %v2468 = vadd.f32 %v2465, 1.0
    %v2469 = vrcp.pop %v2468
    %v2470 = vmul.f32 %v2467, %v2469
    %v2471 = vpack.c.bf16 %v2470, %v2470
    %v2472 = vld [vmem:[%s5] sm:$0xf]
    %v2473 = vld [vmem:[%s5 + $0x4] sm:$0xf]
    %v2474 = vld [vmem:[%s5 + $0x8] sm:$0xf]
    %v2475 = vld [vmem:[%s5 + $0xc] sm:$0xf]
    %v2476 = vld [vmem:[#allocation8] sm:$0x1]
    %v2478 = vlaneseq
    %v2479 = vshrl.u32 %v2478, 7
    %v2480 = vsub.s32 0, %v2479
    %v2481 = vrot.slane %v2476, %v2480
    %v2487 = vunpack.c.l.b16 %v2472
    %v2488 = vunpack.c.l.b16 %v2473
    %v2489 = vunpack.c.l.b16 %v2474
    %v2490 = vunpack.c.l.b16 %v2475
    %v2491 = vpack.c.b16 %v2488, %v2487
    %v2492 = vpack.c.b16 %v2490, %v2489
    %v2496 = vsel %vm336, %v2471, 0
    %2498 = vmatprep.subr.bf16.mxu0 0
    %2499 = vmatpush1.bf16.msra.mxu0 %v2491
    %2500 = vmatprep.subr.bf16.mxu0 0
    %2501 = vmatpush1.bf16.msra.mxu0 %v2492
    %2502 = vmatprep.subr.bf16.mxu0 0
    %2503 = vmatpush1.bf16.msra.mxu0 0
    %2504 = vmatprep.subr.bf16.mxu0 0
    %2505 = vmatpush1.bf16.msra.mxu0 0
    %2506 = vmatprep.subr.bf16.mxu0 0
    %2507 = vmatpush1.bf16.msra.mxu0 0
    %2508 = vmatprep.subr.bf16.mxu0 0
    %2509 = vmatpush1.bf16.msra.mxu0 0
    %2510 = vmatprep.subr.bf16.mxu0 0
    %2511 = vmatpush1.bf16.msra.mxu0 0
    %2512 = vmatprep.subr.bf16.mxu0 0
    %2513 = vmatpush1.bf16.msra.mxu0 0
    %2514 = vmatprep.subr.bf16.mxu0 0
    %2515 = vmatpush1.bf16.msra.mxu0 0
    %2516 = vmatprep.subr.bf16.mxu0 0
    %2517 = vmatpush1.bf16.msra.mxu0 0
    %2518 = vmatprep.subr.bf16.mxu0 0
    %2519 = vmatpush1.bf16.msra.mxu0 0
    %2520 = vmatprep.subr.bf16.mxu0 0
    %2521 = vmatpush1.bf16.msra.mxu0 0
    %2522 = vmatprep.subr.bf16.mxu0 0
    %2523 = vmatpush1.bf16.msra.mxu0 0
    %2524 = vmatprep.subr.bf16.mxu0 0
    %2525 = vmatpush1.bf16.msra.mxu0 0
    %2526 = vmatprep.subr.bf16.mxu0 0
    %2527 = vmatpush1.bf16.msra.mxu0 0
    %2528 = vmatprep.subr.bf16.mxu0 0
    %2529 = vmatpush1.bf16.msra.mxu0 0
    %2530 = vmatprep.mubr.bf16.mxu0 0
    %2531 = vmatmul.mubr.bf16.gmra.mrb[0].mxu0 %v2496
    %v2532 = vpop.f32.mrb[0].mxu0
    %v2533 = vadd.f32 %v2481, %v2532
    %v2534 = vpop.f32.mrb[0].mxu0
    %v2535 = vpop.f32.mrb[0].mxu0
    %v2536 = vpop.f32.mrb[0].mxu0
    %2537 = vdwg.mxu0
    %v2538 = vadd.f32 %v2370, %v2533
    %2539 = vst.msk [vmem:[#allocation2] sm:$0xff] %vm336, %v2538
    %v2540 = vld [vmem:[#allocation11] sm:$0x1]
    %v2541 = vpack.c.bf16 %v2375, %v2375
    %v2542 = vld [vmem:[%s7] sm:$0xf]
    %v2543 = vld [vmem:[%s7 + $0x4] sm:$0xf]
    %v2544 = vld [vmem:[%s7 + $0x8] sm:$0xf]
    %v2545 = vld [vmem:[%s7 + $0xc] sm:$0xf]
    %v2550 = vunpack.c.l.b16 %v2542
    %v2551 = vunpack.c.l.b16 %v2543
    %v2552 = vunpack.c.l.b16 %v2544
    %v2553 = vunpack.c.l.b16 %v2545
    %v2554 = vpack.c.b16 %v2551, %v2550
    %v2555 = vpack.c.b16 %v2553, %v2552
    %v2559 = vsel %vm336, %v2541, 0
    %2561 = vmatprep.subr.bf16.mxu0 0
    %2562 = vmatpush1.bf16.msra.mxu0 %v2554
    %2563 = vmatprep.subr.bf16.mxu0 0
    %2564 = vmatpush1.bf16.msra.mxu0 %v2555
    %2565 = vmatprep.subr.bf16.mxu0 0
    %2566 = vmatpush1.bf16.msra.mxu0 0
    %2567 = vmatprep.subr.bf16.mxu0 0
    %2568 = vmatpush1.bf16.msra.mxu0 0
    %2569 = vmatprep.subr.bf16.mxu0 0
    %2570 = vmatpush1.bf16.msra.mxu0 0
    %2571 = vmatprep.subr.bf16.mxu0 0
    %2572 = vmatpush1.bf16.msra.mxu0 0
    %2573 = vmatprep.subr.bf16.mxu0 0
    %2574 = vmatpush1.bf16.msra.mxu0 0
    %2575 = vmatprep.subr.bf16.mxu0 0
    %2576 = vmatpush1.bf16.msra.mxu0 0
    %2577 = vmatprep.subr.bf16.mxu0 0
    %2578 = vmatpush1.bf16.msra.mxu0 0
    %2579 = vmatprep.subr.bf16.mxu0 0
    %2580 = vmatpush1.bf16.msra.mxu0 0
    %2581 = vmatprep.subr.bf16.mxu0 0
    %2582 = vmatpush1.bf16.msra.mxu0 0
    %2583 = vmatprep.subr.bf16.mxu0 0
    %2584 = vmatpush1.bf16.msra.mxu0 0
    %2585 = vmatprep.subr.bf16.mxu0 0
    %2586 = vmatpush1.bf16.msra.mxu0 0
    %2587 = vmatprep.subr.bf16.mxu0 0
    %2588 = vmatpush1.bf16.msra.mxu0 0
    %2589 = vmatprep.subr.bf16.mxu0 0
    %2590 = vmatpush1.bf16.msra.mxu0 0
    %2591 = vmatprep.subr.bf16.mxu0 0
    %2592 = vmatpush1.bf16.msra.mxu0 0
    %2593 = vmatprep.mubr.bf16.mxu0 0
    %2594 = vmatmul.mubr.bf16.gmra.mrb[0].mxu0 %v2559
    %v2595 = vpop.f32.mrb[0].mxu0
    %v2596 = vadd.f32 0.0, %v2595
    %v2597 = vpop.f32.mrb[0].mxu0
    %v2598 = vpop.f32.mrb[0].mxu0
    %v2599 = vpop.f32.mrb[0].mxu0
    %2600 = vdwg.mxu0
    %v2602 = vlaneseq
    %v2603 = vshrl.u32 %v2602, 7
    %v2604 = vsub.s32 0, %v2603
    %v2605 = vrot.slane %v2540, %v2604
    %v2607 = vadd.f32 %v2605, %v2596
    %v2608 = vpack.c.bf16 %v2380, %v2380
    %v2609 = vld [vmem:[#allocation9] sm:$0xf]
    %v2610 = vld [vmem:[#allocation9 + $0x4] sm:$0xf]
    %v2611 = vld [vmem:[#allocation9 + $0x8] sm:$0xf]
    %v2612 = vld [vmem:[#allocation9 + $0xc] sm:$0xf]
    %v2617 = vunpack.c.l.b16 %v2609
    %v2618 = vunpack.c.l.b16 %v2610
    %v2619 = vunpack.c.l.b16 %v2611
    %v2620 = vunpack.c.l.b16 %v2612
    %v2621 = vpack.c.b16 %v2618, %v2617
    %v2622 = vpack.c.b16 %v2620, %v2619
    %v2626 = vsel %vm336, %v2608, 0
    %2628 = vmatprep.subr.bf16.mxu0 0
    %2629 = vmatpush1.bf16.msra.mxu0 %v2621
    %2630 = vmatprep.subr.bf16.mxu0 0
    %2631 = vmatpush1.bf16.msra.mxu0 %v2622
    %2632 = vmatprep.subr.bf16.mxu0 0
    %2633 = vmatpush1.bf16.msra.mxu0 0
    %2634 = vmatprep.subr.bf16.mxu0 0
    %2635 = vmatpush1.bf16.msra.mxu0 0
    %2636 = vmatprep.subr.bf16.mxu0 0
    %2637 = vmatpush1.bf16.msra.mxu0 0
    %2638 = vmatprep.subr.bf16.mxu0 0
    %2639 = vmatpush1.bf16.msra.mxu0 0
    %2640 = vmatprep.subr.bf16.mxu0 0
    %2641 = vmatpush1.bf16.msra.mxu0 0
    %2642 = vmatprep.subr.bf16.mxu0 0
    %2643 = vmatpush1.bf16.msra.mxu0 0
    %2644 = vmatprep.subr.bf16.mxu0 0
    %2645 = vmatpush1.bf16.msra.mxu0 0
    %2646 = vmatprep.subr.bf16.mxu0 0
    %2647 = vmatpush1.bf16.msra.mxu0 0
    %2648 = vmatprep.subr.bf16.mxu0 0
    %2649 = vmatpush1.bf16.msra.mxu0 0
    %2650 = vmatprep.subr.bf16.mxu0 0
    %2651 = vmatpush1.bf16.msra.mxu0 0
    %2652 = vmatprep.subr.bf16.mxu0 0
    %2653 = vmatpush1.bf16.msra.mxu0 0
    %2654 = vmatprep.subr.bf16.mxu0 0
    %2655 = vmatpush1.bf16.msra.mxu0 0
    %2656 = vmatprep.subr.bf16.mxu0 0
    %2657 = vmatpush1.bf16.msra.mxu0 0
    %2658 = vmatprep.subr.bf16.mxu0 0
    %2659 = vmatpush1.bf16.msra.mxu0 0
    %2660 = vmatprep.mubr.bf16.mxu0 0
    %2661 = vmatmul.mubr.bf16.gmra.mrb[0].mxu0 %v2626
    %v2662 = vpop.f32.mrb[0].mxu0
    %v2663 = vadd.f32 0.0, %v2662
    %v2664 = vpop.f32.mrb[0].mxu0
    %v2665 = vpop.f32.mrb[0].mxu0
    %v2666 = vpop.f32.mrb[0].mxu0
    %2667 = vdwg.mxu0
    %v2668 = vadd.f32 %v2607, %v2663
    %v2669 = vmin.f32 %v2668, 20.0
    %v2670 = vmul.f32 %v2669, 1.442695
    %v2671 = vpow.pop %v2670
    %v2672 = vadd.f32 %v2671, 1.0
    %v2673 = vmul.f32 %v2672, %v2672
    %v2674 = vsub.f32 %v2673, 1.0
    %v2675 = vmul.f32 %v2668, %v2674
    %v2676 = vadd.f32 %v2673, 1.0
    %v2677 = vrcp.pop %v2676
    %v2678 = vmul.f32 %v2675, %v2677
    %v2679 = vpack.c.bf16 %v2678, %v2678
    %v2680 = vld [vmem:[%s10] sm:$0xf]
    %v2681 = vld [vmem:[%s10 + $0x4] sm:$0xf]
    %v2682 = vld [vmem:[%s10 + $0x8] sm:$0xf]
    %v2683 = vld [vmem:[%s10 + $0xc] sm:$0xf]
    %v2684 = vld [vmem:[%s10 + $0x10] sm:$0xf]
    %v2685 = vld [vmem:[%s10 + $0x14] sm:$0xf]
    %v2686 = vld [vmem:[%s10 + $0x18] sm:$0xf]
    %v2687 = vld [vmem:[%s10 + $0x1c] sm:$0xf]
    %v2688 = vld [vmem:[#allocation12] sm:$0x1]
    %v2690 = vlaneseq
    %v2691 = vshrl.u32 %v2690, 7
    %v2692 = vsub.s32 0, %v2691
    %v2693 = vrot.slane %v2688, %v2692
    %v2703 = vunpack.c.l.b16 %v2680
    %v2704 = vunpack.c.l.b16 %v2681
    %v2705 = vunpack.c.l.b16 %v2682
    %v2706 = vunpack.c.l.b16 %v2683
    %v2707 = vunpack.c.l.b16 %v2684
    %v2708 = vunpack.c.l.b16 %v2685
    %v2709 = vunpack.c.l.b16 %v2686
    %v2710 = vunpack.c.l.b16 %v2687
    %v2711 = vpack.c.b16 %v2704, %v2703
    %v2712 = vpack.c.b16 %v2706, %v2705
    %v2713 = vpack.c.b16 %v2708, %v2707
    %v2714 = vpack.c.b16 %v2710, %v2709
    %v2720 = vsel %vm645, %v2679, 0
    %2722 = vmatprep.subr.bf16.mxu0 0
    %2723 = vmatpush1.bf16.msra.mxu0 %v2711
    %2724 = vmatprep.subr.bf16.mxu0 0
    %2725 = vmatpush1.bf16.msra.mxu0 %v2712
    %2726 = vmatprep.subr.bf16.mxu0 0
    %2727 = vmatpush1.bf16.msra.mxu0 %v2713
    %2728 = vmatprep.subr.bf16.mxu0 0
    %2729 = vmatpush1.bf16.msra.mxu0 %v2714
    %2730 = vmatprep.subr.bf16.mxu0 0
    %2731 = vmatpush1.bf16.msra.mxu0 0
    %2732 = vmatprep.subr.bf16.mxu0 0
    %2733 = vmatpush1.bf16.msra.mxu0 0
    %2734 = vmatprep.subr.bf16.mxu0 0
    %2735 = vmatpush1.bf16.msra.mxu0 0
    %2736 = vmatprep.subr.bf16.mxu0 0
    %2737 = vmatpush1.bf16.msra.mxu0 0
    %2738 = vmatprep.subr.bf16.mxu0 0
    %2739 = vmatpush1.bf16.msra.mxu0 0
    %2740 = vmatprep.subr.bf16.mxu0 0
    %2741 = vmatpush1.bf16.msra.mxu0 0
    %2742 = vmatprep.subr.bf16.mxu0 0
    %2743 = vmatpush1.bf16.msra.mxu0 0
    %2744 = vmatprep.subr.bf16.mxu0 0
    %2745 = vmatpush1.bf16.msra.mxu0 0
    %2746 = vmatprep.subr.bf16.mxu0 0
    %2747 = vmatpush1.bf16.msra.mxu0 0
    %2748 = vmatprep.subr.bf16.mxu0 0
    %2749 = vmatpush1.bf16.msra.mxu0 0
    %2750 = vmatprep.subr.bf16.mxu0 0
    %2751 = vmatpush1.bf16.msra.mxu0 0
    %2752 = vmatprep.subr.bf16.mxu0 0
    %2753 = vmatpush1.bf16.msra.mxu0 0
    %2754 = vmatprep.mubr.bf16.mxu0 0
    %2755 = vmatmul.mubr.bf16.gmra.mrb[0].mxu0 %v2720
    %v2756 = vpop.f32.mrb[0].mxu0
    %v2757 = vadd.f32 %v2693, %v2756
    %v2758 = vpop.f32.mrb[0].mxu0
    %v2759 = vpop.f32.mrb[0].mxu0
    %v2760 = vpop.f32.mrb[0].mxu0
    %2761 = vdwg.mxu0
    %v2762 = vadd.f32 %v2375, %v2757
    %2763 = vst.msk [vmem:[#allocation2 + $0x8] sm:$0xff] %vm336, %v2762
    %2765 = vrot.lane.b32.xlu0 %v2757, 96
    %v2766 = vpop.permute.xlu0 %2765
    %v2768 = vadd.f32 %v2380, %v2766
    %2769 = vst.msk [vmem:[#allocation2 + $0x10] sm:$0xff] %vm336, %v2768
    %v2770 = vld [vmem:[#allocation15] sm:$0x1]
    %v2771 = vpack.c.bf16 %v2385, %v2385
    %v2772 = vld [vmem:[%s12] sm:$0xf]
    %v2773 = vld [vmem:[%s12 + $0x4] sm:$0xf]
    %v2774 = vld [vmem:[%s12 + $0x8] sm:$0xf]
    %v2775 = vld [vmem:[%s12 + $0xc] sm:$0xf]
    %v2780 = vunpack.c.l.b16 %v2772
    %v2781 = vunpack.c.l.b16 %v2773
    %v2782 = vunpack.c.l.b16 %v2774
    %v2783 = vunpack.c.l.b16 %v2775
    %v2784 = vpack.c.b16 %v2781, %v2780
    %v2785 = vpack.c.b16 %v2783, %v2782
    %v2789 = vsel %vm336, %v2771, 0
    %2791 = vmatprep.subr.bf16.mxu0 0
    %2792 = vmatpush1.bf16.msra.mxu0 %v2784
    %2793 = vmatprep.subr.bf16.mxu0 0
    %2794 = vmatpush1.bf16.msra.mxu0 %v2785
    %2795 = vmatprep.subr.bf16.mxu0 0
    %2796 = vmatpush1.bf16.msra.mxu0 0
    %2797 = vmatprep.subr.bf16.mxu0 0
    %2798 = vmatpush1.bf16.msra.mxu0 0
    %2799 = vmatprep.subr.bf16.mxu0 0
    %2800 = vmatpush1.bf16.msra.mxu0 0
    %2801 = vmatprep.subr.bf16.mxu0 0
    %2802 = vmatpush1.bf16.msra.mxu0 0
    %2803 = vmatprep.subr.bf16.mxu0 0
    %2804 = vmatpush1.bf16.msra.mxu0 0
    %2805 = vmatprep.subr.bf16.mxu0 0
    %2806 = vmatpush1.bf16.msra.mxu0 0
    %2807 = vmatprep.subr.bf16.mxu0 0
    %2808 = vmatpush1.bf16.msra.mxu0 0
    %2809 = vmatprep.subr.bf16.mxu0 0
    %2810 = vmatpush1.bf16.msra.mxu0 0
    %2811 = vmatprep.subr.bf16.mxu0 0
    %2812 = vmatpush1.bf16.msra.mxu0 0
    %2813 = vmatprep.subr.bf16.mxu0 0
    %2814 = vmatpush1.bf16.msra.mxu0 0
    %2815 = vmatprep.subr.bf16.mxu0 0
    %2816 = vmatpush1.bf16.msra.mxu0 0
    %2817 = vmatprep.subr.bf16.mxu0 0
    %2818 = vmatpush1.bf16.msra.mxu0 0
    %2819 = vmatprep.subr.bf16.mxu0 0
    %2820 = vmatpush1.bf16.msra.mxu0 0
    %2821 = vmatprep.subr.bf16.mxu0 0
    %2822 = vmatpush1.bf16.msra.mxu0 0
    %2823 = vmatprep.mubr.bf16.mxu0 0
    %2824 = vmatmul.mubr.bf16.gmra.mrb[0].mxu0 %v2789
    %v2825 = vpop.f32.mrb[0].mxu0
    %v2826 = vadd.f32 0.0, %v2825
    %v2827 = vpop.f32.mrb[0].mxu0
    %v2828 = vpop.f32.mrb[0].mxu0
    %v2829 = vpop.f32.mrb[0].mxu0
    %2830 = vdwg.mxu0
    %v2832 = vlaneseq
    %v2833 = vshrl.u32 %v2832, 7
    %v2834 = vsub.s32 0, %v2833
    %v2835 = vrot.slane %v2770, %v2834
    %v2837 = vadd.f32 %v2835, %v2826
    %v2838 = vpack.c.bf16 %v2390, %v2390
    %v2839 = vld [vmem:[#allocation14] sm:$0xf]
    %v2840 = vld [vmem:[#allocation14 + $0x4] sm:$0xf]
    %v2841 = vld [vmem:[#allocation14 + $0x8] sm:$0xf]
    %v2842 = vld [vmem:[#allocation14 + $0xc] sm:$0xf]
    %v2847 = vunpack.c.l.b16 %v2839
    %v2848 = vunpack.c.l.b16 %v2840
    %v2849 = vunpack.c.l.b16 %v2841
    %v2850 = vunpack.c.l.b16 %v2842
    %v2851 = vpack.c.b16 %v2848, %v2847
    %v2852 = vpack.c.b16 %v2850, %v2849
    %v2856 = vsel %vm336, %v2838, 0
    %2858 = vmatprep.subr.bf16.mxu0 0
    %2859 = vmatpush1.bf16.msra.mxu0 %v2851
    %2860 = vmatprep.subr.bf16.mxu0 0
    %2861 = vmatpush1.bf16.msra.mxu0 %v2852
    %2862 = vmatprep.subr.bf16.mxu0 0
    %2863 = vmatpush1.bf16.msra.mxu0 0
    %2864 = vmatprep.subr.bf16.mxu0 0
    %2865 = vmatpush1.bf16.msra.mxu0 0
    %2866 = vmatprep.subr.bf16.mxu0 0
    %2867 = vmatpush1.bf16.msra.mxu0 0
    %2868 = vmatprep.subr.bf16.mxu0 0
    %2869 = vmatpush1.bf16.msra.mxu0 0
    %2870 = vmatprep.subr.bf16.mxu0 0
    %2871 = vmatpush1.bf16.msra.mxu0 0
    %2872 = vmatprep.subr.bf16.mxu0 0
    %2873 = vmatpush1.bf16.msra.mxu0 0
    %2874 = vmatprep.subr.bf16.mxu0 0
    %2875 = vmatpush1.bf16.msra.mxu0 0
    %2876 = vmatprep.subr.bf16.mxu0 0
    %2877 = vmatpush1.bf16.msra.mxu0 0
    %2878 = vmatprep.subr.bf16.mxu0 0
    %2879 = vmatpush1.bf16.msra.mxu0 0
    %2880 = vmatprep.subr.bf16.mxu0 0
    %2881 = vmatpush1.bf16.msra.mxu0 0
    %2882 = vmatprep.subr.bf16.mxu0 0
    %2883 = vmatpush1.bf16.msra.mxu0 0
    %2884 = vmatprep.subr.bf16.mxu0 0
    %2885 = vmatpush1.bf16.msra.mxu0 0
    %2886 = vmatprep.subr.bf16.mxu0 0
    %2887 = vmatpush1.bf16.msra.mxu0 0
    %2888 = vmatprep.subr.bf16.mxu0 0
    %2889 = vmatpush1.bf16.msra.mxu0 0
    %2890 = vmatprep.mubr.bf16.mxu0 0
    %2891 = vmatmul.mubr.bf16.gmra.mrb[0].mxu0 %v2856
    %v2892 = vpop.f32.mrb[0].mxu0
    %v2893 = vadd.f32 0.0, %v2892
    %v2894 = vpop.f32.mrb[0].mxu0
    %v2895 = vpop.f32.mrb[0].mxu0
    %v2896 = vpop.f32.mrb[0].mxu0
    %2897 = vdwg.mxu0
    %v2898 = vadd.f32 %v2837, %v2893
    %v2899 = vmin.f32 %v2898, 20.0
    %v2900 = vmul.f32 %v2899, 1.442695
    %v2901 = vpow.pop %v2900
    %v2902 = vadd.f32 %v2901, 1.0
    %v2903 = vmul.f32 %v2902, %v2902
    %v2904 = vsub.f32 %v2903, 1.0
    %v2905 = vmul.f32 %v2898, %v2904
    %v2906 = vadd.f32 %v2903, 1.0
    %v2907 = vrcp.pop %v2906
    %v2908 = vmul.f32 %v2905, %v2907
    %v2909 = vpack.c.bf16 %v2908, %v2908
    %v2910 = vld [vmem:[%s15] sm:$0xf]
    %v2911 = vld [vmem:[%s15 + $0x4] sm:$0xf]
    %v2912 = vld [vmem:[%s15 + $0x8] sm:$0xf]
    %v2913 = vld [vmem:[%s15 + $0xc] sm:$0xf]
    %v2914 = vld [vmem:[%s15 + $0x10] sm:$0xf]
    %v2915 = vld [vmem:[%s15 + $0x14] sm:$0xf]
    %v2916 = vld [vmem:[%s15 + $0x18] sm:$0xf]
    %v2917 = vld [vmem:[%s15 + $0x1c] sm:$0xf]
    %v2918 = vld [vmem:[%s16] sm:$0x1]
    %v2920 = vlaneseq
    %v2921 = vshrl.u32 %v2920, 7
    %v2922 = vsub.s32 0, %v2921
    %v2923 = vrot.slane %v2918, %v2922
    %v2933 = vunpack.c.l.b16 %v2910
    %v2934 = vunpack.c.l.b16 %v2911
    %v2935 = vunpack.c.l.b16 %v2912
    %v2936 = vunpack.c.l.b16 %v2913
    %v2937 = vunpack.c.l.b16 %v2914
    %v2938 = vunpack.c.l.b16 %v2915
    %v2939 = vunpack.c.l.b16 %v2916
    %v2940 = vunpack.c.l.b16 %v2917
    %v2941 = vpack.c.b16 %v2934, %v2933
    %v2942 = vpack.c.b16 %v2936, %v2935
    %v2943 = vpack.c.b16 %v2938, %v2937
    %v2944 = vpack.c.b16 %v2940, %v2939
    %v2950 = vsel %vm645, %v2909, 0
    %2952 = vmatprep.subr.bf16.mxu0 0
    %2953 = vmatpush1.bf16.msra.mxu0 %v2941
    %2954 = vmatprep.subr.bf16.mxu0 0
    %2955 = vmatpush1.bf16.msra.mxu0 %v2942
    %2956 = vmatprep.subr.bf16.mxu0 0
    %2957 = vmatpush1.bf16.msra.mxu0 %v2943
    %2958 = vmatprep.subr.bf16.mxu0 0
    %2959 = vmatpush1.bf16.msra.mxu0 %v2944
    %2960 = vmatprep.subr.bf16.mxu0 0
    %2961 = vmatpush1.bf16.msra.mxu0 0
    %2962 = vmatprep.subr.bf16.mxu0 0
    %2963 = vmatpush1.bf16.msra.mxu0 0
    %2964 = vmatprep.subr.bf16.mxu0 0
    %2965 = vmatpush1.bf16.msra.mxu0 0
    %2966 = vmatprep.subr.bf16.mxu0 0
    %2967 = vmatpush1.bf16.msra.mxu0 0
    %2968 = vmatprep.subr.bf16.mxu0 0
    %2969 = vmatpush1.bf16.msra.mxu0 0
    %2970 = vmatprep.subr.bf16.mxu0 0
    %2971 = vmatpush1.bf16.msra.mxu0 0
    %2972 = vmatprep.subr.bf16.mxu0 0
    %2973 = vmatpush1.bf16.msra.mxu0 0
    %2974 = vmatprep.subr.bf16.mxu0 0
    %2975 = vmatpush1.bf16.msra.mxu0 0
    %2976 = vmatprep.subr.bf16.mxu0 0
    %2977 = vmatpush1.bf16.msra.mxu0 0
    %2978 = vmatprep.subr.bf16.mxu0 0
    %2979 = vmatpush1.bf16.msra.mxu0 0
    %2980 = vmatprep.subr.bf16.mxu0 0
    %2981 = vmatpush1.bf16.msra.mxu0 0
    %2982 = vmatprep.subr.bf16.mxu0 0
    %2983 = vmatpush1.bf16.msra.mxu0 0
    %2984 = vmatprep.mubr.bf16.mxu0 0
    %2985 = vmatmul.mubr.bf16.gmra.mrb[0].mxu0 %v2950
    %v2986 = vpop.f32.mrb[0].mxu0
    %v2987 = vadd.f32 %v2923, %v2986
    %v2988 = vpop.f32.mrb[0].mxu0
    %v2989 = vpop.f32.mrb[0].mxu0
    %v2990 = vpop.f32.mrb[0].mxu0
    %2991 = vdwg.mxu0
    %v2992 = vadd.f32 %v2385, %v2987
    %2993 = vst.msk [vmem:[#allocation2 + $0x18] sm:$0xff] %vm336, %v2992
    %2995 = vrot.lane.b32.xlu0 %v2987, 96
    %v2996 = vpop.permute.xlu0 %2995
    %v2998 = vadd.f32 %v2390, %v2996
    %2999 = vst.msk [vmem:[#allocation2 + $0x20] sm:$0xff] %vm336, %v2998
    %v3000 = vld [vmem:[#allocation2] sm:$0xff]
    %v3001 = vld [vmem:[#allocation2 + $0x8] sm:$0xff]
    %v3002 = vld [vmem:[#allocation2 + $0x10] sm:$0xff]
    %v3003 = vld [vmem:[#allocation2 + $0x18] sm:$0xff]
    %v3004 = vld [vmem:[#allocation2 + $0x20] sm:$0xff]
    %v3010 = vcombine.high %v3000, %v3000
    %v3012 = vunpack.c.l.s4 1966171168
    %v3013 = vunpack.c.0.s8 %v3012
    %v3014 = vlaneseq
    %v3015 = vshrl.u32 %v3014, 7
    %v3016 = vsub.s32 %v3013, %v3015
    %v3017 = vrot.slane %v3000, %v3016
    %v3019 = vunpack.c.l.s4 1966171168
    %v3020 = vunpack.c.0.s8 %v3019
    %v3021 = vlaneseq
    %v3022 = vshrl.u32 %v3021, 7
    %v3023 = vsub.s32 %v3020, %v3022
    %v3024 = vrot.slane %v3010, %v3023
    %v3025 = vcombine.high %v3017, %v3017
    %v3026 = vcombine.high %v3024, %v3024
    %v3028 = vunpack.c.l.s4 1966171168
    %v3029 = vunpack.c.0.s8 %v3028
    %v3030 = vlaneseq
    %v3031 = vshrl.u32 %v3030, 7
    %v3032 = vsub.s32 %v3029, %v3031
    %v3033 = vrot.slane %v3017, %v3032
    %v3035 = vunpack.c.l.s4 1966171168
    %v3036 = vunpack.c.0.s8 %v3035
    %v3037 = vlaneseq
    %v3038 = vshrl.u32 %v3037, 7
    %v3039 = vsub.s32 %v3036, %v3038
    %v3040 = vrot.slane %v3024, %v3039
    %v3042 = vunpack.c.l.s4 1966171168
    %v3043 = vunpack.c.0.s8 %v3042
    %v3044 = vlaneseq
    %v3045 = vshrl.u32 %v3044, 7
    %v3046 = vsub.s32 %v3043, %v3045
    %v3047 = vrot.slane %v3025, %v3046
    %v3049 = vunpack.c.l.s4 1966171168
    %v3050 = vunpack.c.0.s8 %v3049
    %v3051 = vlaneseq
    %v3052 = vshrl.u32 %v3051, 7
    %v3053 = vsub.s32 %v3050, %v3052
    %v3054 = vrot.slane %v3026, %v3053
    %v3055 = vcombine.high %v3033, %v3033
    %v3056 = vcombine.high %v3040, %v3040
    %v3057 = vcombine.high %v3047, %v3047
    %v3058 = vcombine.high %v3054, %v3054
    %v3059 = vcombine.high %v3001, %v3001
    %v3061 = vunpack.c.l.s4 1966171168
    %v3062 = vunpack.c.0.s8 %v3061
    %v3063 = vlaneseq
    %v3064 = vshrl.u32 %v3063, 7
    %v3065 = vsub.s32 %v3062, %v3064
    %v3066 = vrot.slane %v3001, %v3065
    %v3068 = vunpack.c.l.s4 1966171168
    %v3069 = vunpack.c.0.s8 %v3068
    %v3070 = vlaneseq
    %v3071 = vshrl.u32 %v3070, 7
    %v3072 = vsub.s32 %v3069, %v3071
    %v3073 = vrot.slane %v3059, %v3072
    %v3074 = vcombine.high %v3066, %v3066
    %v3075 = vcombine.high %v3073, %v3073
    %v3077 = vunpack.c.l.s4 1966171168
    %v3078 = vunpack.c.0.s8 %v3077
    %v3079 = vlaneseq
    %v3080 = vshrl.u32 %v3079, 7
    %v3081 = vsub.s32 %v3078, %v3080
    %v3082 = vrot.slane %v3066, %v3081
    %v3084 = vunpack.c.l.s4 1966171168
    %v3085 = vunpack.c.0.s8 %v3084
    %v3086 = vlaneseq
    %v3087 = vshrl.u32 %v3086, 7
    %v3088 = vsub.s32 %v3085, %v3087
    %v3089 = vrot.slane %v3073, %v3088
    %v3091 = vunpack.c.l.s4 1966171168
    %v3092 = vunpack.c.0.s8 %v3091
    %v3093 = vlaneseq
    %v3094 = vshrl.u32 %v3093, 7
    %v3095 = vsub.s32 %v3092, %v3094
    %v3096 = vrot.slane %v3074, %v3095
    %v3098 = vunpack.c.l.s4 1966171168
    %v3099 = vunpack.c.0.s8 %v3098
    %v3100 = vlaneseq
    %v3101 = vshrl.u32 %v3100, 7
    %v3102 = vsub.s32 %v3099, %v3101
    %v3103 = vrot.slane %v3075, %v3102
    %v3104 = vcombine.high %v3082, %v3082
    %v3105 = vcombine.high %v3089, %v3089
    %v3106 = vcombine.high %v3096, %v3096
    %v3107 = vcombine.high %v3103, %v3103
    %v3108 = vcombine.high %v3002, %v3002
    %v3110 = vunpack.c.l.s4 1966171168
    %v3111 = vunpack.c.0.s8 %v3110
    %v3112 = vlaneseq
    %v3113 = vshrl.u32 %v3112, 7
    %v3114 = vsub.s32 %v3111, %v3113
    %v3115 = vrot.slane %v3002, %v3114
    %v3117 = vunpack.c.l.s4 1966171168
    %v3118 = vunpack.c.0.s8 %v3117
    %v3119 = vlaneseq
    %v3120 = vshrl.u32 %v3119, 7
    %v3121 = vsub.s32 %v3118, %v3120
    %v3122 = vrot.slane %v3108, %v3121
    %v3123 = vcombine.high %v3115, %v3115
    %v3124 = vcombine.high %v3122, %v3122
    %v3126 = vunpack.c.l.s4 1966171168
    %v3127 = vunpack.c.0.s8 %v3126
    %v3128 = vlaneseq
    %v3129 = vshrl.u32 %v3128, 7
    %v3130 = vsub.s32 %v3127, %v3129
    %v3131 = vrot.slane %v3115, %v3130
    %v3133 = vunpack.c.l.s4 1966171168
    %v3134 = vunpack.c.0.s8 %v3133
    %v3135 = vlaneseq
    %v3136 = vshrl.u32 %v3135, 7
    %v3137 = vsub.s32 %v3134, %v3136
    %v3138 = vrot.slane %v3122, %v3137
    %v3140 = vunpack.c.l.s4 1966171168
    %v3141 = vunpack.c.0.s8 %v3140
    %v3142 = vlaneseq
    %v3143 = vshrl.u32 %v3142, 7
    %v3144 = vsub.s32 %v3141, %v3143
    %v3145 = vrot.slane %v3123, %v3144
    %v3147 = vunpack.c.l.s4 1966171168
    %v3148 = vunpack.c.0.s8 %v3147
    %v3149 = vlaneseq
    %v3150 = vshrl.u32 %v3149, 7
    %v3151 = vsub.s32 %v3148, %v3150
    %v3152 = vrot.slane %v3124, %v3151
    %v3153 = vcombine.high %v3131, %v3131
    %v3154 = vcombine.high %v3138, %v3138
    %v3155 = vcombine.high %v3145, %v3145
    %v3156 = vcombine.high %v3152, %v3152
    %v3157 = vcombine.high %v3003, %v3003
    %v3159 = vunpack.c.l.s4 1966171168
    %v3160 = vunpack.c.0.s8 %v3159
    %v3161 = vlaneseq
    %v3162 = vshrl.u32 %v3161, 7
    %v3163 = vsub.s32 %v3160, %v3162
    %v3164 = vrot.slane %v3003, %v3163
    %v3166 = vunpack.c.l.s4 1966171168
    %v3167 = vunpack.c.0.s8 %v3166
    %v3168 = vlaneseq
    %v3169 = vshrl.u32 %v3168, 7
    %v3170 = vsub.s32 %v3167, %v3169
    %v3171 = vrot.slane %v3157, %v3170
    %v3172 = vcombine.high %v3164, %v3164
    %v3173 = vcombine.high %v3171, %v3171
    %v3175 = vunpack.c.l.s4 1966171168
    %v3176 = vunpack.c.0.s8 %v3175
    %v3177 = vlaneseq
    %v3178 = vshrl.u32 %v3177, 7
    %v3179 = vsub.s32 %v3176, %v3178
    %v3180 = vrot.slane %v3164, %v3179
    %v3182 = vunpack.c.l.s4 1966171168
    %v3183 = vunpack.c.0.s8 %v3182
    %v3184 = vlaneseq
    %v3185 = vshrl.u32 %v3184, 7
    %v3186 = vsub.s32 %v3183, %v3185
    %v3187 = vrot.slane %v3171, %v3186
    %v3189 = vunpack.c.l.s4 1966171168
    %v3190 = vunpack.c.0.s8 %v3189
    %v3191 = vlaneseq
    %v3192 = vshrl.u32 %v3191, 7
    %v3193 = vsub.s32 %v3190, %v3192
    %v3194 = vrot.slane %v3172, %v3193
    %v3196 = vunpack.c.l.s4 1966171168
    %v3197 = vunpack.c.0.s8 %v3196
    %v3198 = vlaneseq
    %v3199 = vshrl.u32 %v3198, 7
    %v3200 = vsub.s32 %v3197, %v3199
    %v3201 = vrot.slane %v3173, %v3200
    %v3202 = vcombine.high %v3180, %v3180
    %v3203 = vcombine.high %v3187, %v3187
    %v3204 = vcombine.high %v3194, %v3194
    %v3205 = vcombine.high %v3201, %v3201
    %v3206 = vcombine.high %v3004, %v3004
    %v3208 = vunpack.c.l.s4 1966171168
    %v3209 = vunpack.c.0.s8 %v3208
    %v3210 = vlaneseq
    %v3211 = vshrl.u32 %v3210, 7
    %v3212 = vsub.s32 %v3209, %v3211
    %v3213 = vrot.slane %v3004, %v3212
    %v3215 = vunpack.c.l.s4 1966171168
    %v3216 = vunpack.c.0.s8 %v3215
    %v3217 = vlaneseq
    %v3218 = vshrl.u32 %v3217, 7
    %v3219 = vsub.s32 %v3216, %v3218
    %v3220 = vrot.slane %v3206, %v3219
    %v3221 = vcombine.high %v3213, %v3213
    %v3222 = vcombine.high %v3220, %v3220
    %v3224 = vunpack.c.l.s4 1966171168
    %v3225 = vunpack.c.0.s8 %v3224
    %v3226 = vlaneseq
    %v3227 = vshrl.u32 %v3226, 7
    %v3228 = vsub.s32 %v3225, %v3227
    %v3229 = vrot.slane %v3213, %v3228
    %v3231 = vunpack.c.l.s4 1966171168
    %v3232 = vunpack.c.0.s8 %v3231
    %v3233 = vlaneseq
    %v3234 = vshrl.u32 %v3233, 7
    %v3235 = vsub.s32 %v3232, %v3234
    %v3236 = vrot.slane %v3220, %v3235
    %v3238 = vunpack.c.l.s4 1966171168
    %v3239 = vunpack.c.0.s8 %v3238
    %v3240 = vlaneseq
    %v3241 = vshrl.u32 %v3240, 7
    %v3242 = vsub.s32 %v3239, %v3241
    %v3243 = vrot.slane %v3221, %v3242
    %v3245 = vunpack.c.l.s4 1966171168
    %v3246 = vunpack.c.0.s8 %v3245
    %v3247 = vlaneseq
    %v3248 = vshrl.u32 %v3247, 7
    %v3249 = vsub.s32 %v3246, %v3248
    %v3250 = vrot.slane %v3222, %v3249
    %v3251 = vcombine.high %v3229, %v3229
    %v3252 = vcombine.high %v3236, %v3236
    %v3253 = vcombine.high %v3243, %v3243
    %v3254 = vcombine.high %v3250, %v3250
    %v3255 = vlaneseq
    %v3256 = vshrl.u32 %v3255, 7
    %v3257 = vsub.s32 0, %v3256
    %v3258 = vrot.slane %v3033, %v3257
    %v3259 = vlaneseq
    %v3260 = vshrl.u32 %v3259, 7
    %v3261 = vsub.s32 0, %v3260
    %v3262 = vrot.slane %v3047, %v3261
    %v3263 = vlaneseq
    %v3264 = vshrl.u32 %v3263, 7
    %v3265 = vsub.s32 0, %v3264
    %v3266 = vrot.slane %v3055, %v3265
    %v3267 = vlaneseq
    %v3268 = vshrl.u32 %v3267, 7
    %v3269 = vsub.s32 0, %v3268
    %v3270 = vrot.slane %v3057, %v3269
    %v3271 = vlaneseq
    %v3272 = vshrl.u32 %v3271, 7
    %v3273 = vsub.s32 0, %v3272
    %v3274 = vrot.slane %v3040, %v3273
    %v3275 = vlaneseq
    %v3276 = vshrl.u32 %v3275, 7
    %v3277 = vsub.s32 0, %v3276
    %v3278 = vrot.slane %v3054, %v3277
    %v3279 = vlaneseq
    %v3280 = vshrl.u32 %v3279, 7
    %v3281 = vsub.s32 0, %v3280
    %v3282 = vrot.slane %v3056, %v3281
    %v3283 = vlaneseq
    %v3284 = vshrl.u32 %v3283, 7
    %v3285 = vsub.s32 0, %v3284
    %v3286 = vrot.slane %v3058, %v3285
    %v3287 = vlaneseq
    %v3288 = vshrl.u32 %v3287, 7
    %v3289 = vsub.s32 0, %v3288
    %v3290 = vrot.slane %v3082, %v3289
    %v3291 = vlaneseq
    %v3292 = vshrl.u32 %v3291, 7
    %v3293 = vsub.s32 0, %v3292
    %v3294 = vrot.slane %v3096, %v3293
    %v3295 = vlaneseq
    %v3296 = vshrl.u32 %v3295, 7
    %v3297 = vsub.s32 0, %v3296
    %v3298 = vrot.slane %v3104, %v3297
    %v3299 = vlaneseq
    %v3300 = vshrl.u32 %v3299, 7
    %v3301 = vsub.s32 0, %v3300
    %v3302 = vrot.slane %v3106, %v3301
    %v3303 = vlaneseq
    %v3304 = vshrl.u32 %v3303, 7
    %v3305 = vsub.s32 0, %v3304
    %v3306 = vrot.slane %v3089, %v3305
    %v3307 = vlaneseq
    %v3308 = vshrl.u32 %v3307, 7
    %v3309 = vsub.s32 0, %v3308
    %v3310 = vrot.slane %v3103, %v3309
    %v3311 = vlaneseq
    %v3312 = vshrl.u32 %v3311, 7
    %v3313 = vsub.s32 0, %v3312
    %v3314 = vrot.slane %v3105, %v3313
    %v3315 = vlaneseq
    %v3316 = vshrl.u32 %v3315, 7
    %v3317 = vsub.s32 0, %v3316
    %v3318 = vrot.slane %v3107, %v3317
    %v3319 = vlaneseq
    %v3320 = vshrl.u32 %v3319, 7
    %v3321 = vsub.s32 0, %v3320
    %v3322 = vrot.slane %v3131, %v3321
    %v3323 = vlaneseq
    %v3324 = vshrl.u32 %v3323, 7
    %v3325 = vsub.s32 0, %v3324
    %v3326 = vrot.slane %v3145, %v3325
    %v3327 = vlaneseq
    %v3328 = vshrl.u32 %v3327, 7
    %v3329 = vsub.s32 0, %v3328
    %v3330 = vrot.slane %v3153, %v3329
    %v3331 = vlaneseq
    %v3332 = vshrl.u32 %v3331, 7
    %v3333 = vsub.s32 0, %v3332
    %v3334 = vrot.slane %v3155, %v3333
    %v3335 = vlaneseq
    %v3336 = vshrl.u32 %v3335, 7
    %v3337 = vsub.s32 0, %v3336
    %v3338 = vrot.slane %v3138, %v3337
    %v3339 = vlaneseq
    %v3340 = vshrl.u32 %v3339, 7
    %v3341 = vsub.s32 0, %v3340
    %v3342 = vrot.slane %v3152, %v3341
    %v3343 = vlaneseq
    %v3344 = vshrl.u32 %v3343, 7
    %v3345 = vsub.s32 0, %v3344
    %v3346 = vrot.slane %v3154, %v3345
    %v3347 = vlaneseq
    %v3348 = vshrl.u32 %v3347, 7
    %v3349 = vsub.s32 0, %v3348
    %v3350 = vrot.slane %v3156, %v3349
    %v3351 = vlaneseq
    %v3352 = vshrl.u32 %v3351, 7
    %v3353 = vsub.s32 0, %v3352
    %v3354 = vrot.slane %v3180, %v3353
    %v3355 = vlaneseq
    %v3356 = vshrl.u32 %v3355, 7
    %v3357 = vsub.s32 0, %v3356
    %v3358 = vrot.slane %v3194, %v3357
    %v3359 = vlaneseq
    %v3360 = vshrl.u32 %v3359, 7
    %v3361 = vsub.s32 0, %v3360
    %v3362 = vrot.slane %v3202, %v3361
    %v3363 = vlaneseq
    %v3364 = vshrl.u32 %v3363, 7
    %v3365 = vsub.s32 0, %v3364
    %v3366 = vrot.slane %v3204, %v3365
    %v3367 = vlaneseq
    %v3368 = vshrl.u32 %v3367, 7
    %v3369 = vsub.s32 0, %v3368
    %v3370 = vrot.slane %v3187, %v3369
    %v3371 = vlaneseq
    %v3372 = vshrl.u32 %v3371, 7
    %v3373 = vsub.s32 0, %v3372
    %v3374 = vrot.slane %v3201, %v3373
    %v3375 = vlaneseq
    %v3376 = vshrl.u32 %v3375, 7
    %v3377 = vsub.s32 0, %v3376
    %v3378 = vrot.slane %v3203, %v3377
    %v3379 = vlaneseq
    %v3380 = vshrl.u32 %v3379, 7
    %v3381 = vsub.s32 0, %v3380
    %v3382 = vrot.slane %v3205, %v3381
    %v3383 = vlaneseq
    %v3384 = vshrl.u32 %v3383, 7
    %v3385 = vsub.s32 0, %v3384
    %v3386 = vrot.slane %v3229, %v3385
    %v3387 = vlaneseq
    %v3388 = vshrl.u32 %v3387, 7
    %v3389 = vsub.s32 0, %v3388
    %v3390 = vrot.slane %v3243, %v3389
    %v3391 = vlaneseq
    %v3392 = vshrl.u32 %v3391, 7
    %v3393 = vsub.s32 0, %v3392
    %v3394 = vrot.slane %v3251, %v3393
    %v3395 = vlaneseq
    %v3396 = vshrl.u32 %v3395, 7
    %v3397 = vsub.s32 0, %v3396
    %v3398 = vrot.slane %v3253, %v3397
    %v3399 = vlaneseq
    %v3400 = vshrl.u32 %v3399, 7
    %v3401 = vsub.s32 0, %v3400
    %v3402 = vrot.slane %v3236, %v3401
    %v3403 = vlaneseq
    %v3404 = vshrl.u32 %v3403, 7
    %v3405 = vsub.s32 0, %v3404
    %v3406 = vrot.slane %v3250, %v3405
    %v3407 = vlaneseq
    %v3408 = vshrl.u32 %v3407, 7
    %v3409 = vsub.s32 0, %v3408
    %v3410 = vrot.slane %v3252, %v3409
    %v3411 = vlaneseq
    %v3412 = vshrl.u32 %v3411, 7
    %v3413 = vsub.s32 0, %v3412
    %v3414 = vrot.slane %v3254, %v3413
    %v3455 = vadd.f32 %v3258, %v1188
    %v3456 = vadd.f32 %v3258, %v1192
    %v3457 = vadd.f32 %v3262, %v1199
    %v3458 = vadd.f32 %v3262, %v1203
    %v3459 = vadd.f32 %v3266, %v1210
    %v3460 = vadd.f32 %v3266, %v1214
    %v3461 = vadd.f32 %v3270, %v1221
    %v3462 = vadd.f32 %v3270, %v1225
    %v3463 = vadd.f32 %v3274, %v1232
    %v3464 = vadd.f32 %v3274, %v1236
    %v3465 = vadd.f32 %v3278, %v1243
    %v3466 = vadd.f32 %v3278, %v1247
    %v3467 = vadd.f32 %v3282, %v1254
    %v3468 = vadd.f32 %v3282, %v1258
    %v3469 = vadd.f32 %v3286, %v1265
    %v3470 = vadd.f32 %v3286, %v1269
    %v3471 = vadd.f32 %v3290, %v1276
    %v3472 = vadd.f32 %v3290, %v1280
    %v3473 = vadd.f32 %v3294, %v1287
    %v3474 = vadd.f32 %v3294, %v1291
    %v3475 = vadd.f32 %v3298, %v1298
    %v3476 = vadd.f32 %v3298, %v1302
    %v3477 = vadd.f32 %v3302, %v1309
    %v3478 = vadd.f32 %v3302, %v1313
    %v3479 = vadd.f32 %v3306, %v1320
    %v3480 = vadd.f32 %v3306, %v1324
    %v3481 = vadd.f32 %v3310, %v1331
    %v3482 = vadd.f32 %v3310, %v1335
    %v3483 = vadd.f32 %v3314, %v1342
    %v3484 = vadd.f32 %v3314, %v1346
    %v3485 = vadd.f32 %v3318, %v1353
    %v3486 = vadd.f32 %v3318, %v1357
    %v3487 = vadd.f32 %v3322, %v1364
    %v3488 = vadd.f32 %v3322, %v1368
    %v3489 = vadd.f32 %v3326, %v1375
    %v3490 = vadd.f32 %v3326, %v1379
    %v3491 = vadd.f32 %v3330, %v1386
    %v3492 = vadd.f32 %v3330, %v1390
    %v3493 = vadd.f32 %v3334, %v1397
    %v3494 = vadd.f32 %v3334, %v1401
    %v3495 = vadd.f32 %v3338, %v1408
    %v3496 = vadd.f32 %v3338, %v1412
    %v3497 = vadd.f32 %v3342, %v1419
    %v3498 = vadd.f32 %v3342, %v1423
    %v3499 = vadd.f32 %v3346, %v1430
    %v3500 = vadd.f32 %v3346, %v1434
    %v3501 = vadd.f32 %v3350, %v1441
    %v3502 = vadd.f32 %v3350, %v1445
    %v3503 = vadd.f32 %v3354, %v1452
    %v3504 = vadd.f32 %v3354, %v1456
    %v3505 = vadd.f32 %v3358, %v1463
    %v3506 = vadd.f32 %v3358, %v1467
    %v3507 = vadd.f32 %v3362, %v1474
    %v3508 = vadd.f32 %v3362, %v1478
    %v3509 = vadd.f32 %v3366, %v1485
    %v3510 = vadd.f32 %v3366, %v1489
    %v3511 = vadd.f32 %v3370, %v1496
    %v3512 = vadd.f32 %v3370, %v1500
    %v3513 = vadd.f32 %v3374, %v1507
    %v3514 = vadd.f32 %v3374, %v1511
    %v3515 = vadd.f32 %v3378, %v1518
    %v3516 = vadd.f32 %v3378, %v1522
    %v3517 = vadd.f32 %v3382, %v1529
    %v3518 = vadd.f32 %v3382, %v1533
    %v3519 = vadd.f32 %v3386, %v1540
    %v3520 = vadd.f32 %v3386, %v1544
    %v3521 = vadd.f32 %v3390, %v1551
    %v3522 = vadd.f32 %v3390, %v1555
    %v3523 = vadd.f32 %v3394, %v1562
    %v3524 = vadd.f32 %v3394, %v1566
    %v3525 = vadd.f32 %v3398, %v1573
    %v3526 = vadd.f32 %v3398, %v1577
    %v3527 = vadd.f32 %v3402, %v1584
    %v3528 = vadd.f32 %v3402, %v1588
    %v3529 = vadd.f32 %v3406, %v1595
    %v3530 = vadd.f32 %v3406, %v1599
    %v3531 = vadd.f32 %v3410, %v1606
    %v3532 = vadd.f32 %v3410, %v1610
    %v3533 = vadd.f32 %v3414, %v1617
    %v3534 = vadd.f32 %v3414, %v1621
    %v3535 = vsel %vm336, %v3455, -inf
    %v3536 = vsel %vm336, %v3457, -inf
    %v3537 = vsel %vm336, %v3459, -inf
    %v3538 = vmax.f32 %v3535, %v3537
    %v3539 = vsel %vm336, %v3461, -inf
    %v3540 = vmax.f32 %v3536, %v3539
    %v3541 = vsel %vm336, %v3463, -inf
    %v3542 = vmax.f32 %v3538, %v3541
    %v3543 = vsel %vm336, %v3465, -inf
    %v3544 = vmax.f32 %v3540, %v3543
    %v3545 = vsel %vm336, %v3467, -inf
    %v3546 = vmax.f32 %v3542, %v3545
    %v3547 = vsel %vm336, %v3469, -inf
    %v3548 = vmax.f32 %v3544, %v3547
    %v3549 = vsel %vm336, %v3471, -inf
    %v3550 = vmax.f32 %v3546, %v3549
    %v3551 = vsel %vm336, %v3473, -inf
    %v3552 = vmax.f32 %v3548, %v3551
    %v3553 = vsel %vm336, %v3475, -inf
    %v3554 = vmax.f32 %v3550, %v3553
    %v3555 = vsel %vm336, %v3477, -inf
    %v3556 = vmax.f32 %v3552, %v3555
    %v3557 = vsel %vm336, %v3479, -inf
    %v3558 = vmax.f32 %v3554, %v3557
    %v3559 = vsel %vm336, %v3481, -inf
    %v3560 = vmax.f32 %v3556, %v3559
    %v3561 = vsel %vm336, %v3483, -inf
    %v3562 = vmax.f32 %v3558, %v3561
    %v3563 = vsel %vm336, %v3485, -inf
    %v3564 = vmax.f32 %v3560, %v3563
    %v3565 = vsel %vm336, %v3487, -inf
    %v3566 = vmax.f32 %v3562, %v3565
    %v3567 = vsel %vm336, %v3489, -inf
    %v3568 = vmax.f32 %v3564, %v3567
    %v3569 = vsel %vm336, %v3491, -inf
    %v3570 = vmax.f32 %v3566, %v3569
    %v3571 = vsel %vm336, %v3493, -inf
    %v3572 = vmax.f32 %v3568, %v3571
    %v3573 = vsel %vm336, %v3495, -inf
    %v3574 = vmax.f32 %v3570, %v3573
    %v3575 = vsel %vm336, %v3497, -inf
    %v3576 = vmax.f32 %v3572, %v3575
    %v3577 = vsel %vm336, %v3499, -inf
    %v3578 = vmax.f32 %v3574, %v3577
    %v3579 = vsel %vm336, %v3501, -inf
    %v3580 = vmax.f32 %v3576, %v3579
    %v3581 = vsel %vm336, %v3503, -inf
    %v3582 = vmax.f32 %v3578, %v3581
    %v3583 = vsel %vm336, %v3505, -inf
    %v3584 = vmax.f32 %v3580, %v3583
    %v3585 = vsel %vm336, %v3507, -inf
    %v3586 = vmax.f32 %v3582, %v3585
    %v3587 = vsel %vm336, %v3509, -inf
    %v3588 = vmax.f32 %v3584, %v3587
    %v3589 = vsel %vm336, %v3511, -inf
    %v3590 = vmax.f32 %v3586, %v3589
    %v3591 = vsel %vm336, %v3513, -inf
    %v3592 = vmax.f32 %v3588, %v3591
    %v3593 = vsel %vm336, %v3515, -inf
    %v3594 = vmax.f32 %v3590, %v3593
    %v3595 = vsel %vm336, %v3517, -inf
    %v3596 = vmax.f32 %v3592, %v3595
    %v3597 = vsel %vm336, %v3519, -inf
    %v3598 = vmax.f32 %v3594, %v3597
    %v3599 = vsel %vm336, %v3521, -inf
    %v3600 = vmax.f32 %v3596, %v3599
    %v3601 = vsel %vm336, %v3523, -inf
    %v3602 = vmax.f32 %v3598, %v3601
    %v3603 = vsel %vm336, %v3525, -inf
    %v3604 = vmax.f32 %v3600, %v3603
    %v3605 = vsel %vm336, %v3527, -inf
    %v3606 = vmax.f32 %v3602, %v3605
    %v3607 = vsel %vm336, %v3529, -inf
    %v3608 = vmax.f32 %v3604, %v3607
    %v3609 = vsel %vm336, %v3531, -inf
    %v3610 = vmax.f32 %v3606, %v3609
    %v3611 = vsel %vm336, %v3533, -inf
    %v3612 = vmax.f32 %v3608, %v3611
    %v3613 = vmax.f32 %v3610, %v3612
    %v3614 = vsel %vm336, %v3456, -inf
    %v3615 = vsel %vm336, %v3458, -inf
    %v3616 = vsel %vm336, %v3460, -inf
    %v3617 = vmax.f32 %v3614, %v3616
    %v3618 = vsel %vm336, %v3462, -inf
    %v3619 = vmax.f32 %v3615, %v3618
    %v3620 = vsel %vm336, %v3464, -inf
    %v3621 = vmax.f32 %v3617, %v3620
    %v3622 = vsel %vm336, %v3466, -inf
    %v3623 = vmax.f32 %v3619, %v3622
    %v3624 = vsel %vm336, %v3468, -inf
    %v3625 = vmax.f32 %v3621, %v3624
    %v3626 = vsel %vm336, %v3470, -inf
    %v3627 = vmax.f32 %v3623, %v3626
    %v3628 = vsel %vm336, %v3472, -inf
    %v3629 = vmax.f32 %v3625, %v3628
    %v3630 = vsel %vm336, %v3474, -inf
    %v3631 = vmax.f32 %v3627, %v3630
    %v3632 = vsel %vm336, %v3476, -inf
    %v3633 = vmax.f32 %v3629, %v3632
    %v3634 = vsel %vm336, %v3478, -inf
    %v3635 = vmax.f32 %v3631, %v3634
    %v3636 = vsel %vm336, %v3480, -inf
    %v3637 = vmax.f32 %v3633, %v3636
    %v3638 = vsel %vm336, %v3482, -inf
    %v3639 = vmax.f32 %v3635, %v3638
    %v3640 = vsel %vm336, %v3484, -inf
    %v3641 = vmax.f32 %v3637, %v3640
    %v3642 = vsel %vm336, %v3486, -inf
    %v3643 = vmax.f32 %v3639, %v3642
    %v3644 = vsel %vm336, %v3488, -inf
    %v3645 = vmax.f32 %v3641, %v3644
    %v3646 = vsel %vm336, %v3490, -inf
    %v3647 = vmax.f32 %v3643, %v3646
    %v3648 = vsel %vm336, %v3492, -inf
    %v3649 = vmax.f32 %v3645, %v3648
    %v3650 = vsel %vm336, %v3494, -inf
    %v3651 = vmax.f32 %v3647, %v3650
    %v3652 = vsel %vm336, %v3496, -inf
    %v3653 = vmax.f32 %v3649, %v3652
    %v3654 = vsel %vm336, %v3498, -inf
    %v3655 = vmax.f32 %v3651, %v3654
    %v3656 = vsel %vm336, %v3500, -inf
    %v3657 = vmax.f32 %v3653, %v3656
    %v3658 = vsel %vm336, %v3502, -inf
    %v3659 = vmax.f32 %v3655, %v3658
    %v3660 = vsel %vm336, %v3504, -inf
    %v3661 = vmax.f32 %v3657, %v3660
    %v3662 = vsel %vm336, %v3506, -inf
    %v3663 = vmax.f32 %v3659, %v3662
    %v3664 = vsel %vm336, %v3508, -inf
    %v3665 = vmax.f32 %v3661, %v3664
    %v3666 = vsel %vm336, %v3510, -inf
    %v3667 = vmax.f32 %v3663, %v3666
    %v3668 = vsel %vm336, %v3512, -inf
    %v3669 = vmax.f32 %v3665, %v3668
    %v3670 = vsel %vm336, %v3514, -inf
    %v3671 = vmax.f32 %v3667, %v3670
    %v3672 = vsel %vm336, %v3516, -inf
    %v3673 = vmax.f32 %v3669, %v3672
    %v3674 = vsel %vm336, %v3518, -inf
    %v3675 = vmax.f32 %v3671, %v3674
    %v3676 = vsel %vm336, %v3520, -inf
    %v3677 = vmax.f32 %v3673, %v3676
    %v3678 = vsel %vm336, %v3522, -inf
    %v3679 = vmax.f32 %v3675, %v3678
    %v3680 = vsel %vm336, %v3524, -inf
    %v3681 = vmax.f32 %v3677, %v3680
    %v3682 = vsel %vm336, %v3526, -inf
    %v3683 = vmax.f32 %v3679, %v3682
    %v3684 = vsel %vm336, %v3528, -inf
    %v3685 = vmax.f32 %v3681, %v3684
    %v3686 = vsel %vm336, %v3530, -inf
    %v3687 = vmax.f32 %v3683, %v3686
    %v3688 = vsel %vm336, %v3532, -inf
    %v3689 = vmax.f32 %v3685, %v3688
    %v3690 = vsel %vm336, %v3534, -inf
    %v3691 = vmax.f32 %v3687, %v3690
    %v3692 = vmax.f32 %v3689, %v3691
    %vm3693 = vcmp.eq.f32.partialorder %v3613, -inf
    %vm3694 = vcmp.eq.f32.partialorder %v3692, -inf
    %v3695 = vsel %vm3693, 0.0, %v3613
    %v3696 = vsel %vm3694, 0.0, %v3692
    %v3697 = vld [vmem:[%s19] sm:$0x1]
    %v3698 = vpack.c.bf16 %v3696, %v3695
    %v3699 = vld [vmem:[%s17] sm:$0xf]
    %v3700 = vld [vmem:[%s17 + $0x4] sm:$0xf]
    %v3701 = vld [vmem:[%s17 + $0x8] sm:$0xf]
    %v3702 = vld [vmem:[%s17 + $0xc] sm:$0xf]
    %v3707 = vunpack.c.l.b16 %v3699
    %v3708 = vunpack.c.l.b16 %v3700
    %v3709 = vunpack.c.l.b16 %v3701
    %v3710 = vunpack.c.l.b16 %v3702
    %v3711 = vpack.c.b16 %v3708, %v3707
    %v3712 = vpack.c.b16 %v3710, %v3709
    %v3716 = vsel %vm336, %v3698, 0
    %3718 = vmatprep.subr.bf16.mxu0 0
    %3719 = vmatpush1.bf16.msra.mxu0 %v3711
    %3720 = vmatprep.subr.bf16.mxu0 0
    %3721 = vmatpush1.bf16.msra.mxu0 %v3712
    %3722 = vmatprep.subr.bf16.mxu0 0
    %3723 = vmatpush1.bf16.msra.mxu0 0
    %3724 = vmatprep.subr.bf16.mxu0 0
    %3725 = vmatpush1.bf16.msra.mxu0 0
    %3726 = vmatprep.subr.bf16.mxu0 0
    %3727 = vmatpush1.bf16.msra.mxu0 0
    %3728 = vmatprep.subr.bf16.mxu0 0
    %3729 = vmatpush1.bf16.msra.mxu0 0
    %3730 = vmatprep.subr.bf16.mxu0 0
    %3731 = vmatpush1.bf16.msra.mxu0 0
    %3732 = vmatprep.subr.bf16.mxu0 0
    %3733 = vmatpush1.bf16.msra.mxu0 0
    %3734 = vmatprep.subr.bf16.mxu0 0
    %3735 = vmatpush1.bf16.msra.mxu0 0
    %3736 = vmatprep.subr.bf16.mxu0 0
    %3737 = vmatpush1.bf16.msra.mxu0 0
    %3738 = vmatprep.subr.bf16.mxu0 0
    %3739 = vmatpush1.bf16.msra.mxu0 0
    %3740 = vmatprep.subr.bf16.mxu0 0
    %3741 = vmatpush1.bf16.msra.mxu0 0
    %3742 = vmatprep.subr.bf16.mxu0 0
    %3743 = vmatpush1.bf16.msra.mxu0 0
    %3744 = vmatprep.subr.bf16.mxu0 0
    %3745 = vmatpush1.bf16.msra.mxu0 0
    %3746 = vmatprep.subr.bf16.mxu0 0
    %3747 = vmatpush1.bf16.msra.mxu0 0
    %3748 = vmatprep.subr.bf16.mxu0 0
    %3749 = vmatpush1.bf16.msra.mxu0 0
    %3750 = vmatprep.mubr.bf16.mxu0 0
    %3751 = vmatmul.mubr.bf16.gmra.mrb[0].mxu0 %v3716
    %v3752 = vpop.f32.mrb[0].mxu0
    %v3753 = vadd.f32 0.0, %v3752
    %v3754 = vpop.f32.mrb[0].mxu0
    %v3755 = vpop.f32.mrb[0].mxu0
    %v3756 = vadd.f32 0.0, %v3755
    %v3757 = vpop.f32.mrb[0].mxu0
    %3758 = vdwg.mxu0
    %v3760 = vlaneseq
    %v3761 = vshrl.u32 %v3760, 7
    %v3762 = vsub.s32 0, %v3761
    %v3763 = vrot.slane %v3697, %v3762
    %v3765 = vadd.f32 %v3763, %v3753
    %v3766 = vadd.f32 %v3763, %v3756
    %v3767 = vpack.c.bf16 %v2302, %v2301
    %v3768 = vld [vmem:[#allocation17] sm:$0xf]
    %v3769 = vld [vmem:[#allocation17 + $0x4] sm:$0xf]
    %v3770 = vld [vmem:[#allocation17 + $0x8] sm:$0xf]
    %v3771 = vld [vmem:[#allocation17 + $0xc] sm:$0xf]
    %v3776 = vunpack.c.l.b16 %v3768
    %v3777 = vunpack.c.l.b16 %v3769
    %v3778 = vunpack.c.l.b16 %v3770
    %v3779 = vunpack.c.l.b16 %v3771
    %v3780 = vpack.c.b16 %v3777, %v3776
    %v3781 = vpack.c.b16 %v3779, %v3778
    %v3785 = vsel %vm336, %v3767, 0
    %3787 = vmatprep.subr.bf16.mxu0 0
    %3788 = vmatpush1.bf16.msra.mxu0 %v3780
    %3789 = vmatprep.subr.bf16.mxu0 0
    %3790 = vmatpush1.bf16.msra.mxu0 %v3781
    %3791 = vmatprep.subr.bf16.mxu0 0
    %3792 = vmatpush1.bf16.msra.mxu0 0
    %3793 = vmatprep.subr.bf16.mxu0 0
    %3794 = vmatpush1.bf16.msra.mxu0 0
    %3795 = vmatprep.subr.bf16.mxu0 0
    %3796 = vmatpush1.bf16.msra.mxu0 0
    %3797 = vmatprep.subr.bf16.mxu0 0
    %3798 = vmatpush1.bf16.msra.mxu0 0
    %3799 = vmatprep.subr.bf16.mxu0 0
    %3800 = vmatpush1.bf16.msra.mxu0 0
    %3801 = vmatprep.subr.bf16.mxu0 0
    %3802 = vmatpush1.bf16.msra.mxu0 0
    %3803 = vmatprep.subr.bf16.mxu0 0
    %3804 = vmatpush1.bf16.msra.mxu0 0
    %3805 = vmatprep.subr.bf16.mxu0 0
    %3806 = vmatpush1.bf16.msra.mxu0 0
    %3807 = vmatprep.subr.bf16.mxu0 0
    %3808 = vmatpush1.bf16.msra.mxu0 0
    %3809 = vmatprep.subr.bf16.mxu0 0
    %3810 = vmatpush1.bf16.msra.mxu0 0
    %3811 = vmatprep.subr.bf16.mxu0 0
    %3812 = vmatpush1.bf16.msra.mxu0 0
    %3813 = vmatprep.subr.bf16.mxu0 0
    %3814 = vmatpush1.bf16.msra.mxu0 0
    %3815 = vmatprep.subr.bf16.mxu0 0
    %3816 = vmatpush1.bf16.msra.mxu0 0
    %3817 = vmatprep.subr.bf16.mxu0 0
    %3818 = vmatpush1.bf16.msra.mxu0 0
    %3819 = vmatprep.mubr.bf16.mxu0 0
    %3820 = vmatmul.mubr.bf16.gmra.mrb[0].mxu0 %v3785
    %v3821 = vpop.f32.mrb[0].mxu0
    %v3822 = vadd.f32 0.0, %v3821
    %v3823 = vpop.f32.mrb[0].mxu0
    %v3824 = vpop.f32.mrb[0].mxu0
    %v3825 = vadd.f32 0.0, %v3824
    %v3826 = vpop.f32.mrb[0].mxu0
    %3827 = vdwg.mxu0
    %v3828 = vadd.f32 %v3765, %v3822
    %v3829 = vadd.f32 %v3766, %v3825
    %v3830 = vmin.f32 %v3828, 20.0
    %v3831 = vmin.f32 %v3829, 20.0
    %v3832 = vmul.f32 %v3830, 1.442695
    %v3833 = vpow.pop %v3832
    %v3834 = vmul.f32 %v3831, 1.442695
    %v3835 = vpow.pop %v3834
    %v3836 = vadd.f32 %v3833, 1.0
    %v3837 = vadd.f32 %v3835, 1.0
    %v3838 = vmul.f32 %v3836, %v3836
    %v3839 = vmul.f32 %v3837, %v3837
    %v3840 = vsub.f32 %v3838, 1.0
    %v3841 = vsub.f32 %v3839, 1.0
    %v3842 = vmul.f32 %v3828, %v3840
    %v3843 = vmul.f32 %v3829, %v3841
    %v3844 = vadd.f32 %v3838, 1.0
    %v3845 = vadd.f32 %v3839, 1.0
    %v3846 = vrcp.pop %v3844
    %v3847 = vrcp.pop %v3845
    %v3848 = vmul.f32 %v3842, %v3846
    %v3849 = vmul.f32 %v3843, %v3847
    %v3850 = vpack.c.bf16 %v3849, %v3848
    %v3851 = vld [vmem:[%s20] sm:$0xf]
    %v3852 = vld [vmem:[%s20 + $0x4] sm:$0xf]
    %v3853 = vld [vmem:[%s20 + $0x8] sm:$0xf]
    %v3854 = vld [vmem:[%s20 + $0xc] sm:$0xf]
    %v3855 = vld [vmem:[%s20 + $0x10] sm:$0xf]
    %v3856 = vld [vmem:[%s20 + $0x14] sm:$0xf]
    %v3857 = vld [vmem:[%s20 + $0x18] sm:$0xf]
    %v3858 = vld [vmem:[%s20 + $0x1c] sm:$0xf]
    %v3859 = vld [vmem:[%s21] sm:$0x1]
    %v3861 = vlaneseq
    %v3862 = vshrl.u32 %v3861, 7
    %v3863 = vsub.s32 0, %v3862
    %v3864 = vrot.slane %v3859, %v3863
    %v3874 = vunpack.c.l.b16 %v3851
    %v3875 = vunpack.c.l.b16 %v3852
    %v3876 = vunpack.c.l.b16 %v3853
    %v3877 = vunpack.c.l.b16 %v3854
    %v3878 = vunpack.c.l.b16 %v3855
    %v3879 = vunpack.c.l.b16 %v3856
    %v3880 = vunpack.c.l.b16 %v3857
    %v3881 = vunpack.c.l.b16 %v3858
    %v3882 = vpack.c.b16 %v3875, %v3874
    %v3883 = vpack.c.b16 %v3877, %v3876
    %v3884 = vpack.c.b16 %v3879, %v3878
    %v3885 = vpack.c.b16 %v3881, %v3880
    %v3891 = vsel %vm645, %v3850, 0
    %3893 = vmatprep.subr.bf16.mxu0 0
    %3894 = vmatpush1.bf16.msra.mxu0 %v3882
    %3895 = vmatprep.subr.bf16.mxu0 0
    %3896 = vmatpush1.bf16.msra.mxu0 %v3883
    %3897 = vmatprep.subr.bf16.mxu0 0
    %3898 = vmatpush1.bf16.msra.mxu0 %v3884
    %3899 = vmatprep.subr.bf16.mxu0 0
    %3900 = vmatpush1.bf16.msra.mxu0 %v3885
    %3901 = vmatprep.subr.bf16.mxu0 0
    %3902 = vmatpush1.bf16.msra.mxu0 0
    %3903 = vmatprep.subr.bf16.mxu0 0
    %3904 = vmatpush1.bf16.msra.mxu0 0
    %3905 = vmatprep.subr.bf16.mxu0 0
    %3906 = vmatpush1.bf16.msra.mxu0 0
    %3907 = vmatprep.subr.bf16.mxu0 0
    %3908 = vmatpush1.bf16.msra.mxu0 0
    %3909 = vmatprep.subr.bf16.mxu0 0
    %3910 = vmatpush1.bf16.msra.mxu0 0
    %3911 = vmatprep.subr.bf16.mxu0 0
    %3912 = vmatpush1.bf16.msra.mxu0 0
    %3913 = vmatprep.subr.bf16.mxu0 0
    %3914 = vmatpush1.bf16.msra.mxu0 0
    %3915 = vmatprep.subr.bf16.mxu0 0
    %3916 = vmatpush1.bf16.msra.mxu0 0
    %3917 = vmatprep.subr.bf16.mxu0 0
    %3918 = vmatpush1.bf16.msra.mxu0 0
    %3919 = vmatprep.subr.bf16.mxu0 0
    %3920 = vmatpush1.bf16.msra.mxu0 0
    %3921 = vmatprep.subr.bf16.mxu0 0
    %3922 = vmatpush1.bf16.msra.mxu0 0
    %3923 = vmatprep.subr.bf16.mxu0 0
    %3924 = vmatpush1.bf16.msra.mxu0 0
    %3925 = vmatprep.mubr.bf16.mxu0 0
    %3926 = vmatmul.mubr.bf16.gmra.mrb[0].mxu0 %v3891
    %v3927 = vpop.f32.mrb[0].mxu0
    %v3928 = vadd.f32 %v3864, %v3927
    %v3929 = vpop.f32.mrb[0].mxu0
    %v3930 = vpop.f32.mrb[0].mxu0
    %v3931 = vadd.f32 %v3864, %v3930
    %v3932 = vpop.f32.mrb[0].mxu0
    %3933 = vdwg.mxu0
    %v3934 = vadd.f32 %v2301, %v3928
    %v3935 = vadd.f32 %v2302, %v3931
    %v3936 = vld [vmem:[#allocation3] sm:$0x3]
    %v3938 = vsel %vm212, %v3936, 0
    %3940 = vmatprep.subr.mxu0 0.0
    %3941 = vmatpush1.msra.mxu0 %v3934
    %3942 = vmatprep.subr.mxu0 0.0
    %3943 = vmatpush1.msra.mxu0 %v3935
    %3944 = vmatprep.subr.mxu0 0.0
    %3945 = vmatpush1.msra.mxu0 0.0
    %3946 = vmatprep.subr.mxu0 0.0
    %3947 = vmatpush1.msra.mxu0 0.0
    %3948 = vmatprep.subr.mxu0 0.0
    %3949 = vmatpush1.msra.mxu0 0.0
    %3950 = vmatprep.subr.mxu0 0.0
    %3951 = vmatpush1.msra.mxu0 0.0
    %3952 = vmatprep.subr.mxu0 0.0
    %3953 = vmatpush1.msra.mxu0 0.0
    %3954 = vmatprep.subr.mxu0 0.0
    %3955 = vmatpush1.msra.mxu0 0.0
    %3956 = vmatprep.subr.mxu0 0.0
    %3957 = vmatpush1.msra.mxu0 0.0
    %3958 = vmatprep.subr.mxu0 0.0
    %3959 = vmatpush1.msra.mxu0 0.0
    %3960 = vmatprep.subr.mxu0 0.0
    %3961 = vmatpush1.msra.mxu0 0.0
    %3962 = vmatprep.subr.mxu0 0.0
    %3963 = vmatpush1.msra.mxu0 0.0
    %3964 = vmatprep.subr.mxu0 0.0
    %3965 = vmatpush1.msra.mxu0 0.0
    %3966 = vmatprep.subr.mxu0 0.0
    %3967 = vmatpush1.msra.mxu0 0.0
    %3968 = vmatprep.subr.mxu0 0.0
    %3969 = vmatpush1.msra.mxu0 0.0
    %3970 = vmatprep.subr.mxu0 0.0
    %3971 = vmatpush1.msra.mxu0 0.0
    %3972 = vmatprep.subr.mxu0 0.0
    %3973 = vmatpush1.msra.mxu0 0.0
    %3974 = vmatprep.subr.mxu0 0.0
    %3975 = vmatpush1.msra.mxu0 0.0
    %3976 = vmatprep.subr.mxu0 0.0
    %3977 = vmatpush1.msra.mxu0 0.0
    %3978 = vmatprep.subr.mxu0 0.0
    %3979 = vmatpush1.msra.mxu0 0.0
    %3980 = vmatprep.subr.mxu0 0.0
    %3981 = vmatpush1.msra.mxu0 0.0
    %3982 = vmatprep.subr.mxu0 0.0
    %3983 = vmatpush1.msra.mxu0 0.0
    %3984 = vmatprep.subr.mxu0 0.0
    %3985 = vmatpush1.msra.mxu0 0.0
    %3986 = vmatprep.subr.mxu0 0.0
    %3987 = vmatpush1.msra.mxu0 0.0
    %3988 = vmatprep.subr.mxu0 0.0
    %3989 = vmatpush1.msra.mxu0 0.0
    %3990 = vmatprep.subr.mxu0 0.0
    %3991 = vmatpush1.msra.mxu0 0.0
    %3992 = vmatprep.subr.mxu0 0.0
    %3993 = vmatpush1.msra.mxu0 0.0
    %3994 = vmatprep.subr.mxu0 0.0
    %3995 = vmatpush1.msra.mxu0 0.0
    %3996 = vmatprep.subr.mxu0 0.0
    %3997 = vmatpush1.msra.mxu0 0.0
    %3998 = vmatprep.subr.mxu0 0.0
    %3999 = vmatpush1.msra.mxu0 0.0
    %4000 = vmatprep.subr.mxu0 0.0
    %4001 = vmatpush1.msra.mxu0 0.0
    %4002 = vmatprep.subr.mxu0 0.0
    %4003 = vmatpush1.msra.mxu0 0.0
    %4004 = vmatprep.mubr.f32.mxu0 0.0
    %4005 = vmatmul.mubr.f32.gmra.mrb[0].mxu0 %v3938
    %v4006 = vpop.f32.mrb[0].mxu0
    %v4007 = vadd.f32 0.0, %v4006
    %v4008 = vpop.f32.mrb[0].mxu0
    %4009 = vdwg.mxu0
    %v4010 = vld [vmem:[%s22] sm:$0xff]
    %v4011 = vld [vmem:[%s22 + $0x8] sm:$0xff]
    %v4012 = vld [vmem:[%s22 + $0x10] sm:$0xff]
    %v4013 = vld [vmem:[%s22 + $0x18] sm:$0xff]
    %v4014 = vld [vmem:[%s23] sm:$0x1]
    %v4016 = vlaneseq
    %v4017 = vshrl.u32 %v4016, 7
    %v4018 = vsub.s32 0, %v4017
    %v4019 = vrot.slane %v4014, %v4018
    %v4022 = vsel %vm336, %v4007, 0
    %4024 = vmatprep.subr.mxu0 0.0
    %4025 = vmatpush1.msra.mxu0 %v4010
    %4026 = vmatprep.subr.mxu0 0.0
    %4027 = vmatpush1.msra.mxu0 %v4011
    %4028 = vmatprep.subr.mxu0 0.0
    %4029 = vmatpush1.msra.mxu0 %v4012
    %4030 = vmatprep.subr.mxu0 0.0
    %4031 = vmatpush1.msra.mxu0 %v4013
    %4032 = vmatprep.subr.mxu0 0.0
    %4033 = vmatpush1.msra.mxu0 0.0
    %4034 = vmatprep.subr.mxu0 0.0
    %4035 = vmatpush1.msra.mxu0 0.0
    %4036 = vmatprep.subr.mxu0 0.0
    %4037 = vmatpush1.msra.mxu0 0.0
    %4038 = vmatprep.subr.mxu0 0.0
    %4039 = vmatpush1.msra.mxu0 0.0
    %4040 = vmatprep.subr.mxu0 0.0
    %4041 = vmatpush1.msra.mxu0 0.0
    %4042 = vmatprep.subr.mxu0 0.0
    %4043 = vmatpush1.msra.mxu0 0.0
    %4044 = vmatprep.subr.mxu0 0.0
    %4045 = vmatpush1.msra.mxu0 0.0
    %4046 = vmatprep.subr.mxu0 0.0
    %4047 = vmatpush1.msra.mxu0 0.0
    %4048 = vmatprep.subr.mxu0 0.0
    %4049 = vmatpush1.msra.mxu0 0.0
    %4050 = vmatprep.subr.mxu0 0.0
    %4051 = vmatpush1.msra.mxu0 0.0
    %4052 = vmatprep.subr.mxu0 0.0
    %4053 = vmatpush1.msra.mxu0 0.0
    %4054 = vmatprep.subr.mxu0 0.0
    %4055 = vmatpush1.msra.mxu0 0.0
    %4056 = vmatprep.subr.mxu0 0.0
    %4057 = vmatpush1.msra.mxu0 0.0
    %4058 = vmatprep.subr.mxu0 0.0
    %4059 = vmatpush1.msra.mxu0 0.0
    %4060 = vmatprep.subr.mxu0 0.0
    %4061 = vmatpush1.msra.mxu0 0.0
    %4062 = vmatprep.subr.mxu0 0.0
    %4063 = vmatpush1.msra.mxu0 0.0
    %4064 = vmatprep.subr.mxu0 0.0
    %4065 = vmatpush1.msra.mxu0 0.0
    %4066 = vmatprep.subr.mxu0 0.0
    %4067 = vmatpush1.msra.mxu0 0.0
    %4068 = vmatprep.subr.mxu0 0.0
    %4069 = vmatpush1.msra.mxu0 0.0
    %4070 = vmatprep.subr.mxu0 0.0
    %4071 = vmatpush1.msra.mxu0 0.0
    %4072 = vmatprep.subr.mxu0 0.0
    %4073 = vmatpush1.msra.mxu0 0.0
    %4074 = vmatprep.subr.mxu0 0.0
    %4075 = vmatpush1.msra.mxu0 0.0
    %4076 = vmatprep.subr.mxu0 0.0
    %4077 = vmatpush1.msra.mxu0 0.0
    %4078 = vmatprep.subr.mxu0 0.0
    %4079 = vmatpush1.msra.mxu0 0.0
    %4080 = vmatprep.subr.mxu0 0.0
    %4081 = vmatpush1.msra.mxu0 0.0
    %4082 = vmatprep.subr.mxu0 0.0
    %4083 = vmatpush1.msra.mxu0 0.0
    %4084 = vmatprep.subr.mxu0 0.0
    %4085 = vmatpush1.msra.mxu0 0.0
    %4086 = vmatprep.subr.mxu0 0.0
    %4087 = vmatpush1.msra.mxu0 0.0
    %4088 = vmatprep.mubr.f32.mxu0 0.0
    %4089 = vmatmul.mubr.f32.gmra.mrb[0].mxu0 %v4022
    %v4090 = vpop.f32.mrb[0].mxu0
    %v4091 = vadd.f32 %v4019, %v4090
    %v4092 = vpop.f32.mrb[0].mxu0
    %4093 = vdwg.mxu0
    %v4094 = vmin.f32 %v4091, 20.0
    %v4095 = vmul.f32 %v4094, 1.442695
    %v4096 = vpow.pop %v4095
    %v4097 = vadd.f32 %v4096, 1.0
    %v4098 = vmul.f32 %v4097, %v4097
    %v4099 = vsub.f32 %v4098, 1.0
    %v4100 = vmul.f32 %v4091, %v4099
    %v4101 = vadd.f32 %v4098, 1.0
    %v4102 = vrcp.pop %v4101
    %v4103 = vmul.f32 %v4100, %v4102
    %v4104 = vld [vmem:[%s24] sm:$0xff]
    %v4105 = vld [vmem:[%s24 + $0x8] sm:$0xff]
    %v4106 = vld [vmem:[%s24 + $0x10] sm:$0xff]
    %v4107 = vld [vmem:[%s24 + $0x18] sm:$0xff]
    %v4108 = vld [vmem:[%s24 + $0x20] sm:$0xff]
    %v4109 = vld [vmem:[%s24 + $0x28] sm:$0xff]
    %v4110 = vld [vmem:[%s24 + $0x30] sm:$0xff]
    %v4111 = vld [vmem:[%s24 + $0x38] sm:$0xff]
    %v4112 = vld [vmem:[%s25] sm:$0x1]
    %v4114 = vlaneseq
    %v4115 = vshrl.u32 %v4114, 7
    %v4116 = vsub.s32 0, %v4115
    %v4117 = vrot.slane %v4112, %v4116
    %v4120 = vsel %vm645, %v4103, 0
    %4122 = vmatprep.subr.mxu0 0.0
    %4123 = vmatpush1.msra.mxu0 %v4104
    %4124 = vmatprep.subr.mxu0 0.0
    %4125 = vmatpush1.msra.mxu0 %v4105
    %4126 = vmatprep.subr.mxu0 0.0
    %4127 = vmatpush1.msra.mxu0 %v4106
    %4128 = vmatprep.subr.mxu0 0.0
    %4129 = vmatpush1.msra.mxu0 %v4107
    %4130 = vmatprep.subr.mxu0 0.0
    %4131 = vmatpush1.msra.mxu0 %v4108
    %4132 = vmatprep.subr.mxu0 0.0
    %4133 = vmatpush1.msra.mxu0 %v4109
    %4134 = vmatprep.subr.mxu0 0.0
    %4135 = vmatpush1.msra.mxu0 %v4110
    %4136 = vmatprep.subr.mxu0 0.0
    %4137 = vmatpush1.msra.mxu0 %v4111
    %4138 = vmatprep.subr.mxu0 0.0
    %4139 = vmatpush1.msra.mxu0 0.0
    %4140 = vmatprep.subr.mxu0 0.0
    %4141 = vmatpush1.msra.mxu0 0.0
    %4142 = vmatprep.subr.mxu0 0.0
    %4143 = vmatpush1.msra.mxu0 0.0
    %4144 = vmatprep.subr.mxu0 0.0
    %4145 = vmatpush1.msra.mxu0 0.0
    %4146 = vmatprep.subr.mxu0 0.0
    %4147 = vmatpush1.msra.mxu0 0.0
    %4148 = vmatprep.subr.mxu0 0.0
    %4149 = vmatpush1.msra.mxu0 0.0
    %4150 = vmatprep.subr.mxu0 0.0
    %4151 = vmatpush1.msra.mxu0 0.0
    %4152 = vmatprep.subr.mxu0 0.0
    %4153 = vmatpush1.msra.mxu0 0.0
    %4154 = vmatprep.subr.mxu0 0.0
    %4155 = vmatpush1.msra.mxu0 0.0
    %4156 = vmatprep.subr.mxu0 0.0
    %4157 = vmatpush1.msra.mxu0 0.0
    %4158 = vmatprep.subr.mxu0 0.0
    %4159 = vmatpush1.msra.mxu0 0.0
    %4160 = vmatprep.subr.mxu0 0.0
    %4161 = vmatpush1.msra.mxu0 0.0
    %4162 = vmatprep.subr.mxu0 0.0
    %4163 = vmatpush1.msra.mxu0 0.0
    %4164 = vmatprep.subr.mxu0 0.0
    %4165 = vmatpush1.msra.mxu0 0.0
    %4166 = vmatprep.subr.mxu0 0.0
    %4167 = vmatpush1.msra.mxu0 0.0
    %4168 = vmatprep.subr.mxu0 0.0
    %4169 = vmatpush1.msra.mxu0 0.0
    %4170 = vmatprep.subr.mxu0 0.0
    %4171 = vmatpush1.msra.mxu0 0.0
    %4172 = vmatprep.subr.mxu0 0.0
    %4173 = vmatpush1.msra.mxu0 0.0
    %4174 = vmatprep.subr.mxu0 0.0
    %4175 = vmatpush1.msra.mxu0 0.0
    %4176 = vmatprep.subr.mxu0 0.0
    %4177 = vmatpush1.msra.mxu0 0.0
    %4178 = vmatprep.subr.mxu0 0.0
    %4179 = vmatpush1.msra.mxu0 0.0
    %4180 = vmatprep.subr.mxu0 0.0
    %4181 = vmatpush1.msra.mxu0 0.0
    %4182 = vmatprep.subr.mxu0 0.0
    %4183 = vmatpush1.msra.mxu0 0.0
    %4184 = vmatprep.subr.mxu0 0.0
    %4185 = vmatpush1.msra.mxu0 0.0
    %4186 = vmatprep.mubr.f32.mxu0 0.0
    %4187 = vmatmul.mubr.f32.gmra.mrb[0].mxu0 %v4120
    %v4188 = vpop.f32.mrb[0].mxu0
    %v4189 = vadd.f32 %v4117, %v4188
    %v4190 = vpop.f32.mrb[0].mxu0
    %4191 = vdwg.mxu0
    %vm4192 = vcmask 9216
    %4193 = vst.msk [vmem:[#allocation18] sm:$0x3] %vm4192, %v4189
    // Predicated region
    $region142: #{tpu_custom_call.1} parent=1 // pred_check
      _
    $region143: #{tpu_custom_call.1} parent=1 // pred_check_branch
      %4195 = sbr.rel (0) target = $region145
    $region144: #{tpu_custom_call.1} parent=1 // pred_region
      %s4197 = ssub.s32 32, 32
      %4198 = vsyncadd [#allocation5], %s4197
      %s4200 = sshll.u32 [#allocation18], 4
      %s4201 = int_to_ptr.vmem [resolvable:$true] %s4200
      %4203 = dma.vmem_to_hbm [thread:$0]  %s4201, 32, %s26, [#allocation5]
    $region145: #{tpu_custom_call.1} parent=1 // pred_fallthru
      _
    // Predicated region
    $region146: #{tpu_custom_call.1} parent=1 // pred_check
      _
    $region147: #{tpu_custom_call.1} parent=1 // pred_check_branch
      %4205 = sbr.rel (0) target = $region149
    $region148: #{tpu_custom_call.1} parent=1 // pred_region
      %4206 = dma.done [#allocation5], 32
    $region149: #{tpu_custom_call.1} parent=1 // pred_fallthru
      _
    %4207 = vsyncpa [#allocation4], 1
    %4208 = vsyncpa [#allocation7], 1
    %4209 = vsyncpa [#allocation10], 1
    %4210 = vsyncpa [#allocation13], 1
    %4211 = vsyncpa [#allocation16], 1
    %4212 = vsyncpa [#allocation5], 1

</llo_original>
